<compile_context>
chip_gen: v7x
topology: tpu7x:2x2x1
jax: 0.10.0
libtpu: 0.0.40
codegen_flags: <defaults>
</compile_context>

<pallas_src>
import jax
import jax.numpy as jnp
import numpy as np
from jax import lax
from jax.experimental import pallas as pl
from jax.experimental.pallas import tpu as pltpu


def _round_up(n, m):
    return (n + m - 1) // m * m


def _pick_tile(n, candidates):
    for c in candidates:
        if n % c == 0:
            return c
    return 128


def _recurrence_table(L, poly_base, alpha, beta):
    """Per-order scalars (wa, wb, wc):  z_t = wa*z_{t-1} + wb*(A @ z_{t-1}) - wc*z_{t-2}.

    1/c0 is folded in on the host so the kernel never divides."""
    rows = []
    pb = poly_base.lower()
    for t in range(1, L + 1):
        if pb == "jacobi":
            if t == 1:
                rows.append(((alpha - beta) / 2.0, (alpha + beta + 2.0) / 2.0, 0.0))
            else:
                c0 = 2.0 * t * (t + alpha + beta) * (2.0 * t + alpha + beta - 2.0)
                c1 = (2.0 * t + alpha + beta - 1.0) * (alpha ** 2 - beta ** 2)
                c2 = (2.0 * t + alpha + beta - 1.0) * (2.0 * t + alpha + beta) * \
                     (2.0 * t + alpha + beta - 2.0)
                c3 = 2.0 * (t + alpha - 1.0) * (t + beta - 1.0) * (2.0 * t + alpha + beta)
                rows.append((c1 / c0, c2 / c0, c3 / c0))
        elif pb == "chebyshev":
            rows.append((0.0, 1.0, 0.0) if t == 1 else (0.0, 2.0, 1.0))
        elif pb == "legendre":
            rows.append((0.0, 1.0, 0.0) if t == 1 else (0.0, 2.0 - 1.0 / t, 1.0 - 1.0 / t))
        elif pb == "monomial":
            rows.append((0.0, 1.0, 0.0))
        else:
            raise NotImplementedError(f"{poly_base} polynomial base not supported")
    return np.asarray(rows, dtype=np.float32)


def _poly_pcd_kernel(scal_ref, coefs_ref, a_ref, x_ref, o_ref, zbuf, acc, az):
    """Grid = (d, l, i, k).

    zbuf : (2*N_pad, TD) f32   flat ping-pong holding z_{t-1} / z_{t-2}
    acc  : (N_pad,   TD) f32   running coefficient-weighted sum
    az   : (TM,      TD) f32   k-reduction accumulator for A @ z_{t-1}
    """
    l = pl.program_id(1)        # polynomial order is t = l + 1
    i = pl.program_id(2)        # output-row tile
    k = pl.program_id(3)        # reduction tile (A columns / z rows), innermost
    nk = pl.num_programs(3)

    n_pad = zbuf.shape[0] // 2
    tm = az.shape[0]
    tk = a_ref.shape[1]

    rd = (l % 2) * n_pad        # slot base holding z_{t-1}
    wr = ((l + 1) % 2) * n_pad  # slot base holding z_{t-2}; receives z_t
    row = i * tm
    col = k * tk

    zk_rows = pl.ds(pl.multiple_of(rd + col, 8), tk)   # z_{t-1}[reduction tile]
    zp_rows = pl.ds(pl.multiple_of(rd + row, 8), tm)   # z_{t-1}[row tile]
    zn_rows = pl.ds(pl.multiple_of(wr + row, 8), tm)   # z_{t-2}[row tile] / z_t dest
    ac_rows = pl.ds(pl.multiple_of(row, 8), tm)

    # ---- stage z_0 = x into slot 0 (done once, during the (l==0, i==0) k-sweep).
    @pl.when((l == 0) & (i == 0))
    def _():
        zbuf[pl.ds(pl.multiple_of(col, 8), tk), :] = x_ref[...]

    # ---- k-reduction of the adjacency matmul:  az += A[i, k] @ z_{t-1}[k]
    @pl.when(k == 0)
    def _():
        az[...] = jnp.zeros_like(az)

    a_blk = a_ref[...]                              # (tm, tk), bf16 by default
    z_blk = zbuf[zk_rows, :].astype(a_blk.dtype)    # state stays f32; cast only for the MXU
    az[...] += jnp.dot(a_blk, z_blk, preferred_element_type=jnp.float32)

    # ---- end of the k sweep: polynomial recurrence + PCD-weighted accumulation.
    @pl.when(k == nk - 1)
    def _():
        wa = scal_ref[l, 0]
        wb = scal_ref[l, 1]
        wc = scal_ref[l, 2]
        zp = zbuf[zp_rows, :]                       # z_{t-1} rows of this tile
        az_v = az[...]

        # coefficient row for order t = l+1 (masked select; no dynamic sublane slice)
        coefs_all = coefs_ref[...]                  # (L+1, TD) f32, resident
        sel = (lax.broadcasted_iota(jnp.int32, (coefs_all.shape[0], 1), 0)
               == (l + 1)).astype(jnp.float32)
        coef_t = jnp.sum(coefs_all * sel, axis=0, keepdims=True)     # (1, TD)

        @pl.when(l == 0)
        def _():
            z1 = wa * zp + wb * az_v                # order 1: no z_{t-2} term
            zbuf[zn_rows, :] = z1
            new_acc = zp * coefs_all[0:1, :] + z1 * coef_t   # zp == z_0 == x here
            acc[ac_rows, :] = new_acc
            o_ref[...] = new_acc.astype(o_ref.dtype)

        @pl.when(l > 0)
        def _():
            zpp = zbuf[zn_rows, :]                  # z_{t-2}
            zt = wa * zp + wb * az_v - wc * zpp
            zbuf[zn_rows, :] = zt                   # z_{t-2} slot now holds z_t
            new_acc = acc[ac_rows, :] + zt * coef_t
            acc[ac_rows, :] = new_acc
            o_ref[...] = new_acc.astype(o_ref.dtype)


def poly_pcd_conv(x, A, gammas, *, scaling_factor=1.0, L=3, poly_base="jacobi",
                  alpha=1.0, beta=1.0, matmul_dtype=jnp.bfloat16, a_resident=None):
    """JAX/Pallas forward of PolyPCDConv.

    matmul_dtype : dtype fed to the MXU for A and z (bf16 default); recurrence,
                   reduction and accumulation stay f32.
    a_resident   : None -> auto.  True keeps the whole padded A resident in VMEM
                   (fetched from HBM once, reused for all L orders); False
                   streams (TM, TK) tiles of A through the pipeline.
    """
    N, D = x.shape
    assert A.shape == (N, N)
    assert gammas.shape == (L + 1, D)
    assert L >= 1

    f32 = jnp.float32

    # ---- tiny host-side coefficient preprocessing (exactly the module's math)
    coefs = jnp.cumprod(jnp.tanh(gammas.astype(f32)) * scaling_factor, axis=0)   # (L+1, D)
    scal = jnp.asarray(_recurrence_table(L, poly_base, alpha, beta))             # (L, 3)

    # ---- padding: lane-dense feature axis (multiple of 128), 128-aligned N
    N_pad = _round_up(N, 128)
    D_pad = _round_up(D, 128)
    TD = D_pad if D_pad <= 512 else _pick_tile(D_pad, (512, 256, 128))

    itemsize_mm = np.dtype(matmul_dtype).itemsize
    itemsize_out = np.dtype(x.dtype).itemsize

    if a_resident is None:
        # Resident only if (double-buffered) A + the z/acc state comfortably fit
        # the smallest per-core VMEM (v7x: 64 MiB physical) with pipeline headroom.
        a_resident = (2 * N_pad * N_pad * itemsize_mm + 6 * N_pad * TD * 4) <= (28 << 20)

    if a_resident:
        TM = TK = N_pad        # single A block, constant index -> streamed from HBM once
    else:
        TM = _pick_tile(N_pad, (512, 256, 128))
        TK = _pick_tile(N_pad, (1024, 512, 256, 128))

    n_d, n_i, n_k = D_pad // TD, N_pad // TM, N_pad // TK
    grid = (n_d, L, n_i, n_k)

    A_p = jnp.pad(A.astype(matmul_dtype), ((0, N_pad - N), (0, N_pad - N)))
    x_p = jnp.pad(x.astype(f32), ((0, N_pad - N), (0, D_pad - D)))
    coefs_p = jnp.pad(coefs, ((0, 0), (0, D_pad - D)))

    # ---- BlockSpecs
    scal_spec = pl.BlockSpec(memory_space=pltpu.MemorySpace.SMEM)        # (L, 3) scalars
    coefs_spec = pl.BlockSpec((L + 1, TD), lambda d, l, i, k: (0, d))    # resident
    a_index = lambda d, l, i, k: (i, k)
    n_a_buf = 2
    if a_resident:
        a_spec = pl.BlockSpec((TM, TK), a_index)
    else:
        # With small D the per-tile matmul is cheap vs. the DMA; deepen A buffering
        # to hide DMA latency when the installed API supports it.
        try:
            a_spec = pl.BlockSpec((TM, TK), a_index, pipeline_mode=pl.Buffered(3))
            n_a_buf = 3
        except Exception:
            a_spec = pl.BlockSpec((TM, TK), a_index)
    # x is only consumed during the (l==0, i==0) sweep; afterwards its block index
    # is pinned so the pipeline never re-fetches it.
    x_spec = pl.BlockSpec(
        (TK, TD),
        lambda d, l, i, k: (jnp.where((l == 0) & (i == 0), k, n_k - 1), d))
    out_spec = pl.BlockSpec((TM, TD), lambda d, l, i, k: (i, d))

    # ---- VMEM budget derived per chip (v7x has only 64 MiB per TensorCore)
    scratch_bytes = 4 * (2 * N_pad * TD + N_pad * TD + TM * TD)
    block_bytes = (n_a_buf * TM * TK * itemsize_mm
                   + 2 * TK * TD * 4
                   + 2 * (L + 1) * TD * 4
                   + 2 * TM * TD * itemsize_out)
    need = scratch_bytes + block_bytes
    try:
        vmem_cap = int(pltpu.get_tpu_info().vmem_capacity_bytes)
    except Exception:
        vmem_cap = 64 << 20
    vmem_limit = int(min(vmem_cap * 0.85, max(32 << 20, int(need * 1.4))))

    out_p = pl.pallas_call(
        _poly_pcd_kernel,
        out_shape=jax.ShapeDtypeStruct((N_pad, D_pad), x.dtype),
        grid=grid,
        in_specs=[scal_spec, coefs_spec, a_spec, x_spec],
        out_specs=out_spec,
        scratch_shapes=[
            pltpu.VMEM((2 * N_pad, TD), f32),   # z_{t-1} / z_{t-2} ping-pong
            pltpu.VMEM((N_pad, TD), f32),       # running PCD-weighted sum
            pltpu.VMEM((TM, TD), f32),          # k-reduction accumulator for A @ z
        ],
        compiler_params=pltpu.CompilerParams(
            # Feature tiles are independent -> "parallel" (megacore-shardable on v7x).
            # l/i/k must stay sequential: the recurrence couples every row tile
            # through the shared z ping-pong state.
            dimension_semantics=("parallel", "arbitrary", "arbitrary", "arbitrary"),
            vmem_limit_bytes=vmem_limit,
        ),
    )(scal, coefs_p, A_p, x_p)

    return out_p[:N, :D]


# ---------------- pure-JAX reference (mirrors the PyTorch code, jacobi base) ----------------
def _jacobi_conv_ref(zs, A, l, alpha, beta):
    if l == 0:
        return zs[0]
    if l == 1:
        c = (alpha - beta) / 2.0
        return c * zs[-1] + (alpha + beta + 2.0) / 2.0 * (A @ zs[-1])
    c0 = 2.0 * l * (l + alpha + beta) * (2.0 * l + alpha + beta - 2.0)
    c1 = (2.0 * l + alpha + beta - 1.0) * (alpha ** 2 - beta ** 2)
    c2 = (2.0 * l + alpha + beta - 1.0) * (2.0 * l + alpha + beta) * (2.0 * l + alpha + beta - 2.0)
    c3 = 2.0 * (l + alpha - 1.0) * (l + beta - 1.0) * (2.0 * l + alpha + beta)
    return (c1 * zs[-1] + c2 * (A @ zs[-1]) - c3 * zs[-2]) / c0


def poly_pcd_conv_ref(x, A, gammas, *, scaling_factor=1.0, L=3, alpha=1.0, beta=1.0):
    zs = [x]
    for l in range(1, L + 1):
        zs.append(_jacobi_conv_ref(zs, A, l, alpha, beta))
    coefs = jnp.cumprod(jnp.tanh(gammas) * scaling_factor, axis=0)      # (L+1, D)
    zs = jnp.stack(zs, axis=1)                                          # (N, L+1, D)
    return (zs * coefs[None, :, :]).sum(axis=1)                         # (N, D)


if __name__ == "__main__":
    key = jax.random.PRNGKey(0)
    kx, ka = jax.random.split(key)

    N, D, L = 300, 32, 3          # nodes, embedding_dim, polynomial depth
    scaling_factor, alpha, beta = 1.0, 1.0, 1.0

    # node features
    x = jax.random.normal(kx, (N, D), dtype=jnp.float32)

    # symmetric normalized adjacency with self-loops:  D^{-1/2} (A+I) D^{-1/2}
    raw = (jax.random.uniform(ka, (N, N)) < 0.1).astype(jnp.float32)
    adj = jnp.maximum(raw, raw.T) + jnp.eye(N, dtype=jnp.float32)
    deg = adj.sum(axis=1)
    dinv = 1.0 / jnp.sqrt(deg)
    A = dinv[:, None] * adj * dinv[None, :]

    # gammas, initialized like the module: empty((L+1, D)).fill_(min(1/scaling_factor, 1))
    gammas = jnp.full((L + 1, D), min(1.0 / scaling_factor, 1.0), dtype=jnp.float32)

    common = dict(scaling_factor=scaling_factor, L=L, alpha=alpha, beta=beta)
    ref = poly_pcd_conv_ref(x, A, gammas, **common)

    # f32 MXU path, A resident: must match the PyTorch-mirroring reference tightly.
    out_f32_res = jax.block_until_ready(
        poly_pcd_conv(x, A, gammas, matmul_dtype=jnp.float32, **common))
    assert out_f32_res.shape == (N, D)
    assert jnp.allclose(out_f32_res, ref, atol=2e-4, rtol=2e-4), "f32 resident path mismatch"

    # f32 MXU path, streamed/tiled A (exercises the pipelined k-reduction grid).
    out_f32_str = jax.block_until_ready(
        poly_pcd_conv(x, A, gammas, matmul_dtype=jnp.float32, a_resident=False, **common))
    assert jnp.allclose(out_f32_str, ref, atol=2e-4, rtol=2e-4), "f32 streamed path mismatch"

    # default fast path: bf16 MXU inputs (recurrence/accumulation stay f32).
    out_bf16_res = jax.block_until_ready(poly_pcd_conv(x, A, gammas, **common))
    assert jnp.allclose(out_bf16_res, ref, atol=1e-1, rtol=1e-1), "bf16 resident path mismatch"

    # bf16 + streamed A must agree with bf16 + resident A (same rounding, tiled reduction).
    out_bf16_str = jax.block_until_ready(
        poly_pcd_conv(x, A, gammas, a_resident=False, **common))
    assert jnp.allclose(out_bf16_str, out_bf16_res, atol=1e-4, rtol=1e-4), \
        "bf16 streamed path mismatch"

    print("KERNEL_OK")
</pallas_src>

<mosaic_0001>
module attributes {stable_mosaic.version = 11 : i64} {
  func.func @_poly_pcd_kernel(%arg0: i32, %arg1: i32, %arg2: i32, %arg3: i32, %arg4: memref<3x3xf32, #tpu.memory_space<smem>>, %arg5: memref<4x128xf32, #tpu.memory_space<vmem>>, %arg6: memref<384x384xf32, #tpu.memory_space<vmem>>, %arg7: memref<384x128xf32, #tpu.memory_space<vmem>>, %arg8: memref<384x128xf32, #tpu.memory_space<vmem>>, %arg9: memref<768x128xf32, #tpu.memory_space<vmem>>, %arg10: memref<384x128xf32, #tpu.memory_space<vmem>>, %arg11: memref<384x128xf32, #tpu.memory_space<vmem>>) attributes {dimension_semantics = [#tpu.dimension_semantics<parallel>, #tpu.dimension_semantics<arbitrary>, #tpu.dimension_semantics<arbitrary>, #tpu.dimension_semantics<arbitrary>], iteration_bounds = array<i64: 1, 3, 1, 1>, scalar_prefetch = 0 : i64, scratch_operands = 3 : i64, tpu.core_type = #tpu.core_type<tc>, window_params = [{transform_indices = @transform_0, window_bounds = array<i64: 3, 3>}, {transform_indices = @transform_1, window_bounds = array<i64: 4, 128>}, {transform_indices = @transform_2, window_bounds = array<i64: 384, 384>}, {transform_indices = @transform_3, window_bounds = array<i64: 384, 128>}, {transform_indices = @transform_4, window_bounds = array<i64: 384, 128>}]} {
    %c2_i32 = arith.constant 2 : i32
    %c0_i32 = arith.constant 0 : i32
    %0 = arith.cmpi eq, %c2_i32, %c0_i32 : i32
    %c1_i32 = arith.constant 1 : i32
    %1 = arith.select %0, %c1_i32, %c2_i32 : i32
    %2 = arith.remsi %arg1, %1 : i32
    %c0_i32_0 = arith.constant 0 : i32
    %3 = arith.cmpi ne, %2, %c0_i32_0 : i32
    %c0_i32_1 = arith.constant 0 : i32
    %4 = arith.cmpi slt, %2, %c0_i32_1 : i32
    %c0_i32_2 = arith.constant 0 : i32
    %5 = arith.cmpi slt, %1, %c0_i32_2 : i32
    %6 = arith.xori %4, %5 : i1
    %7 = arith.andi %6, %3 : i1
    %8 = arith.addi %2, %1 : i32
    %9 = arith.select %7, %8, %2 : i32
    %c384_i32 = arith.constant 384 : i32
    %10 = arith.muli %9, %c384_i32 : i32
    %c1_i32_3 = arith.constant 1 : i32
    %11 = arith.addi %arg1, %c1_i32_3 : i32
    %c2_i32_4 = arith.constant 2 : i32
    %c0_i32_5 = arith.constant 0 : i32
    %12 = arith.cmpi eq, %c2_i32_4, %c0_i32_5 : i32
    %c1_i32_6 = arith.constant 1 : i32
    %13 = arith.select %12, %c1_i32_6, %c2_i32_4 : i32
    %14 = arith.remsi %11, %13 : i32
    %c0_i32_7 = arith.constant 0 : i32
    %15 = arith.cmpi ne, %14, %c0_i32_7 : i32
    %c0_i32_8 = arith.constant 0 : i32
    %16 = arith.cmpi slt, %14, %c0_i32_8 : i32
    %c0_i32_9 = arith.constant 0 : i32
    %17 = arith.cmpi slt, %13, %c0_i32_9 : i32
    %18 = arith.xori %16, %17 : i1
    %19 = arith.andi %18, %15 : i1
    %20 = arith.addi %14, %13 : i32
    %21 = arith.select %19, %20, %14 : i32
    %c384_i32_10 = arith.constant 384 : i32
    %22 = arith.muli %21, %c384_i32_10 : i32
    %c384_i32_11 = arith.constant 384 : i32
    %23 = arith.muli %arg2, %c384_i32_11 : i32
    %c384_i32_12 = arith.constant 384 : i32
    %24 = arith.muli %arg3, %c384_i32_12 : i32
    %25 = arith.addi %10, %24 : i32
    %26 = tpu.assume_multiple %25, 8 : i32
    %27 = arith.addi %10, %23 : i32
    %28 = tpu.assume_multiple %27, 8 : i32
    %29 = arith.addi %22, %23 : i32
    %30 = tpu.assume_multiple %29, 8 : i32
    %31 = tpu.assume_multiple %23, 8 : i32
    %c0_i32_13 = arith.constant 0 : i32
    %32 = arith.cmpi eq, %arg1, %c0_i32_13 : i32
    %c0_i32_14 = arith.constant 0 : i32
    %33 = arith.cmpi eq, %arg2, %c0_i32_14 : i32
    %34 = arith.andi %32, %33 : i1
    %35 = arith.extui %34 : i1 to i32
    %c0_i32_15 = arith.constant 0 : i32
    %36 = arith.cmpi ne, %35, %c0_i32_15 : i32
    scf.if %36 {
      %c0_26 = arith.constant 0 : index
      %c0_27 = arith.constant 0 : index
      %50 = vector.load %arg7[%c0_26, %c0_27] : memref<384x128xf32, #tpu.memory_space<vmem>>, vector<384x128xf32>
      %51 = tpu.assume_multiple %24, 8 : i32
      %52 = arith.index_cast %51 : i32 to index
      %c0_28 = arith.constant 0 : index
      %53 = vector.load %arg9[%52, %c0_28] : memref<768x128xf32, #tpu.memory_space<vmem>>, vector<384x128xf32>
      tpu.vector_store %arg9[%52, %c0_28], %50 {strides = array<i32>} : memref<768x128xf32, #tpu.memory_space<vmem>>, vector<384x128xf32>,
    } else {
    }
    %c0_i32_16 = arith.constant 0 : i32
    %37 = arith.cmpi eq, %arg3, %c0_i32_16 : i32
    %38 = arith.extui %37 : i1 to i32
    %c0_i32_17 = arith.constant 0 : i32
    %39 = arith.cmpi ne, %38, %c0_i32_17 : i32
    scf.if %39 {
      %cst_26 = arith.constant 0.000000e+00 : f32
      %50 = vector.broadcast %cst_26 : f32 to vector<384x128xf32>
      %c0_27 = arith.constant 0 : index
      %c0_28 = arith.constant 0 : index
      %51 = vector.load %arg11[%c0_27, %c0_28] : memref<384x128xf32, #tpu.memory_space<vmem>>, vector<384x128xf32>
      tpu.vector_store %arg11[%c0_27, %c0_28], %50 {strides = array<i32>} : memref<384x128xf32, #tpu.memory_space<vmem>>, vector<384x128xf32>,
    } else {
    }
    %c0 = arith.constant 0 : index
    %c0_18 = arith.constant 0 : index
    %40 = vector.load %arg6[%c0, %c0_18] : memref<384x384xf32, #tpu.memory_space<vmem>>, vector<384x384xf32>
    %41 = arith.index_cast %26 : i32 to index
    %c0_19 = arith.constant 0 : index
    %42 = vector.load %arg9[%41, %c0_19] : memref<768x128xf32, #tpu.memory_space<vmem>>, vector<384x128xf32>
    %c0_20 = arith.constant 0 : index
    %c0_21 = arith.constant 0 : index
    %43 = vector.load %arg11[%c0_20, %c0_21] : memref<384x128xf32, #tpu.memory_space<vmem>>, vector<384x128xf32>
    %cst = arith.constant dense<0.000000e+00> : vector<384x128xf32>
    %44 = tpu.matmul %40, %42, %cst {dimension_numbers = #tpu.dot_dimension_numbers<[1], [0], [0], [1], [0, 0, 1, 1], [], []>} : vector<384x384xf32>, vector<384x128xf32>, vector<384x128xf32> -> vector<384x128xf32>
    %45 = arith.addf %43, %44 : vector<384x128xf32>
    %c0_22 = arith.constant 0 : index
    %c0_23 = arith.constant 0 : index
    %46 = vector.load %arg11[%c0_22, %c0_23] : memref<384x128xf32, #tpu.memory_space<vmem>>, vector<384x128xf32>
    tpu.vector_store %arg11[%c0_22, %c0_23], %45 {strides = array<i32>} : memref<384x128xf32, #tpu.memory_space<vmem>>, vector<384x128xf32>,
    %c0_i32_24 = arith.constant 0 : i32
    %47 = arith.cmpi eq, %arg3, %c0_i32_24 : i32
    %48 = arith.extui %47 : i1 to i32
    %c0_i32_25 = arith.constant 0 : i32
    %49 = arith.cmpi ne, %48, %c0_i32_25 : i32
    scf.if %49 {
      %50 = arith.index_cast %arg1 : i32 to index
      %c0_26 = arith.constant 0 : index
      %51 = memref.load %arg4[%50, %c0_26] : memref<3x3xf32, #tpu.memory_space<smem>>
      %52 = arith.index_cast %arg1 : i32 to index
      %c1 = arith.constant 1 : index
      %53 = memref.load %arg4[%52, %c1] : memref<3x3xf32, #tpu.memory_space<smem>>
      %54 = arith.index_cast %arg1 : i32 to index
      %c2 = arith.constant 2 : index
      %55 = memref.load %arg4[%54, %c2] : memref<3x3xf32, #tpu.memory_space<smem>>
      %56 = arith.index_cast %28 : i32 to index
      %c0_27 = arith.constant 0 : index
      %57 = vector.load %arg9[%56, %c0_27] : memref<768x128xf32, #tpu.memory_space<vmem>>, vector<384x128xf32>
      %c0_28 = arith.constant 0 : index
      %c0_29 = arith.constant 0 : index
      %58 = vector.load %arg11[%c0_28, %c0_29] : memref<384x128xf32, #tpu.memory_space<vmem>>, vector<384x128xf32>
      %c0_30 = arith.constant 0 : index
      %c0_31 = arith.constant 0 : index
      %59 = vector.load %arg5[%c0_30, %c0_31] : memref<4x128xf32, #tpu.memory_space<vmem>>, vector<4x128xf32>
      %60 = tpu.iota {dimensions = array<i32: 0>} : vector<4x1xi32>
      %c1_i32_32 = arith.constant 1 : i32
      %61 = arith.addi %arg1, %c1_i32_32 : i32
      %62 = vector.broadcast %61 : i32 to vector<4x1xi32>
      %63 = arith.cmpi eq, %60, %62 : vector<4x1xi32>
      %64 = arith.extui %63 : vector<4x1xi1> to vector<4x1xi32>
      %65 = arith.sitofp %64 : vector<4x1xi32> to vector<4x1xf32>
      %66 = vector.broadcast %65 : vector<4x1xf32> to vector<4x128xf32>
      %67 = arith.mulf %59, %66 : vector<4x128xf32>
      %cst_33 = arith.constant dense<0.000000e+00> : vector<128xf32>
      %68 = vector.multi_reduction <add>, %67, %cst_33 [0] : vector<4x128xf32> to vector<128xf32>
      %69 = vector.shape_cast %68 : vector<128xf32> to vector<1x128xf32>
      %c0_i32_34 = arith.constant 0 : i32
      %70 = arith.cmpi eq, %arg1, %c0_i32_34 : i32
      %71 = arith.extui %70 : i1 to i32
      %c0_i32_35 = arith.constant 0 : i32
      %72 = arith.cmpi ne, %71, %c0_i32_35 : i32
      scf.if %72 {
        %76 = vector.broadcast %51 : f32 to vector<384x128xf32>
        %77 = arith.mulf %76, %57 : vector<384x128xf32>
        %78 = vector.broadcast %53 : f32 to vector<384x128xf32>
        %79 = arith.mulf %78, %58 : vector<384x128xf32>
        %80 = arith.addf %77, %79 : vector<384x128xf32>
        %81 = arith.index_cast %30 : i32 to index
        %c0_38 = arith.constant 0 : index
        %82 = vector.load %arg9[%81, %c0_38] : memref<768x128xf32, #tpu.memory_space<vmem>>, vector<384x128xf32>
        tpu.vector_store %arg9[%81, %c0_38], %80 {strides = array<i32>} : memref<768x128xf32, #tpu.memory_space<vmem>>, vector<384x128xf32>,
        %83 = vector.extract_strided_slice %59 {offsets = [0, 0], sizes = [1, 128], strides = [1, 1]} : vector<4x128xf32> to vector<1x128xf32>
        %84 = vector.broadcast %83 : vector<1x128xf32> to vector<384x128xf32>
        %85 = arith.mulf %57, %84 : vector<384x128xf32>
        %86 = vector.broadcast %69 : vector<1x128xf32> to vector<384x128xf32>
        %87 = arith.mulf %80, %86 : vector<384x128xf32>
        %88 = arith.addf %85, %87 : vector<384x128xf32>
        %89 = arith.index_cast %31 : i32 to index
        %c0_39 = arith.constant 0 : index
        %90 = vector.load %arg10[%89, %c0_39] : memref<384x128xf32, #tpu.memory_space<vmem>>, vector<384x128xf32>
        tpu.vector_store %arg10[%89, %c0_39], %88 {strides = array<i32>} : memref<384x128xf32, #tpu.memory_space<vmem>>, vector<384x128xf32>,
        %c0_40 = arith.constant 0 : index
        %c0_41 = arith.constant 0 : index
        %91 = vector.load %arg8[%c0_40, %c0_41] : memref<384x128xf32, #tpu.memory_space<vmem>>, vector<384x128xf32>
        tpu.vector_store %arg8[%c0_40, %c0_41], %88 {strides = array<i32>} : memref<384x128xf32, #tpu.memory_space<vmem>>, vector<384x128xf32>,
      } else {
      }
      %c0_i32_36 = arith.constant 0 : i32
      %73 = arith.cmpi sgt, %arg1, %c0_i32_36 : i32
      %74 = arith.extui %73 : i1 to i32
      %c0_i32_37 = arith.constant 0 : i32
      %75 = arith.cmpi ne, %74, %c0_i32_37 : i32
      scf.if %75 {
        %76 = arith.index_cast %30 : i32 to index
        %c0_38 = arith.constant 0 : index
        %77 = vector.load %arg9[%76, %c0_38] : memref<768x128xf32, #tpu.memory_space<vmem>>, vector<384x128xf32>
        %78 = vector.broadcast %51 : f32 to vector<384x128xf32>
        %79 = arith.mulf %78, %57 : vector<384x128xf32>
        %80 = vector.broadcast %53 : f32 to vector<384x128xf32>
        %81 = arith.mulf %80, %58 : vector<384x128xf32>
        %82 = arith.addf %79, %81 : vector<384x128xf32>
        %83 = vector.broadcast %55 : f32 to vector<384x128xf32>
        %84 = arith.mulf %83, %77 : vector<384x128xf32>
        %85 = arith.subf %82, %84 : vector<384x128xf32>
        %86 = arith.index_cast %30 : i32 to index
        %c0_39 = arith.constant 0 : index
        %87 = vector.load %arg9[%86, %c0_39] : memref<768x128xf32, #tpu.memory_space<vmem>>, vector<384x128xf32>
        tpu.vector_store %arg9[%86, %c0_39], %85 {strides = array<i32>} : memref<768x128xf32, #tpu.memory_space<vmem>>, vector<384x128xf32>,
        %88 = arith.index_cast %31 : i32 to index
        %c0_40 = arith.constant 0 : index
        %89 = vector.load %arg10[%88, %c0_40] : memref<384x128xf32, #tpu.memory_space<vmem>>, vector<384x128xf32>
        %90 = vector.broadcast %69 : vector<1x128xf32> to vector<384x128xf32>
        %91 = arith.mulf %85, %90 : vector<384x128xf32>
        %92 = arith.addf %89, %91 : vector<384x128xf32>
        %93 = arith.index_cast %31 : i32 to index
        %c0_41 = arith.constant 0 : index
        %94 = vector.load %arg10[%93, %c0_41] : memref<384x128xf32, #tpu.memory_space<vmem>>, vector<384x128xf32>
        tpu.vector_store %arg10[%93, %c0_41], %92 {strides = array<i32>} : memref<384x128xf32, #tpu.memory_space<vmem>>, vector<384x128xf32>,
        %c0_42 = arith.constant 0 : index
        %c0_43 = arith.constant 0 : index
        %95 = vector.load %arg8[%c0_42, %c0_43] : memref<384x128xf32, #tpu.memory_space<vmem>>, vector<384x128xf32>
        tpu.vector_store %arg8[%c0_42, %c0_43], %92 {strides = array<i32>} : memref<384x128xf32, #tpu.memory_space<vmem>>, vector<384x128xf32>,
      } else {
      }
    } else {
    }
    return
  }
  func.func @transform_0(%arg0: i32, %arg1: i32, %arg2: i32, %arg3: i32) -> (i32, i32) {
    %c0_i32 = arith.constant 0 : i32
    %c0_i32_0 = arith.constant 0 : i32
    %c0_i32_1 = arith.constant 0 : i32
    return %c0_i32, %c0_i32_0 : i32, i32
  }
  func.func @transform_1(%arg0: i32, %arg1: i32, %arg2: i32, %arg3: i32) -> (i32, i32) {
    %c0_i32 = arith.constant 0 : i32
    %c0_i32_0 = arith.constant 0 : i32
    return %c0_i32, %arg0 : i32, i32
  }
  func.func @transform_2(%arg0: i32, %arg1: i32, %arg2: i32, %arg3: i32) -> (i32, i32) {
    %c0_i32 = arith.constant 0 : i32
    return %arg2, %arg3 : i32, i32
  }
  func.func @transform_3(%arg0: i32, %arg1: i32, %arg2: i32, %arg3: i32) -> (i32, i32) {
    %c0_i32 = arith.constant 0 : i32
    %0 = arith.cmpi eq, %arg1, %c0_i32 : i32
    %c0_i32_0 = arith.constant 0 : i32
    %1 = arith.cmpi eq, %arg2, %c0_i32_0 : i32
    %2 = arith.andi %0, %1 : i1
    %c0_i32_1 = arith.constant 0 : i32
    %3 = arith.select %2, %arg3, %c0_i32_1 : i32
    %c0_i32_2 = arith.constant 0 : i32
    return %3, %arg0 : i32, i32
  }
  func.func @transform_4(%arg0: i32, %arg1: i32, %arg2: i32, %arg3: i32) -> (i32, i32) {
    %c0_i32 = arith.constant 0 : i32
    return %arg2, %arg0 : i32, i32
  }
}

</mosaic_0001>

<llo_original>
// kernel: tpu_custom_call.1
$region0: #{tpu_custom_call.1}
  #allocation0 [shape = 'u32[]', space=smem, size = 0x4, offset = 0x4, fixed_abs, tag = 'smem constant byte address 0x4 - core index']
  #allocation1 [shape = 'u32[144,128]{1,0:T(1,128)}', space=vmem, size = 0x12000, scoped, tag = 'internal scratch']
  #allocation2 [shape = 'f32[768,128]{1,0:T(8,128)}', space=vmem, size = 0x60000, scoped, tag = 'scratch operand']
  #allocation3 [shape = 'f32[384,128]{1,0:T(8,128)}', space=vmem, size = 0x30000, scoped, tag = 'scratch operand']
  #allocation4 [shape = 'f32[384,128]{1,0:T(8,128)}', space=vmem, size = 0x30000, scoped, tag = 'scratch operand']
  %s0 = inlined_call_operand.hbm [shape: f32[3,3], index: 0, kind: input, shape index: {}]
  %s1 = inlined_call_operand.hbm [shape: f32[4,128], index: 1, kind: input, shape index: {}]
  %s2 = inlined_call_operand.hbm [shape: f32[384,384], index: 2, kind: input, shape index: {}]
  %s3 = inlined_call_operand.hbm [shape: f32[384,128], index: 3, kind: input, shape index: {}]
  %s4 = inlined_call_operand.hbm [shape: f32[384,128], index: 4, kind: output, shape index: {}]
  %s5 = sld [smem:[#allocation0]]
  $region85: #{tpu_custom_call.1} parent=0
    _
  %s7 = ssub.s32 1, %s5
  %s8 = scalar_select 0, %s7, %s5
  $region1: #{tpu_custom_call.1} parent=0
    #allocation5 [shape = 'u8[2048]{0}', space=smem, size = 0x800, scoped, tag = 'input window, operand 0, single buffered']
    #allocation6 [shape = 's32[2]{0}', space=sflag, size = 0x8, scoped, tag = 'scoped memory for tpu_custom_call.1']
    #allocation7 [shape = 's32[2]{0}', space=sflag, size = 0x8, scoped, tag = 'scoped memory for tpu_custom_call.1']
    #allocation8 [shape = 's32[2]{0}', space=sflag, size = 0x8, scoped, tag = 'scoped memory for tpu_custom_call.1']
    #allocation9 [shape = 'u8[2048]{0}', space=vmem, size = 0x800, scoped, tag = 'input window, operand 1, single buffered']
    #allocation10 [shape = 'u8[589824]{0}', space=vmem, size = 0x90000, scoped, tag = 'input window, operand 2, single buffered']
    #allocation11 [shape = 's32[1]{0}', space=sflag, size = 0x4, scoped, tag = 'scoped memory for tpu_custom_call.1']
    #allocation12 [shape = 'u8[393216]{0}', space=vmem, size = 0x60000, scoped, tag = 'input window, operand 3']
    #allocation13 [shape = 'u8[196608]{0}', space=vmem, size = 0x30000, scoped, tag = 'output window, operand 0, single buffered']
    %9 = vsyncpa [#allocation8], 0
    %10 = vsyncpa [#allocation6], 0
    %11 = vsyncpa [#allocation11], 0
    %12 = vsyncpa [#allocation7], 0
    loop: start=0, step=1, limit=5
    $region2: #{tpu_custom_call.1} parent=1 // loop_pre_header
      _
    $region3: #{tpu_custom_call.1} parent=1 // loop_header
      %s14 = sphi 0, %s18
      %p15 = scmp.ge.s32.totalorder %s14, 5
      %s21 = sphi 0, %s47
      %s22 = sphi 0, %s43
      %s23 = sphi 0, %s39
      %s24 = sphi 0, %s35
      %s25 = sphi 0, %s21
      %s26 = sphi 0, %s22
      %s27 = sphi 0, %s23
      %s28 = sphi 0, %s24
      %s29 = sphi 0, %s25
      %s30 = sphi 0, %s26
      %s31 = sphi 0, %s27
      %s32 = sphi 0, %s28
      %s48 = sphi 0, %s48
      %s50 = sphi 0, %s48
      %s51 = sphi 0, %s50
      %s65 = sphi 0, %s51
      %s71 = sphi 0, %s73
      %s74 = sphi 0, %s71
      %s75 = sphi 0, %s74
      %s91 = sphi 0, %s75
      %s99 = sphi 0, %s101
      %s102 = sphi 0, %s99
      %s103 = sphi 0, %s102
      %s119 = sphi 0, %s103
      %s137 = sphi 0, %s139
      %s140 = sphi 0, %s137
      %s141 = sphi 0, %s140
      %s157 = sphi 0, %s141
      %s165 = sphi 0, %s167
      %s168 = sphi 0, %s165
      %s169 = sphi 0, %s168
      %s185 = sphi 0, %s169
    $region4: #{tpu_custom_call.1} parent=1 // loop_header_branch
      %17 = sbr.rel (%p15) target = $region8
    $region5: #{tpu_custom_call.1} parent=1 // loop_body
      %s19 = ssub.s32 %s14, 1
      %s20 = ssub.s32 %s14, 2
      %s33 = sadd.s32 1, %s24
      %p34 = scmp.ge.s32.totalorder %s33, 1
      %s35 = scalar_select %p34, 0, %s33
      %s36 = sadd.s32 1, %s23
      %s37 = scalar_select %p34, %s36, %s23
      %p38 = scmp.ge.s32.totalorder %s37, 1
      %s39 = scalar_select %p38, 0, %s37
      %s40 = sadd.s32 1, %s22
      %s41 = scalar_select %p38, %s40, %s22
      %p42 = scmp.ge.s32.totalorder %s41, 3
      %s43 = scalar_select %p42, 0, %s41
      %s44 = sadd.s32 1, %s21
      %s45 = scalar_select %p42, %s44, %s21
      %p46 = scmp.ge.s32.totalorder %s45, 1
      %s47 = scalar_select %p46, 0, %s45
      %s49 = sadd.s32 %s48, 1
      %p52 = scmp.eq.s32.totalorder %s14, 2
      %p53 = scmp.ne.s32.totalorder %s48, %s50
      %p54 = scmp.eq.s32.totalorder %s14, 0
      %p55 = por %p53, %p54
      %p56 = scmp.ne.s32.totalorder %s48, %s50
      %p57 = scmp.eq.s32.totalorder %s19, 2
      %p58 = por %p56, %p57
      %p59 = scmp.ne.s32.totalorder %s50, %s51
      %p60 = scmp.eq.s32.totalorder %s19, 0
      %p61 = por %p59, %p60
      %p62 = scmp.ne.s32.totalorder %s50, %s51
      %p63 = scmp.eq.s32.totalorder %s20, 2
      %p64 = por %p62, %p63
      %p66 = scmp.ne.s32.totalorder %s51, %s65
      %p67 = scmp.eq.s32.totalorder %s20, 0
      %p68 = por %p66, %p67
      %s69 = ssub.s32 %s21, %s47
      %p70 = scmp.eq.s32.totalorder %s69, 0
      %s72 = sadd.s32 %s71, 1
      %s73 = scalar_select %p70, %s71, %s72
      %p76 = pneg %p70
      %p77 = scmp.eq.s32.totalorder %s14, 2
      %p78 = por %p76, %p77
      %p79 = scmp.ne.s32.totalorder %s71, %s74
      %p80 = scmp.eq.s32.totalorder %s14, 0
      %p81 = por %p79, %p80
      %p82 = scmp.ne.s32.totalorder %s71, %s74
      %p83 = scmp.eq.s32.totalorder %s19, 2
      %p84 = por %p82, %p83
      %p85 = scmp.ne.s32.totalorder %s74, %s75
      %p86 = scmp.eq.s32.totalorder %s19, 0
      %p87 = por %p85, %p86
      %p88 = scmp.ne.s32.totalorder %s74, %s75
      %p89 = scmp.eq.s32.totalorder %s20, 2
      %p90 = por %p88, %p89
      %p92 = scmp.ne.s32.totalorder %s75, %s91
      %p93 = scmp.eq.s32.totalorder %s20, 0
      %p94 = por %p92, %p93
      %s95 = ssub.s32 %s23, %s39
      %s96 = ssub.s32 %s24, %s35
      %s97 = sor.u32 %s95, %s96
      %p98 = scmp.eq.s32.totalorder %s97, 0
      %s100 = sadd.s32 %s99, 1
      %s101 = scalar_select %p98, %s99, %s100
      %p104 = pneg %p98
      %p105 = scmp.eq.s32.totalorder %s14, 2
      %p106 = por %p104, %p105
      %p107 = scmp.ne.s32.totalorder %s99, %s102
      %p108 = scmp.eq.s32.totalorder %s14, 0
      %p109 = por %p107, %p108
      %p110 = scmp.ne.s32.totalorder %s99, %s102
      %p111 = scmp.eq.s32.totalorder %s19, 2
      %p112 = por %p110, %p111
      %p113 = scmp.ne.s32.totalorder %s102, %s103
      %p114 = scmp.eq.s32.totalorder %s19, 0
      %p115 = por %p113, %p114
      %p116 = scmp.ne.s32.totalorder %s102, %s103
      %p117 = scmp.eq.s32.totalorder %s20, 2
      %p118 = por %p116, %p117
      %p120 = scmp.ne.s32.totalorder %s103, %s119
      %p121 = scmp.eq.s32.totalorder %s20, 0
      %p122 = por %p120, %p121
      %p123 = scmp.eq.s32.totalorder %s22, 0
      %p124 = scmp.eq.s32.totalorder %s23, 0
      %p125 = pnand %p123, %p124
      %p126 = pneg %p125
      %s127 = scalar_select %p126, %s24, 0
      %p128 = scmp.eq.s32.totalorder %s43, 0
      %p129 = scmp.eq.s32.totalorder %s39, 0
      %p130 = pnand %p128, %p129
      %p131 = pneg %p130
      %s132 = scalar_select %p131, %s35, 0
      %s133 = ssub.s32 %s127, %s132
      %s134 = ssub.s32 %s21, %s47
      %s135 = sor.u32 %s133, %s134
      %p136 = scmp.eq.s32.totalorder %s135, 0
      %s138 = sadd.s32 %s137, 1
      %s139 = scalar_select %p136, %s137, %s138
      %p142 = pneg %p136
      %p143 = scmp.eq.s32.totalorder %s14, 2
      %p144 = por %p142, %p143
      %p145 = scmp.ne.s32.totalorder %s137, %s140
      %p146 = scmp.eq.s32.totalorder %s14, 0
      %p147 = por %p145, %p146
      %p148 = scmp.ne.s32.totalorder %s137, %s140
      %p149 = scmp.eq.s32.totalorder %s19, 2
      %p150 = por %p148, %p149
      %p151 = scmp.ne.s32.totalorder %s140, %s141
      %p152 = scmp.eq.s32.totalorder %s19, 0
      %p153 = por %p151, %p152
      %p154 = scmp.ne.s32.totalorder %s140, %s141
      %p155 = scmp.eq.s32.totalorder %s20, 2
      %p156 = por %p154, %p155
      %p158 = scmp.ne.s32.totalorder %s141, %s157
      %p159 = scmp.eq.s32.totalorder %s20, 0
      %p160 = por %p158, %p159
      %s161 = ssub.s32 %s23, %s39
      %s162 = ssub.s32 %s21, %s47
      %s163 = sor.u32 %s161, %s162
      %p164 = scmp.eq.s32.totalorder %s163, 0
      %s166 = sadd.s32 %s165, 1
      %s167 = scalar_select %p164, %s165, %s166
      %p170 = pneg %p164
      %p171 = scmp.eq.s32.totalorder %s14, 2
      %p172 = por %p170, %p171
      %p173 = scmp.ne.s32.totalorder %s165, %s168
      %p174 = scmp.eq.s32.totalorder %s14, 0
      %p175 = por %p173, %p174
      %p176 = scmp.ne.s32.totalorder %s165, %s168
      %p177 = scmp.eq.s32.totalorder %s19, 2
      %p178 = por %p176, %p177
      %p179 = scmp.ne.s32.totalorder %s168, %s169
      %p180 = scmp.eq.s32.totalorder %s19, 0
      %p181 = por %p179, %p180
      %p182 = scmp.ne.s32.totalorder %s168, %s169
      %p183 = scmp.eq.s32.totalorder %s20, 2
      %p184 = por %p182, %p183
      %p186 = scmp.ne.s32.totalorder %s169, %s185
      %p187 = scmp.eq.s32.totalorder %s20, 0
      %p188 = por %p186, %p187
      %p189 = scmp.le.s32.totalorder 1, %s14
      %p190 = scmp.lt.s32.totalorder %s14, 4
      %p191 = pnand %p189, %p190
      %p192 = pneg %p191
      // Predicated region
      $region9: #{tpu_custom_call.1} parent=5 // pred_check
        _
      $region10: #{tpu_custom_call.1} parent=5 // pred_check_branch
        %194 = sbr.rel (%p191) target = $region12
      $region11: #{tpu_custom_call.1} parent=5 // pred_region
        %s195 = ssub.s32 %s14, 1
        // Predicated region
        $region13: #{tpu_custom_call.1} parent=11 // pred_check
          %p196 = pneg %p61
        $region14: #{tpu_custom_call.1} parent=11 // pred_check_branch
          %198 = sbr.rel (%p196) target = $region16
        $region15: #{tpu_custom_call.1} parent=11 // pred_region
          %s200 = ssub.s32 64, 64
          %201 = vsyncadd [#allocation8], %s200
          %204 = dma.hbm_to_smem %s0, 64, [#allocation5], [#allocation8]
        $region16: #{tpu_custom_call.1} parent=11 // pred_fallthru
          _
        // Predicated region
        $region17: #{tpu_custom_call.1} parent=11 // pred_check
          %p205 = pneg %p87
        $region18: #{tpu_custom_call.1} parent=11 // pred_check_branch
          %207 = sbr.rel (%p205) target = $region20
        $region19: #{tpu_custom_call.1} parent=11 // pred_region
          %s209 = ssub.s32 64, 64
          %210 = vsyncadd [#allocation6], %s209
          %s211 = smul.addr %s25, 64
          %s212 = scalar_lea.hbm %s1, %s211
          %s214 = sshll.u32 [#allocation9], 4
          %s215 = int_to_ptr.vmem [resolvable:$true] %s214
          %217 = dma.hbm_to_vmem [thread:$0]  %s212, 64, %s215, [#allocation6]
        $region20: #{tpu_custom_call.1} parent=11 // pred_fallthru
          _
        // Predicated region
        $region21: #{tpu_custom_call.1} parent=11 // pred_check
          %p218 = pneg %p115
        $region22: #{tpu_custom_call.1} parent=11 // pred_check_branch
          %220 = sbr.rel (%p218) target = $region24
        $region23: #{tpu_custom_call.1} parent=11 // pred_region
          %s221 = smul.u32 48, %s27
          %s222 = smul.u32 3, %s28
          %s224 = ssub.s32 18432, 18432
          %225 = vsyncadd [#allocation11], %s224
          %s226 = smul.addr %s221, 3
          %s227 = sadd.s32 %s222, %s226
          %s228 = smul.addr %s227, 128
          %s229 = scalar_lea.hbm %s2, %s228
          %s230 = sshll.u32 [#allocation10], 4
          %s231 = int_to_ptr.vmem [resolvable:$true] %s230
          %236 = dma.hbm_to_vmem [thread:$0]  %s229, 18432, %s231, [#allocation11], 384, 384, 24
        $region24: #{tpu_custom_call.1} parent=11 // pred_fallthru
          _
      $region12: #{tpu_custom_call.1} parent=5 // pred_fallthru
        _
      %p237 = scmp.lt.s32.totalorder %s14, 3
      // Predicated region
      $region25: #{tpu_custom_call.1} parent=5 // pred_check
        %p238 = pneg %p237
      $region26: #{tpu_custom_call.1} parent=5 // pred_check_branch
        %240 = sbr.rel (%p238) target = $region28
      $region27: #{tpu_custom_call.1} parent=5 // pred_region
        // Predicated region
        $region29: #{tpu_custom_call.1} parent=27 // pred_check
          %p241 = pneg %p147
        $region30: #{tpu_custom_call.1} parent=27 // pred_check_branch
          %243 = sbr.rel (%p241) target = $region32
        $region31: #{tpu_custom_call.1} parent=27 // pred_region
          %s244 = sand.u32 %s14, 1
          %s245 = scalar_lea.sflag [#allocation6], %s244
          %s246 = sand.u32 %s137, 1
          %s247 = smul.addr %s246, 384
          %s248 = scalar_lea.vmem [#allocation12], %s247
          %p249 = scmp.eq.s32.totalorder %s22, 0
          %p250 = scmp.eq.s32.totalorder %s23, 0
          %p251 = pnand %p249, %p250
          %p252 = pneg %p251
          %s253 = scalar_select %p252, %s24, 0
          %s254 = smul.u32 48, %s253
          %s256 = ssub.s32 6144, 6144
          %257 = vsyncadd %s245, %s256
          %s258 = sadd.s32 %s21, %s254
          %s259 = smul.addr %s258, 128
          %s260 = scalar_lea.hbm %s3, %s259
          %s261 = sshll.u32 %s248, 4
          %s262 = int_to_ptr.vmem [resolvable:$true] %s261
          %267 = dma.hbm_to_vmem [thread:$0]  %s260, 6144, %s262, %s245, 128, 128, 8
        $region32: #{tpu_custom_call.1} parent=27 // pred_fallthru
          _
      $region28: #{tpu_custom_call.1} parent=5 // pred_fallthru
        _
      %p268 = scmp.le.s32.totalorder 1, %s14
      %p269 = scmp.lt.s32.totalorder %s14, 4
      %p270 = pnand %p268, %p269
      %p271 = pneg %p270
      // Predicated region
      $region33: #{tpu_custom_call.1} parent=5 // pred_check
        _
      $region34: #{tpu_custom_call.1} parent=5 // pred_check_branch
        %273 = sbr.rel (%p270) target = $region36
      $region35: #{tpu_custom_call.1} parent=5 // pred_region
        %s274 = ssub.s32 %s14, 1
        // Predicated region
        $region37: #{tpu_custom_call.1} parent=35 // pred_check
          %p275 = pneg %p61
        $region38: #{tpu_custom_call.1} parent=35 // pred_check_branch
          %277 = sbr.rel (%p275) target = $region40
        $region39: #{tpu_custom_call.1} parent=35 // pred_region
          %278 = dma.done [#allocation8], 64
        $region40: #{tpu_custom_call.1} parent=35 // pred_fallthru
          _
        // Predicated region
        $region41: #{tpu_custom_call.1} parent=35 // pred_check
          %p279 = pneg %p87
        $region42: #{tpu_custom_call.1} parent=35 // pred_check_branch
          %281 = sbr.rel (%p279) target = $region44
        $region43: #{tpu_custom_call.1} parent=35 // pred_region
          %282 = dma.done [#allocation6], 64
        $region44: #{tpu_custom_call.1} parent=35 // pred_fallthru
          _
        // Predicated region
        $region45: #{tpu_custom_call.1} parent=35 // pred_check
          %p283 = pneg %p115
        $region46: #{tpu_custom_call.1} parent=35 // pred_check_branch
          %285 = sbr.rel (%p283) target = $region48
        $region47: #{tpu_custom_call.1} parent=35 // pred_region
          %286 = dma.done [#allocation11], 18432
        $region48: #{tpu_custom_call.1} parent=35 // pred_fallthru
          _
        %s287 = sand.u32 %s19, 1
        %s288 = scalar_lea.sflag [#allocation6], %s287
        %s289 = sand.u32 %s140, 1
        %s290 = smul.addr %s289, 384
        %s291 = scalar_lea.vmem [#allocation12], %s290
        // Predicated region
        $region49: #{tpu_custom_call.1} parent=35 // pred_check
          %p292 = pneg %p153
        $region50: #{tpu_custom_call.1} parent=35 // pred_check_branch
          %294 = sbr.rel (%p292) target = $region52
        $region51: #{tpu_custom_call.1} parent=35 // pred_region
          %295 = dma.done %s288, 6144
        $region52: #{tpu_custom_call.1} parent=35 // pred_fallthru
          _
        %296 = sfence
        %p297 = pneg %p61
        %p298 = pneg %p58
        %p299 = pneg %p87
        %p300 = pneg %p84
        %p301 = pneg %p115
        %p302 = pneg %p112
        %s303 = sand.u32 %s19, 1
        %s304 = scalar_lea.sflag [#allocation6], %s303
        %s305 = sand.u32 %s140, 1
        %s306 = smul.addr %s305, 384
        %s307 = scalar_lea.vmem [#allocation12], %s306
        %p308 = pneg %p153
        %p309 = pneg %p150
        %p310 = pneg %p181
        %p311 = pneg %p178
        %s312 = smul.u32 48, %s27
        %s313 = smul.u32 3, %s28
        %p314 = scmp.eq.s32.totalorder %s26, 0
        %p315 = scmp.eq.s32.totalorder %s27, 0
        %p316 = pnand %p314, %p315
        %p317 = pneg %p316
        %s318 = scalar_select %p317, %s28, 0
        %s319 = smul.u32 48, %s318
        %s320 = smul.u32 48, %s27
        %p321 = scmp.lt.s32.totalorder %s26, 0
        %s322 = ssub.s32 0, %s26
        %s323 = scalar_select %p321, %s322, %s26
        %s324 = sand.u32 %s323, 1
        %s325 = ssub.s32 0, %s324
        %s326 = scalar_select %p321, %s325, %s324
        %p327 = scmp.ne.s32.totalorder %s326, 0
        %p328 = scmp.lt.s32.totalorder %s326, 0
        %p329 = pnand %p328, %p327
        %p330 = pneg %p329
        %s331 = sadd.s32 %s326, 2
        %s332 = scalar_select %p330, %s331, %s326
        %s333 = smul.u32 %s332, 384
        %s334 = sadd.s32 %s26, 1
        %p335 = scmp.lt.s32.totalorder %s334, 0
        %s336 = ssub.s32 0, %s334
        %s337 = scalar_select %p335, %s336, %s334
        %s338 = sand.u32 %s337, 1
        %s339 = ssub.s32 0, %s338
        %s340 = scalar_select %p335, %s339, %s338
        %p341 = scmp.ne.s32.totalorder %s340, 0
        %p342 = scmp.lt.s32.totalorder %s340, 0
        %p343 = pnand %p342, %p341
        %p344 = pneg %p343
        %s345 = sadd.s32 %s340, 2
        %s346 = scalar_select %p344, %s345, %s340
        %s347 = smul.u32 %s346, 384
        %s348 = smul.u32 %s27, 384
        %s349 = smul.u32 %s28, 384
        %s350 = sadd.s32 %s333, %s349
        %s351 = sadd.s32 %s333, %s348
        %s352 = sadd.s32 %s347, %s348
        %p353 = scmp.eq.s32.totalorder %s26, 0
        %p354 = scmp.eq.s32.totalorder %s27, 0
        %p355 = pnand %p353, %p354
        %p356 = pneg %p355
        // Predicated region
        $region53: #{tpu_custom_call.1} parent=35 // pred_check
          _
        $region54: #{tpu_custom_call.1} parent=35 // pred_check_branch
          %358 = sbr.rel (%p355) target = $region56
        $region55: #{tpu_custom_call.1} parent=35 // pred_region
          %v359 = vld [vmem:[%s291] sm:$0xff]
          %v360 = vld [vmem:[%s291 + $0x8] sm:$0xff]
          %v361 = vld [vmem:[%s291 + $0x10] sm:$0xff]
          %v362 = vld [vmem:[%s291 + $0x18] sm:$0xff]
          %v363 = vld [vmem:[%s291 + $0x20] sm:$0xff]
          %v364 = vld [vmem:[%s291 + $0x28] sm:$0xff]
          %v365 = vld [vmem:[%s291 + $0x30] sm:$0xff]
          %v366 = vld [vmem:[%s291 + $0x38] sm:$0xff]
          %v367 = vld [vmem:[%s291 + $0x40] sm:$0xff]
          %v368 = vld [vmem:[%s291 + $0x48] sm:$0xff]
          %v369 = vld [vmem:[%s291 + $0x50] sm:$0xff]
          %v370 = vld [vmem:[%s291 + $0x58] sm:$0xff]
          %v371 = vld [vmem:[%s291 + $0x60] sm:$0xff]
          %v372 = vld [vmem:[%s291 + $0x68] sm:$0xff]
          %v373 = vld [vmem:[%s291 + $0x70] sm:$0xff]
          %v374 = vld [vmem:[%s291 + $0x78] sm:$0xff]
          %v375 = vld [vmem:[%s291 + $0x80] sm:$0xff]
          %v376 = vld [vmem:[%s291 + $0x88] sm:$0xff]
          %v377 = vld [vmem:[%s291 + $0x90] sm:$0xff]
          %v378 = vld [vmem:[%s291 + $0x98] sm:$0xff]
          %v379 = vld [vmem:[%s291 + $0xa0] sm:$0xff]
          %v380 = vld [vmem:[%s291 + $0xa8] sm:$0xff]
          %v381 = vld [vmem:[%s291 + $0xb0] sm:$0xff]
          %v382 = vld [vmem:[%s291 + $0xb8] sm:$0xff]
          %v383 = vld [vmem:[%s291 + $0xc0] sm:$0xff]
          %v384 = vld [vmem:[%s291 + $0xc8] sm:$0xff]
          %v385 = vld [vmem:[%s291 + $0xd0] sm:$0xff]
          %v386 = vld [vmem:[%s291 + $0xd8] sm:$0xff]
          %v387 = vld [vmem:[%s291 + $0xe0] sm:$0xff]
          %v388 = vld [vmem:[%s291 + $0xe8] sm:$0xff]
          %v389 = vld [vmem:[%s291 + $0xf0] sm:$0xff]
          %v390 = vld [vmem:[%s291 + $0xf8] sm:$0xff]
          %v391 = vld [vmem:[%s291 + $0x100] sm:$0xff]
          %v392 = vld [vmem:[%s291 + $0x108] sm:$0xff]
          %v393 = vld [vmem:[%s291 + $0x110] sm:$0xff]
          %v394 = vld [vmem:[%s291 + $0x118] sm:$0xff]
          %v395 = vld [vmem:[%s291 + $0x120] sm:$0xff]
          %v396 = vld [vmem:[%s291 + $0x128] sm:$0xff]
          %v397 = vld [vmem:[%s291 + $0x130] sm:$0xff]
          %v398 = vld [vmem:[%s291 + $0x138] sm:$0xff]
          %v399 = vld [vmem:[%s291 + $0x140] sm:$0xff]
          %v400 = vld [vmem:[%s291 + $0x148] sm:$0xff]
          %v401 = vld [vmem:[%s291 + $0x150] sm:$0xff]
          %v402 = vld [vmem:[%s291 + $0x158] sm:$0xff]
          %v403 = vld [vmem:[%s291 + $0x160] sm:$0xff]
          %v404 = vld [vmem:[%s291 + $0x168] sm:$0xff]
          %v405 = vld [vmem:[%s291 + $0x170] sm:$0xff]
          %v406 = vld [vmem:[%s291 + $0x178] sm:$0xff]
          %s407 = scalar_lea.vmem [#allocation2], %s349
          %408 = vst [vmem:[%s407] sm:$0xff] %v359
          %409 = vst [vmem:[%s407 + $0x8] sm:$0xff] %v360
          %410 = vst [vmem:[%s407 + $0x10] sm:$0xff] %v361
          %411 = vst [vmem:[%s407 + $0x18] sm:$0xff] %v362
          %412 = vst [vmem:[%s407 + $0x20] sm:$0xff] %v363
          %413 = vst [vmem:[%s407 + $0x28] sm:$0xff] %v364
          %414 = vst [vmem:[%s407 + $0x30] sm:$0xff] %v365
          %415 = vst [vmem:[%s407 + $0x38] sm:$0xff] %v366
          %416 = vst [vmem:[%s407 + $0x40] sm:$0xff] %v367
          %417 = vst [vmem:[%s407 + $0x48] sm:$0xff] %v368
          %418 = vst [vmem:[%s407 + $0x50] sm:$0xff] %v369
          %419 = vst [vmem:[%s407 + $0x58] sm:$0xff] %v370
          %420 = vst [vmem:[%s407 + $0x60] sm:$0xff] %v371
          %421 = vst [vmem:[%s407 + $0x68] sm:$0xff] %v372
          %422 = vst [vmem:[%s407 + $0x70] sm:$0xff] %v373
          %423 = vst [vmem:[%s407 + $0x78] sm:$0xff] %v374
          %424 = vst [vmem:[%s407 + $0x80] sm:$0xff] %v375
          %425 = vst [vmem:[%s407 + $0x88] sm:$0xff] %v376
          %426 = vst [vmem:[%s407 + $0x90] sm:$0xff] %v377
          %427 = vst [vmem:[%s407 + $0x98] sm:$0xff] %v378
          %428 = vst [vmem:[%s407 + $0xa0] sm:$0xff] %v379
          %429 = vst [vmem:[%s407 + $0xa8] sm:$0xff] %v380
          %430 = vst [vmem:[%s407 + $0xb0] sm:$0xff] %v381
          %431 = vst [vmem:[%s407 + $0xb8] sm:$0xff] %v382
          %432 = vst [vmem:[%s407 + $0xc0] sm:$0xff] %v383
          %433 = vst [vmem:[%s407 + $0xc8] sm:$0xff] %v384
          %434 = vst [vmem:[%s407 + $0xd0] sm:$0xff] %v385
          %435 = vst [vmem:[%s407 + $0xd8] sm:$0xff] %v386
          %436 = vst [vmem:[%s407 + $0xe0] sm:$0xff] %v387
          %437 = vst [vmem:[%s407 + $0xe8] sm:$0xff] %v388
          %438 = vst [vmem:[%s407 + $0xf0] sm:$0xff] %v389
          %439 = vst [vmem:[%s407 + $0xf8] sm:$0xff] %v390
          %440 = vst [vmem:[%s407 + $0x100] sm:$0xff] %v391
          %441 = vst [vmem:[%s407 + $0x108] sm:$0xff] %v392
          %442 = vst [vmem:[%s407 + $0x110] sm:$0xff] %v393
          %443 = vst [vmem:[%s407 + $0x118] sm:$0xff] %v394
          %444 = vst [vmem:[%s407 + $0x120] sm:$0xff] %v395
          %445 = vst [vmem:[%s407 + $0x128] sm:$0xff] %v396
          %446 = vst [vmem:[%s407 + $0x130] sm:$0xff] %v397
          %447 = vst [vmem:[%s407 + $0x138] sm:$0xff] %v398
          %448 = vst [vmem:[%s407 + $0x140] sm:$0xff] %v399
          %449 = vst [vmem:[%s407 + $0x148] sm:$0xff] %v400
          %450 = vst [vmem:[%s407 + $0x150] sm:$0xff] %v401
          %451 = vst [vmem:[%s407 + $0x158] sm:$0xff] %v402
          %452 = vst [vmem:[%s407 + $0x160] sm:$0xff] %v403
          %453 = vst [vmem:[%s407 + $0x168] sm:$0xff] %v404
          %454 = vst [vmem:[%s407 + $0x170] sm:$0xff] %v405
          %455 = vst [vmem:[%s407 + $0x178] sm:$0xff] %v406
        $region56: #{tpu_custom_call.1} parent=35 // pred_fallthru
          _
        %p456 = scmp.eq.s32.totalorder %s28, 0
        // Predicated region
        $region57: #{tpu_custom_call.1} parent=35 // pred_check
          %p457 = pneg %p456
        $region58: #{tpu_custom_call.1} parent=35 // pred_check_branch
          %459 = sbr.rel (%p457) target = $region60
        $region59: #{tpu_custom_call.1} parent=35 // pred_region
          %460 = vst [vmem:[#allocation4] sm:$0xff] 0.0
          %461 = vst [vmem:[#allocation4 + $0x8] sm:$0xff] 0.0
          %462 = vst [vmem:[#allocation4 + $0x10] sm:$0xff] 0.0
          %463 = vst [vmem:[#allocation4 + $0x18] sm:$0xff] 0.0
          %464 = vst [vmem:[#allocation4 + $0x20] sm:$0xff] 0.0
          %465 = vst [vmem:[#allocation4 + $0x28] sm:$0xff] 0.0
          %466 = vst [vmem:[#allocation4 + $0x30] sm:$0xff] 0.0
          %467 = vst [vmem:[#allocation4 + $0x38] sm:$0xff] 0.0
          %468 = vst [vmem:[#allocation4 + $0x40] sm:$0xff] 0.0
          %469 = vst [vmem:[#allocation4 + $0x48] sm:$0xff] 0.0
          %470 = vst [vmem:[#allocation4 + $0x50] sm:$0xff] 0.0
          %471 = vst [vmem:[#allocation4 + $0x58] sm:$0xff] 0.0
          %472 = vst [vmem:[#allocation4 + $0x60] sm:$0xff] 0.0
          %473 = vst [vmem:[#allocation4 + $0x68] sm:$0xff] 0.0
          %474 = vst [vmem:[#allocation4 + $0x70] sm:$0xff] 0.0
          %475 = vst [vmem:[#allocation4 + $0x78] sm:$0xff] 0.0
          %476 = vst [vmem:[#allocation4 + $0x80] sm:$0xff] 0.0
          %477 = vst [vmem:[#allocation4 + $0x88] sm:$0xff] 0.0
          %478 = vst [vmem:[#allocation4 + $0x90] sm:$0xff] 0.0
          %479 = vst [vmem:[#allocation4 + $0x98] sm:$0xff] 0.0
          %480 = vst [vmem:[#allocation4 + $0xa0] sm:$0xff] 0.0
          %481 = vst [vmem:[#allocation4 + $0xa8] sm:$0xff] 0.0
          %482 = vst [vmem:[#allocation4 + $0xb0] sm:$0xff] 0.0
          %483 = vst [vmem:[#allocation4 + $0xb8] sm:$0xff] 0.0
          %484 = vst [vmem:[#allocation4 + $0xc0] sm:$0xff] 0.0
          %485 = vst [vmem:[#allocation4 + $0xc8] sm:$0xff] 0.0
          %486 = vst [vmem:[#allocation4 + $0xd0] sm:$0xff] 0.0
          %487 = vst [vmem:[#allocation4 + $0xd8] sm:$0xff] 0.0
          %488 = vst [vmem:[#allocation4 + $0xe0] sm:$0xff] 0.0
          %489 = vst [vmem:[#allocation4 + $0xe8] sm:$0xff] 0.0
          %490 = vst [vmem:[#allocation4 + $0xf0] sm:$0xff] 0.0
          %491 = vst [vmem:[#allocation4 + $0xf8] sm:$0xff] 0.0
          %492 = vst [vmem:[#allocation4 + $0x100] sm:$0xff] 0.0
          %493 = vst [vmem:[#allocation4 + $0x108] sm:$0xff] 0.0
          %494 = vst [vmem:[#allocation4 + $0x110] sm:$0xff] 0.0
          %495 = vst [vmem:[#allocation4 + $0x118] sm:$0xff] 0.0
          %496 = vst [vmem:[#allocation4 + $0x120] sm:$0xff] 0.0
          %497 = vst [vmem:[#allocation4 + $0x128] sm:$0xff] 0.0
          %498 = vst [vmem:[#allocation4 + $0x130] sm:$0xff] 0.0
          %499 = vst [vmem:[#allocation4 + $0x138] sm:$0xff] 0.0
          %500 = vst [vmem:[#allocation4 + $0x140] sm:$0xff] 0.0
          %501 = vst [vmem:[#allocation4 + $0x148] sm:$0xff] 0.0
          %502 = vst [vmem:[#allocation4 + $0x150] sm:$0xff] 0.0
          %503 = vst [vmem:[#allocation4 + $0x158] sm:$0xff] 0.0
          %504 = vst [vmem:[#allocation4 + $0x160] sm:$0xff] 0.0
          %505 = vst [vmem:[#allocation4 + $0x168] sm:$0xff] 0.0
          %506 = vst [vmem:[#allocation4 + $0x170] sm:$0xff] 0.0
          %507 = vst [vmem:[#allocation4 + $0x178] sm:$0xff] 0.0
        $region60: #{tpu_custom_call.1} parent=35 // pred_fallthru
          _
        %v508 = vld [vmem:[#allocation10] sm:$0xff]
        %v509 = vld [vmem:[#allocation10 + $0x8] sm:$0xff]
        %v510 = vld [vmem:[#allocation10 + $0x10] sm:$0xff]
        %v511 = vld [vmem:[#allocation10 + $0x18] sm:$0xff]
        %v512 = vld [vmem:[#allocation10 + $0x20] sm:$0xff]
        %v513 = vld [vmem:[#allocation10 + $0x28] sm:$0xff]
        %v514 = vld [vmem:[#allocation10 + $0x30] sm:$0xff]
        %v515 = vld [vmem:[#allocation10 + $0x38] sm:$0xff]
        %v516 = vld [vmem:[#allocation10 + $0x40] sm:$0xff]
        %v517 = vld [vmem:[#allocation10 + $0x48] sm:$0xff]
        %v518 = vld [vmem:[#allocation10 + $0x50] sm:$0xff]
        %v519 = vld [vmem:[#allocation10 + $0x58] sm:$0xff]
        %v520 = vld [vmem:[#allocation10 + $0x60] sm:$0xff]
        %v521 = vld [vmem:[#allocation10 + $0x68] sm:$0xff]
        %v522 = vld [vmem:[#allocation10 + $0x70] sm:$0xff]
        %v523 = vld [vmem:[#allocation10 + $0x78] sm:$0xff]
        %v524 = vld [vmem:[#allocation10 + $0x80] sm:$0xff]
        %v525 = vld [vmem:[#allocation10 + $0x88] sm:$0xff]
        %v526 = vld [vmem:[#allocation10 + $0x90] sm:$0xff]
        %v527 = vld [vmem:[#allocation10 + $0x98] sm:$0xff]
        %v528 = vld [vmem:[#allocation10 + $0xa0] sm:$0xff]
        %v529 = vld [vmem:[#allocation10 + $0xa8] sm:$0xff]
        %v530 = vld [vmem:[#allocation10 + $0xb0] sm:$0xff]
        %v531 = vld [vmem:[#allocation10 + $0xb8] sm:$0xff]
        %v532 = vld [vmem:[#allocation10 + $0xc0] sm:$0xff]
        %v533 = vld [vmem:[#allocation10 + $0xc8] sm:$0xff]
        %v534 = vld [vmem:[#allocation10 + $0xd0] sm:$0xff]
        %v535 = vld [vmem:[#allocation10 + $0xd8] sm:$0xff]
        %v536 = vld [vmem:[#allocation10 + $0xe0] sm:$0xff]
        %v537 = vld [vmem:[#allocation10 + $0xe8] sm:$0xff]
        %v538 = vld [vmem:[#allocation10 + $0xf0] sm:$0xff]
        %v539 = vld [vmem:[#allocation10 + $0xf8] sm:$0xff]
        %v540 = vld [vmem:[#allocation10 + $0x100] sm:$0xff]
        %v541 = vld [vmem:[#allocation10 + $0x108] sm:$0xff]
        %v542 = vld [vmem:[#allocation10 + $0x110] sm:$0xff]
        %v543 = vld [vmem:[#allocation10 + $0x118] sm:$0xff]
        %v544 = vld [vmem:[#allocation10 + $0x120] sm:$0xff]
        %v545 = vld [vmem:[#allocation10 + $0x128] sm:$0xff]
        %v546 = vld [vmem:[#allocation10 + $0x130] sm:$0xff]
        %v547 = vld [vmem:[#allocation10 + $0x138] sm:$0xff]
        %v548 = vld [vmem:[#allocation10 + $0x140] sm:$0xff]
        %v549 = vld [vmem:[#allocation10 + $0x148] sm:$0xff]
        %v550 = vld [vmem:[#allocation10 + $0x150] sm:$0xff]
        %v551 = vld [vmem:[#allocation10 + $0x158] sm:$0xff]
        %v552 = vld [vmem:[#allocation10 + $0x160] sm:$0xff]
        %v553 = vld [vmem:[#allocation10 + $0x168] sm:$0xff]
        %v554 = vld [vmem:[#allocation10 + $0x170] sm:$0xff]
        %v555 = vld [vmem:[#allocation10 + $0x178] sm:$0xff]
        %v556 = vld [vmem:[#allocation10 + $0x180] sm:$0xff]
        %v557 = vld [vmem:[#allocation10 + $0x188] sm:$0xff]
        %v558 = vld [vmem:[#allocation10 + $0x190] sm:$0xff]
        %v559 = vld [vmem:[#allocation10 + $0x198] sm:$0xff]
        %v560 = vld [vmem:[#allocation10 + $0x1a0] sm:$0xff]
        %v561 = vld [vmem:[#allocation10 + $0x1a8] sm:$0xff]
        %v562 = vld [vmem:[#allocation10 + $0x1b0] sm:$0xff]
        %v563 = vld [vmem:[#allocation10 + $0x1b8] sm:$0xff]
        %v564 = vld [vmem:[#allocation10 + $0x1c0] sm:$0xff]
        %v565 = vld [vmem:[#allocation10 + $0x1c8] sm:$0xff]
        %v566 = vld [vmem:[#allocation10 + $0x1d0] sm:$0xff]
        %v567 = vld [vmem:[#allocation10 + $0x1d8] sm:$0xff]
        %v568 = vld [vmem:[#allocation10 + $0x1e0] sm:$0xff]
        %v569 = vld [vmem:[#allocation10 + $0x1e8] sm:$0xff]
        %v570 = vld [vmem:[#allocation10 + $0x1f0] sm:$0xff]
        %v571 = vld [vmem:[#allocation10 + $0x1f8] sm:$0xff]
        %v572 = vld [vmem:[#allocation10 + $0x200] sm:$0xff]
        %v573 = vld [vmem:[#allocation10 + $0x208] sm:$0xff]
        %v574 = vld [vmem:[#allocation10 + $0x210] sm:$0xff]
        %v575 = vld [vmem:[#allocation10 + $0x218] sm:$0xff]
        %v576 = vld [vmem:[#allocation10 + $0x220] sm:$0xff]
        %v577 = vld [vmem:[#allocation10 + $0x228] sm:$0xff]
        %v578 = vld [vmem:[#allocation10 + $0x230] sm:$0xff]
        %v579 = vld [vmem:[#allocation10 + $0x238] sm:$0xff]
        %v580 = vld [vmem:[#allocation10 + $0x240] sm:$0xff]
        %v581 = vld [vmem:[#allocation10 + $0x248] sm:$0xff]
        %v582 = vld [vmem:[#allocation10 + $0x250] sm:$0xff]
        %v583 = vld [vmem:[#allocation10 + $0x258] sm:$0xff]
        %v584 = vld [vmem:[#allocation10 + $0x260] sm:$0xff]
        %v585 = vld [vmem:[#allocation10 + $0x268] sm:$0xff]
        %v586 = vld [vmem:[#allocation10 + $0x270] sm:$0xff]
        %v587 = vld [vmem:[#allocation10 + $0x278] sm:$0xff]
        %v588 = vld [vmem:[#allocation10 + $0x280] sm:$0xff]
        %v589 = vld [vmem:[#allocation10 + $0x288] sm:$0xff]
        %v590 = vld [vmem:[#allocation10 + $0x290] sm:$0xff]
        %v591 = vld [vmem:[#allocation10 + $0x298] sm:$0xff]
        %v592 = vld [vmem:[#allocation10 + $0x2a0] sm:$0xff]
        %v593 = vld [vmem:[#allocation10 + $0x2a8] sm:$0xff]
        %v594 = vld [vmem:[#allocation10 + $0x2b0] sm:$0xff]
        %v595 = vld [vmem:[#allocation10 + $0x2b8] sm:$0xff]
        %v596 = vld [vmem:[#allocation10 + $0x2c0] sm:$0xff]
        %v597 = vld [vmem:[#allocation10 + $0x2c8] sm:$0xff]
        %v598 = vld [vmem:[#allocation10 + $0x2d0] sm:$0xff]
        %v599 = vld [vmem:[#allocation10 + $0x2d8] sm:$0xff]
        %v600 = vld [vmem:[#allocation10 + $0x2e0] sm:$0xff]
        %v601 = vld [vmem:[#allocation10 + $0x2e8] sm:$0xff]
        %v602 = vld [vmem:[#allocation10 + $0x2f0] sm:$0xff]
        %v603 = vld [vmem:[#allocation10 + $0x2f8] sm:$0xff]
        %v604 = vld [vmem:[#allocation10 + $0x300] sm:$0xff]
        %v605 = vld [vmem:[#allocation10 + $0x308] sm:$0xff]
        %v606 = vld [vmem:[#allocation10 + $0x310] sm:$0xff]
        %v607 = vld [vmem:[#allocation10 + $0x318] sm:$0xff]
        %v608 = vld [vmem:[#allocation10 + $0x320] sm:$0xff]
        %v609 = vld [vmem:[#allocation10 + $0x328] sm:$0xff]
        %v610 = vld [vmem:[#allocation10 + $0x330] sm:$0xff]
        %v611 = vld [vmem:[#allocation10 + $0x338] sm:$0xff]
        %v612 = vld [vmem:[#allocation10 + $0x340] sm:$0xff]
        %v613 = vld [vmem:[#allocation10 + $0x348] sm:$0xff]
        %v614 = vld [vmem:[#allocation10 + $0x350] sm:$0xff]
        %v615 = vld [vmem:[#allocation10 + $0x358] sm:$0xff]
        %v616 = vld [vmem:[#allocation10 + $0x360] sm:$0xff]
        %v617 = vld [vmem:[#allocation10 + $0x368] sm:$0xff]
        %v618 = vld [vmem:[#allocation10 + $0x370] sm:$0xff]
        %v619 = vld [vmem:[#allocation10 + $0x378] sm:$0xff]
        %v620 = vld [vmem:[#allocation10 + $0x380] sm:$0xff]
        %v621 = vld [vmem:[#allocation10 + $0x388] sm:$0xff]
        %v622 = vld [vmem:[#allocation10 + $0x390] sm:$0xff]
        %v623 = vld [vmem:[#allocation10 + $0x398] sm:$0xff]
        %v624 = vld [vmem:[#allocation10 + $0x3a0] sm:$0xff]
        %v625 = vld [vmem:[#allocation10 + $0x3a8] sm:$0xff]
        %v626 = vld [vmem:[#allocation10 + $0x3b0] sm:$0xff]
        %v627 = vld [vmem:[#allocation10 + $0x3b8] sm:$0xff]
        %v628 = vld [vmem:[#allocation10 + $0x3c0] sm:$0xff]
        %v629 = vld [vmem:[#allocation10 + $0x3c8] sm:$0xff]
        %v630 = vld [vmem:[#allocation10 + $0x3d0] sm:$0xff]
        %v631 = vld [vmem:[#allocation10 + $0x3d8] sm:$0xff]
        %v632 = vld [vmem:[#allocation10 + $0x3e0] sm:$0xff]
        %v633 = vld [vmem:[#allocation10 + $0x3e8] sm:$0xff]
        %v634 = vld [vmem:[#allocation10 + $0x3f0] sm:$0xff]
        %v635 = vld [vmem:[#allocation10 + $0x3f8] sm:$0xff]
        %v636 = vld [vmem:[#allocation10 + $0x400] sm:$0xff]
        %v637 = vld [vmem:[#allocation10 + $0x408] sm:$0xff]
        %v638 = vld [vmem:[#allocation10 + $0x410] sm:$0xff]
        %v639 = vld [vmem:[#allocation10 + $0x418] sm:$0xff]
        %v640 = vld [vmem:[#allocation10 + $0x420] sm:$0xff]
        %v641 = vld [vmem:[#allocation10 + $0x428] sm:$0xff]
        %v642 = vld [vmem:[#allocation10 + $0x430] sm:$0xff]
        %v643 = vld [vmem:[#allocation10 + $0x438] sm:$0xff]
        %v644 = vld [vmem:[#allocation10 + $0x440] sm:$0xff]
        %v645 = vld [vmem:[#allocation10 + $0x448] sm:$0xff]
        %v646 = vld [vmem:[#allocation10 + $0x450] sm:$0xff]
        %v647 = vld [vmem:[#allocation10 + $0x458] sm:$0xff]
        %v648 = vld [vmem:[#allocation10 + $0x460] sm:$0xff]
        %v649 = vld [vmem:[#allocation10 + $0x468] sm:$0xff]
        %v650 = vld [vmem:[#allocation10 + $0x470] sm:$0xff]
        %v651 = vld [vmem:[#allocation10 + $0x478] sm:$0xff]
        %s652 = scalar_lea.vmem [#allocation2], %s350
        %v653 = vld [vmem:[%s652] sm:$0xff]
        %v654 = vld [vmem:[%s652 + $0x8] sm:$0xff]
        %v655 = vld [vmem:[%s652 + $0x10] sm:$0xff]
        %v656 = vld [vmem:[%s652 + $0x18] sm:$0xff]
        %v657 = vld [vmem:[%s652 + $0x20] sm:$0xff]
        %v658 = vld [vmem:[%s652 + $0x28] sm:$0xff]
        %v659 = vld [vmem:[%s652 + $0x30] sm:$0xff]
        %v660 = vld [vmem:[%s652 + $0x38] sm:$0xff]
        %v661 = vld [vmem:[%s652 + $0x40] sm:$0xff]
        %v662 = vld [vmem:[%s652 + $0x48] sm:$0xff]
        %v663 = vld [vmem:[%s652 + $0x50] sm:$0xff]
        %v664 = vld [vmem:[%s652 + $0x58] sm:$0xff]
        %v665 = vld [vmem:[%s652 + $0x60] sm:$0xff]
        %v666 = vld [vmem:[%s652 + $0x68] sm:$0xff]
        %v667 = vld [vmem:[%s652 + $0x70] sm:$0xff]
        %v668 = vld [vmem:[%s652 + $0x78] sm:$0xff]
        %v669 = vld [vmem:[%s652 + $0x80] sm:$0xff]
        %v670 = vld [vmem:[%s652 + $0x88] sm:$0xff]
        %v671 = vld [vmem:[%s652 + $0x90] sm:$0xff]
        %v672 = vld [vmem:[%s652 + $0x98] sm:$0xff]
        %v673 = vld [vmem:[%s652 + $0xa0] sm:$0xff]
        %v674 = vld [vmem:[%s652 + $0xa8] sm:$0xff]
        %v675 = vld [vmem:[%s652 + $0xb0] sm:$0xff]
        %v676 = vld [vmem:[%s652 + $0xb8] sm:$0xff]
        %v677 = vld [vmem:[%s652 + $0xc0] sm:$0xff]
        %v678 = vld [vmem:[%s652 + $0xc8] sm:$0xff]
        %v679 = vld [vmem:[%s652 + $0xd0] sm:$0xff]
        %v680 = vld [vmem:[%s652 + $0xd8] sm:$0xff]
        %v681 = vld [vmem:[%s652 + $0xe0] sm:$0xff]
        %v682 = vld [vmem:[%s652 + $0xe8] sm:$0xff]
        %v683 = vld [vmem:[%s652 + $0xf0] sm:$0xff]
        %v684 = vld [vmem:[%s652 + $0xf8] sm:$0xff]
        %v685 = vld [vmem:[%s652 + $0x100] sm:$0xff]
        %v686 = vld [vmem:[%s652 + $0x108] sm:$0xff]
        %v687 = vld [vmem:[%s652 + $0x110] sm:$0xff]
        %v688 = vld [vmem:[%s652 + $0x118] sm:$0xff]
        %v689 = vld [vmem:[%s652 + $0x120] sm:$0xff]
        %v690 = vld [vmem:[%s652 + $0x128] sm:$0xff]
        %v691 = vld [vmem:[%s652 + $0x130] sm:$0xff]
        %v692 = vld [vmem:[%s652 + $0x138] sm:$0xff]
        %v693 = vld [vmem:[%s652 + $0x140] sm:$0xff]
        %v694 = vld [vmem:[%s652 + $0x148] sm:$0xff]
        %v695 = vld [vmem:[%s652 + $0x150] sm:$0xff]
        %v696 = vld [vmem:[%s652 + $0x158] sm:$0xff]
        %v697 = vld [vmem:[%s652 + $0x160] sm:$0xff]
        %v698 = vld [vmem:[%s652 + $0x168] sm:$0xff]
        %v699 = vld [vmem:[%s652 + $0x170] sm:$0xff]
        %v700 = vld [vmem:[%s652 + $0x178] sm:$0xff]
        %v701 = vld [vmem:[#allocation4] sm:$0xff]
        %v702 = vld [vmem:[#allocation4 + $0x8] sm:$0xff]
        %v703 = vld [vmem:[#allocation4 + $0x10] sm:$0xff]
        %v704 = vld [vmem:[#allocation4 + $0x18] sm:$0xff]
        %v705 = vld [vmem:[#allocation4 + $0x20] sm:$0xff]
        %v706 = vld [vmem:[#allocation4 + $0x28] sm:$0xff]
        %v707 = vld [vmem:[#allocation4 + $0x30] sm:$0xff]
        %v708 = vld [vmem:[#allocation4 + $0x38] sm:$0xff]
        %v709 = vld [vmem:[#allocation4 + $0x40] sm:$0xff]
        %v710 = vld [vmem:[#allocation4 + $0x48] sm:$0xff]
        %v711 = vld [vmem:[#allocation4 + $0x50] sm:$0xff]
        %v712 = vld [vmem:[#allocation4 + $0x58] sm:$0xff]
        %v713 = vld [vmem:[#allocation4 + $0x60] sm:$0xff]
        %v714 = vld [vmem:[#allocation4 + $0x68] sm:$0xff]
        %v715 = vld [vmem:[#allocation4 + $0x70] sm:$0xff]
        %v716 = vld [vmem:[#allocation4 + $0x78] sm:$0xff]
        %v717 = vld [vmem:[#allocation4 + $0x80] sm:$0xff]
        %v718 = vld [vmem:[#allocation4 + $0x88] sm:$0xff]
        %v719 = vld [vmem:[#allocation4 + $0x90] sm:$0xff]
        %v720 = vld [vmem:[#allocation4 + $0x98] sm:$0xff]
        %v721 = vld [vmem:[#allocation4 + $0xa0] sm:$0xff]
        %v722 = vld [vmem:[#allocation4 + $0xa8] sm:$0xff]
        %v723 = vld [vmem:[#allocation4 + $0xb0] sm:$0xff]
        %v724 = vld [vmem:[#allocation4 + $0xb8] sm:$0xff]
        %v725 = vld [vmem:[#allocation4 + $0xc0] sm:$0xff]
        %v726 = vld [vmem:[#allocation4 + $0xc8] sm:$0xff]
        %v727 = vld [vmem:[#allocation4 + $0xd0] sm:$0xff]
        %v728 = vld [vmem:[#allocation4 + $0xd8] sm:$0xff]
        %v729 = vld [vmem:[#allocation4 + $0xe0] sm:$0xff]
        %v730 = vld [vmem:[#allocation4 + $0xe8] sm:$0xff]
        %v731 = vld [vmem:[#allocation4 + $0xf0] sm:$0xff]
        %v732 = vld [vmem:[#allocation4 + $0xf8] sm:$0xff]
        %v733 = vld [vmem:[#allocation4 + $0x100] sm:$0xff]
        %v734 = vld [vmem:[#allocation4 + $0x108] sm:$0xff]
        %v735 = vld [vmem:[#allocation4 + $0x110] sm:$0xff]
        %v736 = vld [vmem:[#allocation4 + $0x118] sm:$0xff]
        %v737 = vld [vmem:[#allocation4 + $0x120] sm:$0xff]
        %v738 = vld [vmem:[#allocation4 + $0x128] sm:$0xff]
        %v739 = vld [vmem:[#allocation4 + $0x130] sm:$0xff]
        %v740 = vld [vmem:[#allocation4 + $0x138] sm:$0xff]
        %v741 = vld [vmem:[#allocation4 + $0x140] sm:$0xff]
        %v742 = vld [vmem:[#allocation4 + $0x148] sm:$0xff]
        %v743 = vld [vmem:[#allocation4 + $0x150] sm:$0xff]
        %v744 = vld [vmem:[#allocation4 + $0x158] sm:$0xff]
        %v745 = vld [vmem:[#allocation4 + $0x160] sm:$0xff]
        %v746 = vld [vmem:[#allocation4 + $0x168] sm:$0xff]
        %v747 = vld [vmem:[#allocation4 + $0x170] sm:$0xff]
        %v748 = vld [vmem:[#allocation4 + $0x178] sm:$0xff]
        %749 = vmatprep.subr.mxu0 0.0
        %750 = vmatpush1.msra.mxu0 %v653
        %751 = vmatprep.subr.mxu0 0.0
        %752 = vmatpush1.msra.mxu0 %v654
        %753 = vmatprep.subr.mxu0 0.0
        %754 = vmatpush1.msra.mxu0 %v655
        %755 = vmatprep.subr.mxu0 0.0
        %756 = vmatpush1.msra.mxu0 %v656
        %757 = vmatprep.subr.mxu0 0.0
        %758 = vmatpush1.msra.mxu0 %v657
        %759 = vmatprep.subr.mxu0 0.0
        %760 = vmatpush1.msra.mxu0 %v658
        %761 = vmatprep.subr.mxu0 0.0
        %762 = vmatpush1.msra.mxu0 %v659
        %763 = vmatprep.subr.mxu0 0.0
        %764 = vmatpush1.msra.mxu0 %v660
        %765 = vmatprep.subr.mxu0 0.0
        %766 = vmatpush1.msra.mxu0 %v661
        %767 = vmatprep.subr.mxu0 0.0
        %768 = vmatpush1.msra.mxu0 %v662
        %769 = vmatprep.subr.mxu0 0.0
        %770 = vmatpush1.msra.mxu0 %v663
        %771 = vmatprep.subr.mxu0 0.0
        %772 = vmatpush1.msra.mxu0 %v664
        %773 = vmatprep.subr.mxu0 0.0
        %774 = vmatpush1.msra.mxu0 %v665
        %775 = vmatprep.subr.mxu0 0.0
        %776 = vmatpush1.msra.mxu0 %v666
        %777 = vmatprep.subr.mxu0 0.0
        %778 = vmatpush1.msra.mxu0 %v667
        %779 = vmatprep.subr.mxu0 0.0
        %780 = vmatpush1.msra.mxu0 %v668
        %781 = vmatprep.subr.mxu0 0.0
        %782 = vmatpush1.msra.mxu0 %v669
        %783 = vmatprep.subr.mxu0 0.0
        %784 = vmatpush1.msra.mxu0 %v670
        %785 = vmatprep.subr.mxu0 0.0
        %786 = vmatpush1.msra.mxu0 %v671
        %787 = vmatprep.subr.mxu0 0.0
        %788 = vmatpush1.msra.mxu0 %v672
        %789 = vmatprep.subr.mxu0 0.0
        %790 = vmatpush1.msra.mxu0 %v673
        %791 = vmatprep.subr.mxu0 0.0
        %792 = vmatpush1.msra.mxu0 %v674
        %793 = vmatprep.subr.mxu0 0.0
        %794 = vmatpush1.msra.mxu0 %v675
        %795 = vmatprep.subr.mxu0 0.0
        %796 = vmatpush1.msra.mxu0 %v676
        %797 = vmatprep.subr.mxu0 0.0
        %798 = vmatpush1.msra.mxu0 %v677
        %799 = vmatprep.subr.mxu0 0.0
        %800 = vmatpush1.msra.mxu0 %v678
        %801 = vmatprep.subr.mxu0 0.0
        %802 = vmatpush1.msra.mxu0 %v679
        %803 = vmatprep.subr.mxu0 0.0
        %804 = vmatpush1.msra.mxu0 %v680
        %805 = vmatprep.subr.mxu0 0.0
        %806 = vmatpush1.msra.mxu0 %v681
        %807 = vmatprep.subr.mxu0 0.0
        %808 = vmatpush1.msra.mxu0 %v682
        %809 = vmatprep.subr.mxu0 0.0
        %810 = vmatpush1.msra.mxu0 %v683
        %811 = vmatprep.subr.mxu0 0.0
        %812 = vmatpush1.msra.mxu0 %v684
        %813 = vmatprep.mubr.f32.mxu0 %v509
        %814 = vmatmul.mubr.f32.gmra.mrb[0].mxu0 %v508
        %v815 = vpop.f32.mrb[0].mxu0
        %v816 = vadd.f32 0.0, %v815
        %v817 = vpop.f32.mrb[0].mxu0
        %818 = vmatprep.mubr.f32.mxu0 %v512
        %819 = vmatmul.mubr.f32.gmra.mrb[0].mxu0 %v511
        %v820 = vpop.f32.mrb[0].mxu0
        %v821 = vadd.f32 0.0, %v820
        %v822 = vpop.f32.mrb[0].mxu0
        %823 = vmatprep.mubr.f32.mxu0 %v515
        %824 = vmatmul.mubr.f32.gmra.mrb[0].mxu0 %v514
        %v825 = vpop.f32.mrb[0].mxu0
        %v826 = vadd.f32 0.0, %v825
        %v827 = vpop.f32.mrb[0].mxu0
        %828 = vmatprep.mubr.f32.mxu0 %v518
        %829 = vmatmul.mubr.f32.gmra.mrb[0].mxu0 %v517
        %v830 = vpop.f32.mrb[0].mxu0
        %v831 = vadd.f32 0.0, %v830
        %v832 = vpop.f32.mrb[0].mxu0
        %833 = vmatprep.mubr.f32.mxu0 %v521
        %834 = vmatmul.mubr.f32.gmra.mrb[0].mxu0 %v520
        %v835 = vpop.f32.mrb[0].mxu0
        %v836 = vadd.f32 0.0, %v835
        %v837 = vpop.f32.mrb[0].mxu0
        %838 = vmatprep.mubr.f32.mxu0 %v524
        %839 = vmatmul.mubr.f32.gmra.mrb[0].mxu0 %v523
        %v840 = vpop.f32.mrb[0].mxu0
        %v841 = vadd.f32 0.0, %v840
        %v842 = vpop.f32.mrb[0].mxu0
        %843 = vmatprep.mubr.f32.mxu0 %v527
        %844 = vmatmul.mubr.f32.gmra.mrb[0].mxu0 %v526
        %v845 = vpop.f32.mrb[0].mxu0
        %v846 = vadd.f32 0.0, %v845
        %v847 = vpop.f32.mrb[0].mxu0
        %848 = vmatprep.mubr.f32.mxu0 %v530
        %849 = vmatmul.mubr.f32.gmra.mrb[0].mxu0 %v529
        %v850 = vpop.f32.mrb[0].mxu0
        %v851 = vadd.f32 0.0, %v850
        %v852 = vpop.f32.mrb[0].mxu0
        %853 = vmatprep.mubr.f32.mxu0 %v533
        %854 = vmatmul.mubr.f32.gmra.mrb[0].mxu0 %v532
        %v855 = vpop.f32.mrb[0].mxu0
        %v856 = vadd.f32 0.0, %v855
        %v857 = vpop.f32.mrb[0].mxu0
        %858 = vmatprep.mubr.f32.mxu0 %v536
        %859 = vmatmul.mubr.f32.gmra.mrb[0].mxu0 %v535
        %v860 = vpop.f32.mrb[0].mxu0
        %v861 = vadd.f32 0.0, %v860
        %v862 = vpop.f32.mrb[0].mxu0
        %863 = vmatprep.mubr.f32.mxu0 %v539
        %864 = vmatmul.mubr.f32.gmra.mrb[0].mxu0 %v538
        %v865 = vpop.f32.mrb[0].mxu0
        %v866 = vadd.f32 0.0, %v865
        %v867 = vpop.f32.mrb[0].mxu0
        %868 = vmatprep.mubr.f32.mxu0 %v542
        %869 = vmatmul.mubr.f32.gmra.mrb[0].mxu0 %v541
        %v870 = vpop.f32.mrb[0].mxu0
        %v871 = vadd.f32 0.0, %v870
        %v872 = vpop.f32.mrb[0].mxu0
        %873 = vmatprep.mubr.f32.mxu0 %v545
        %874 = vmatmul.mubr.f32.gmra.mrb[0].mxu0 %v544
        %v875 = vpop.f32.mrb[0].mxu0
        %v876 = vadd.f32 0.0, %v875
        %v877 = vpop.f32.mrb[0].mxu0
        %878 = vmatprep.mubr.f32.mxu0 %v548
        %879 = vmatmul.mubr.f32.gmra.mrb[0].mxu0 %v547
        %v880 = vpop.f32.mrb[0].mxu0
        %v881 = vadd.f32 0.0, %v880
        %v882 = vpop.f32.mrb[0].mxu0
        %883 = vmatprep.mubr.f32.mxu0 %v551
        %884 = vmatmul.mubr.f32.gmra.mrb[0].mxu0 %v550
        %v885 = vpop.f32.mrb[0].mxu0
        %v886 = vadd.f32 0.0, %v885
        %v887 = vpop.f32.mrb[0].mxu0
        %888 = vmatprep.mubr.f32.mxu0 %v554
        %889 = vmatmul.mubr.f32.gmra.mrb[0].mxu0 %v553
        %v890 = vpop.f32.mrb[0].mxu0
        %v891 = vadd.f32 0.0, %v890
        %v892 = vpop.f32.mrb[0].mxu0
        %893 = vmatprep.mubr.f32.mxu0 %v557
        %894 = vmatmul.mubr.f32.gmra.mrb[0].mxu0 %v556
        %v895 = vpop.f32.mrb[0].mxu0
        %v896 = vadd.f32 0.0, %v895
        %v897 = vpop.f32.mrb[0].mxu0
        %898 = vmatprep.mubr.f32.mxu0 %v560
        %899 = vmatmul.mubr.f32.gmra.mrb[0].mxu0 %v559
        %v900 = vpop.f32.mrb[0].mxu0
        %v901 = vadd.f32 0.0, %v900
        %v902 = vpop.f32.mrb[0].mxu0
        %903 = vmatprep.mubr.f32.mxu0 %v563
        %904 = vmatmul.mubr.f32.gmra.mrb[0].mxu0 %v562
        %v905 = vpop.f32.mrb[0].mxu0
        %v906 = vadd.f32 0.0, %v905
        %v907 = vpop.f32.mrb[0].mxu0
        %908 = vmatprep.mubr.f32.mxu0 %v566
        %909 = vmatmul.mubr.f32.gmra.mrb[0].mxu0 %v565
        %v910 = vpop.f32.mrb[0].mxu0
        %v911 = vadd.f32 0.0, %v910
        %v912 = vpop.f32.mrb[0].mxu0
        %913 = vmatprep.mubr.f32.mxu0 %v569
        %914 = vmatmul.mubr.f32.gmra.mrb[0].mxu0 %v568
        %v915 = vpop.f32.mrb[0].mxu0
        %v916 = vadd.f32 0.0, %v915
        %v917 = vpop.f32.mrb[0].mxu0
        %918 = vmatprep.mubr.f32.mxu0 %v572
        %919 = vmatmul.mubr.f32.gmra.mrb[0].mxu0 %v571
        %v920 = vpop.f32.mrb[0].mxu0
        %v921 = vadd.f32 0.0, %v920
        %v922 = vpop.f32.mrb[0].mxu0
        %923 = vmatprep.mubr.f32.mxu0 %v575
        %924 = vmatmul.mubr.f32.gmra.mrb[0].mxu0 %v574
        %v925 = vpop.f32.mrb[0].mxu0
        %v926 = vadd.f32 0.0, %v925
        %v927 = vpop.f32.mrb[0].mxu0
        %928 = vmatprep.mubr.f32.mxu0 %v578
        %929 = vmatmul.mubr.f32.gmra.mrb[0].mxu0 %v577
        %v930 = vpop.f32.mrb[0].mxu0
        %v931 = vadd.f32 0.0, %v930
        %v932 = vpop.f32.mrb[0].mxu0
        %933 = vmatprep.mubr.f32.mxu0 %v581
        %934 = vmatmul.mubr.f32.gmra.mrb[0].mxu0 %v580
        %v935 = vpop.f32.mrb[0].mxu0
        %v936 = vadd.f32 0.0, %v935
        %v937 = vpop.f32.mrb[0].mxu0
        %938 = vmatprep.mubr.f32.mxu0 %v584
        %939 = vmatmul.mubr.f32.gmra.mrb[0].mxu0 %v583
        %v940 = vpop.f32.mrb[0].mxu0
        %v941 = vadd.f32 0.0, %v940
        %v942 = vpop.f32.mrb[0].mxu0
        %943 = vmatprep.mubr.f32.mxu0 %v587
        %944 = vmatmul.mubr.f32.gmra.mrb[0].mxu0 %v586
        %v945 = vpop.f32.mrb[0].mxu0
        %v946 = vadd.f32 0.0, %v945
        %v947 = vpop.f32.mrb[0].mxu0
        %948 = vmatprep.mubr.f32.mxu0 %v590
        %949 = vmatmul.mubr.f32.gmra.mrb[0].mxu0 %v589
        %v950 = vpop.f32.mrb[0].mxu0
        %v951 = vadd.f32 0.0, %v950
        %v952 = vpop.f32.mrb[0].mxu0
        %953 = vmatprep.mubr.f32.mxu0 %v593
        %954 = vmatmul.mubr.f32.gmra.mrb[0].mxu0 %v592
        %v955 = vpop.f32.mrb[0].mxu0
        %v956 = vadd.f32 0.0, %v955
        %v957 = vpop.f32.mrb[0].mxu0
        %958 = vmatprep.mubr.f32.mxu0 %v596
        %959 = vmatmul.mubr.f32.gmra.mrb[0].mxu0 %v595
        %v960 = vpop.f32.mrb[0].mxu0
        %v961 = vadd.f32 0.0, %v960
        %v962 = vpop.f32.mrb[0].mxu0
        %963 = vmatprep.mubr.f32.mxu0 %v599
        %964 = vmatmul.mubr.f32.gmra.mrb[0].mxu0 %v598
        %v965 = vpop.f32.mrb[0].mxu0
        %v966 = vadd.f32 0.0, %v965
        %v967 = vpop.f32.mrb[0].mxu0
        %968 = vmatprep.mubr.f32.mxu0 %v602
        %969 = vmatmul.mubr.f32.gmra.mrb[0].mxu0 %v601
        %v970 = vpop.f32.mrb[0].mxu0
        %v971 = vadd.f32 0.0, %v970
        %v972 = vpop.f32.mrb[0].mxu0
        %973 = vmatprep.mubr.f32.mxu0 %v605
        %974 = vmatmul.mubr.f32.gmra.mrb[0].mxu0 %v604
        %v975 = vpop.f32.mrb[0].mxu0
        %v976 = vadd.f32 0.0, %v975
        %v977 = vpop.f32.mrb[0].mxu0
        %978 = vmatprep.mubr.f32.mxu0 %v608
        %979 = vmatmul.mubr.f32.gmra.mrb[0].mxu0 %v607
        %v980 = vpop.f32.mrb[0].mxu0
        %v981 = vadd.f32 0.0, %v980
        %v982 = vpop.f32.mrb[0].mxu0
        %983 = vmatprep.mubr.f32.mxu0 %v611
        %984 = vmatmul.mubr.f32.gmra.mrb[0].mxu0 %v610
        %v985 = vpop.f32.mrb[0].mxu0
        %v986 = vadd.f32 0.0, %v985
        %v987 = vpop.f32.mrb[0].mxu0
        %988 = vmatprep.mubr.f32.mxu0 %v614
        %989 = vmatmul.mubr.f32.gmra.mrb[0].mxu0 %v613
        %v990 = vpop.f32.mrb[0].mxu0
        %v991 = vadd.f32 0.0, %v990
        %v992 = vpop.f32.mrb[0].mxu0
        %993 = vmatprep.mubr.f32.mxu0 %v617
        %994 = vmatmul.mubr.f32.gmra.mrb[0].mxu0 %v616
        %v995 = vpop.f32.mrb[0].mxu0
        %v996 = vadd.f32 0.0, %v995
        %v997 = vpop.f32.mrb[0].mxu0
        %998 = vmatprep.mubr.f32.mxu0 %v620
        %999 = vmatmul.mubr.f32.gmra.mrb[0].mxu0 %v619
        %v1000 = vpop.f32.mrb[0].mxu0
        %v1001 = vadd.f32 0.0, %v1000
        %v1002 = vpop.f32.mrb[0].mxu0
        %1003 = vmatprep.mubr.f32.mxu0 %v623
        %1004 = vmatmul.mubr.f32.gmra.mrb[0].mxu0 %v622
        %v1005 = vpop.f32.mrb[0].mxu0
        %v1006 = vadd.f32 0.0, %v1005
        %v1007 = vpop.f32.mrb[0].mxu0
        %1008 = vmatprep.mubr.f32.mxu0 %v626
        %1009 = vmatmul.mubr.f32.gmra.mrb[0].mxu0 %v625
        %v1010 = vpop.f32.mrb[0].mxu0
        %v1011 = vadd.f32 0.0, %v1010
        %v1012 = vpop.f32.mrb[0].mxu0
        %1013 = vmatprep.mubr.f32.mxu0 %v629
        %1014 = vmatmul.mubr.f32.gmra.mrb[0].mxu0 %v628
        %v1015 = vpop.f32.mrb[0].mxu0
        %v1016 = vadd.f32 0.0, %v1015
        %v1017 = vpop.f32.mrb[0].mxu0
        %1018 = vmatprep.mubr.f32.mxu0 %v632
        %1019 = vmatmul.mubr.f32.gmra.mrb[0].mxu0 %v631
        %v1020 = vpop.f32.mrb[0].mxu0
        %v1021 = vadd.f32 0.0, %v1020
        %v1022 = vpop.f32.mrb[0].mxu0
        %1023 = vmatprep.mubr.f32.mxu0 %v635
        %1024 = vmatmul.mubr.f32.gmra.mrb[0].mxu0 %v634
        %v1025 = vpop.f32.mrb[0].mxu0
        %v1026 = vadd.f32 0.0, %v1025
        %v1027 = vpop.f32.mrb[0].mxu0
        %1028 = vmatprep.mubr.f32.mxu0 %v638
        %1029 = vmatmul.mubr.f32.gmra.mrb[0].mxu0 %v637
        %v1030 = vpop.f32.mrb[0].mxu0
        %v1031 = vadd.f32 0.0, %v1030
        %v1032 = vpop.f32.mrb[0].mxu0
        %1033 = vmatprep.mubr.f32.mxu0 %v641
        %1034 = vmatmul.mubr.f32.gmra.mrb[0].mxu0 %v640
        %v1035 = vpop.f32.mrb[0].mxu0
        %v1036 = vadd.f32 0.0, %v1035
        %v1037 = vpop.f32.mrb[0].mxu0
        %1038 = vmatprep.mubr.f32.mxu0 %v644
        %1039 = vmatmul.mubr.f32.gmra.mrb[0].mxu0 %v643
        %v1040 = vpop.f32.mrb[0].mxu0
        %v1041 = vadd.f32 0.0, %v1040
        %v1042 = vpop.f32.mrb[0].mxu0
        %1043 = vmatprep.mubr.f32.mxu0 %v647
        %1044 = vmatmul.mubr.f32.gmra.mrb[0].mxu0 %v646
        %v1045 = vpop.f32.mrb[0].mxu0
        %v1046 = vadd.f32 0.0, %v1045
        %v1047 = vpop.f32.mrb[0].mxu0
        %1048 = vmatprep.mubr.f32.mxu0 %v650
        %1049 = vmatmul.mubr.f32.gmra.mrb[0].mxu0 %v649
        %v1050 = vpop.f32.mrb[0].mxu0
        %v1051 = vadd.f32 0.0, %v1050
        %v1052 = vpop.f32.mrb[0].mxu0
        %1053 = vdwg.mxu0
        %1054 = vmatprep.subr.mxu0 0.0
        %1055 = vmatpush1.msra.mxu0 %v685
        %1056 = vmatprep.subr.mxu0 0.0
        %1057 = vmatpush1.msra.mxu0 %v686
        %1058 = vmatprep.subr.mxu0 0.0
        %1059 = vmatpush1.msra.mxu0 %v687
        %1060 = vmatprep.subr.mxu0 0.0
        %1061 = vmatpush1.msra.mxu0 %v688
        %1062 = vmatprep.subr.mxu0 0.0
        %1063 = vmatpush1.msra.mxu0 %v689
        %1064 = vmatprep.subr.mxu0 0.0
        %1065 = vmatpush1.msra.mxu0 %v690
        %1066 = vmatprep.subr.mxu0 0.0
        %1067 = vmatpush1.msra.mxu0 %v691
        %1068 = vmatprep.subr.mxu0 0.0
        %1069 = vmatpush1.msra.mxu0 %v692
        %1070 = vmatprep.subr.mxu0 0.0
        %1071 = vmatpush1.msra.mxu0 %v693
        %1072 = vmatprep.subr.mxu0 0.0
        %1073 = vmatpush1.msra.mxu0 %v694
        %1074 = vmatprep.subr.mxu0 0.0
        %1075 = vmatpush1.msra.mxu0 %v695
        %1076 = vmatprep.subr.mxu0 0.0
        %1077 = vmatpush1.msra.mxu0 %v696
        %1078 = vmatprep.subr.mxu0 0.0
        %1079 = vmatpush1.msra.mxu0 %v697
        %1080 = vmatprep.subr.mxu0 0.0
        %1081 = vmatpush1.msra.mxu0 %v698
        %1082 = vmatprep.subr.mxu0 0.0
        %1083 = vmatpush1.msra.mxu0 %v699
        %1084 = vmatprep.subr.mxu0 0.0
        %1085 = vmatpush1.msra.mxu0 %v700
        %1086 = vmatprep.subr.mxu0 0.0
        %1087 = vmatpush1.msra.mxu0 0.0
        %1088 = vmatprep.subr.mxu0 0.0
        %1089 = vmatpush1.msra.mxu0 0.0
        %1090 = vmatprep.subr.mxu0 0.0
        %1091 = vmatpush1.msra.mxu0 0.0
        %1092 = vmatprep.subr.mxu0 0.0
        %1093 = vmatpush1.msra.mxu0 0.0
        %1094 = vmatprep.subr.mxu0 0.0
        %1095 = vmatpush1.msra.mxu0 0.0
        %1096 = vmatprep.subr.mxu0 0.0
        %1097 = vmatpush1.msra.mxu0 0.0
        %1098 = vmatprep.subr.mxu0 0.0
        %1099 = vmatpush1.msra.mxu0 0.0
        %1100 = vmatprep.subr.mxu0 0.0
        %1101 = vmatpush1.msra.mxu0 0.0
        %1102 = vmatprep.subr.mxu0 0.0
        %1103 = vmatpush1.msra.mxu0 0.0
        %1104 = vmatprep.subr.mxu0 0.0
        %1105 = vmatpush1.msra.mxu0 0.0
        %1106 = vmatprep.subr.mxu0 0.0
        %1107 = vmatpush1.msra.mxu0 0.0
        %1108 = vmatprep.subr.mxu0 0.0
        %1109 = vmatpush1.msra.mxu0 0.0
        %1110 = vmatprep.subr.mxu0 0.0
        %1111 = vmatpush1.msra.mxu0 0.0
        %1112 = vmatprep.subr.mxu0 0.0
        %1113 = vmatpush1.msra.mxu0 0.0
        %1114 = vmatprep.subr.mxu0 0.0
        %1115 = vmatpush1.msra.mxu0 0.0
        %1116 = vmatprep.subr.mxu0 0.0
        %1117 = vmatpush1.msra.mxu0 0.0
        %1118 = vmatprep.mubr.f32.mxu0 0.0
        %1119 = vmatmul.mubr.f32.gmra.mrb[0].mxu0 %v510
        %v1120 = vpop.f32.mrb[0].mxu0
        %v1121 = vadd.f32 %v816, %v1120
        %v1122 = vpop.f32.mrb[0].mxu0
        %1123 = vmatprep.mubr.f32.mxu0 0.0
        %1124 = vmatmul.mubr.f32.gmra.mrb[0].mxu0 %v513
        %v1125 = vpop.f32.mrb[0].mxu0
        %v1126 = vadd.f32 %v821, %v1125
        %v1127 = vpop.f32.mrb[0].mxu0
        %1128 = vmatprep.mubr.f32.mxu0 0.0
        %1129 = vmatmul.mubr.f32.gmra.mrb[0].mxu0 %v516
        %v1130 = vpop.f32.mrb[0].mxu0
        %v1131 = vadd.f32 %v826, %v1130
        %v1132 = vpop.f32.mrb[0].mxu0
        %1133 = vmatprep.mubr.f32.mxu0 0.0
        %1134 = vmatmul.mubr.f32.gmra.mrb[0].mxu0 %v519
        %v1135 = vpop.f32.mrb[0].mxu0
        %v1136 = vadd.f32 %v831, %v1135
        %v1137 = vpop.f32.mrb[0].mxu0
        %1138 = vmatprep.mubr.f32.mxu0 0.0
        %1139 = vmatmul.mubr.f32.gmra.mrb[0].mxu0 %v522
        %v1140 = vpop.f32.mrb[0].mxu0
        %v1141 = vadd.f32 %v836, %v1140
        %v1142 = vpop.f32.mrb[0].mxu0
        %1143 = vmatprep.mubr.f32.mxu0 0.0
        %1144 = vmatmul.mubr.f32.gmra.mrb[0].mxu0 %v525
        %v1145 = vpop.f32.mrb[0].mxu0
        %v1146 = vadd.f32 %v841, %v1145
        %v1147 = vpop.f32.mrb[0].mxu0
        %1148 = vmatprep.mubr.f32.mxu0 0.0
        %1149 = vmatmul.mubr.f32.gmra.mrb[0].mxu0 %v528
        %v1150 = vpop.f32.mrb[0].mxu0
        %v1151 = vadd.f32 %v846, %v1150
        %v1152 = vpop.f32.mrb[0].mxu0
        %1153 = vmatprep.mubr.f32.mxu0 0.0
        %1154 = vmatmul.mubr.f32.gmra.mrb[0].mxu0 %v531
        %v1155 = vpop.f32.mrb[0].mxu0
        %v1156 = vadd.f32 %v851, %v1155
        %v1157 = vpop.f32.mrb[0].mxu0
        %1158 = vmatprep.mubr.f32.mxu0 0.0
        %1159 = vmatmul.mubr.f32.gmra.mrb[0].mxu0 %v534
        %v1160 = vpop.f32.mrb[0].mxu0
        %v1161 = vadd.f32 %v856, %v1160
        %v1162 = vpop.f32.mrb[0].mxu0
        %1163 = vmatprep.mubr.f32.mxu0 0.0
        %1164 = vmatmul.mubr.f32.gmra.mrb[0].mxu0 %v537
        %v1165 = vpop.f32.mrb[0].mxu0
        %v1166 = vadd.f32 %v861, %v1165
        %v1167 = vpop.f32.mrb[0].mxu0
        %1168 = vmatprep.mubr.f32.mxu0 0.0
        %1169 = vmatmul.mubr.f32.gmra.mrb[0].mxu0 %v540
        %v1170 = vpop.f32.mrb[0].mxu0
        %v1171 = vadd.f32 %v866, %v1170
        %v1172 = vpop.f32.mrb[0].mxu0
        %1173 = vmatprep.mubr.f32.mxu0 0.0
        %1174 = vmatmul.mubr.f32.gmra.mrb[0].mxu0 %v543
        %v1175 = vpop.f32.mrb[0].mxu0
        %v1176 = vadd.f32 %v871, %v1175
        %v1177 = vpop.f32.mrb[0].mxu0
        %1178 = vmatprep.mubr.f32.mxu0 0.0
        %1179 = vmatmul.mubr.f32.gmra.mrb[0].mxu0 %v546
        %v1180 = vpop.f32.mrb[0].mxu0
        %v1181 = vadd.f32 %v876, %v1180
        %v1182 = vpop.f32.mrb[0].mxu0
        %1183 = vmatprep.mubr.f32.mxu0 0.0
        %1184 = vmatmul.mubr.f32.gmra.mrb[0].mxu0 %v549
        %v1185 = vpop.f32.mrb[0].mxu0
        %v1186 = vadd.f32 %v881, %v1185
        %v1187 = vpop.f32.mrb[0].mxu0
        %1188 = vmatprep.mubr.f32.mxu0 0.0
        %1189 = vmatmul.mubr.f32.gmra.mrb[0].mxu0 %v552
        %v1190 = vpop.f32.mrb[0].mxu0
        %v1191 = vadd.f32 %v886, %v1190
        %v1192 = vpop.f32.mrb[0].mxu0
        %1193 = vmatprep.mubr.f32.mxu0 0.0
        %1194 = vmatmul.mubr.f32.gmra.mrb[0].mxu0 %v555
        %v1195 = vpop.f32.mrb[0].mxu0
        %v1196 = vadd.f32 %v891, %v1195
        %v1197 = vpop.f32.mrb[0].mxu0
        %1198 = vmatprep.mubr.f32.mxu0 0.0
        %1199 = vmatmul.mubr.f32.gmra.mrb[0].mxu0 %v558
        %v1200 = vpop.f32.mrb[0].mxu0
        %v1201 = vadd.f32 %v896, %v1200
        %v1202 = vpop.f32.mrb[0].mxu0
        %1203 = vmatprep.mubr.f32.mxu0 0.0
        %1204 = vmatmul.mubr.f32.gmra.mrb[0].mxu0 %v561
        %v1205 = vpop.f32.mrb[0].mxu0
        %v1206 = vadd.f32 %v901, %v1205
        %v1207 = vpop.f32.mrb[0].mxu0
        %1208 = vmatprep.mubr.f32.mxu0 0.0
        %1209 = vmatmul.mubr.f32.gmra.mrb[0].mxu0 %v564
        %v1210 = vpop.f32.mrb[0].mxu0
        %v1211 = vadd.f32 %v906, %v1210
        %v1212 = vpop.f32.mrb[0].mxu0
        %1213 = vmatprep.mubr.f32.mxu0 0.0
        %1214 = vmatmul.mubr.f32.gmra.mrb[0].mxu0 %v567
        %v1215 = vpop.f32.mrb[0].mxu0
        %v1216 = vadd.f32 %v911, %v1215
        %v1217 = vpop.f32.mrb[0].mxu0
        %1218 = vmatprep.mubr.f32.mxu0 0.0
        %1219 = vmatmul.mubr.f32.gmra.mrb[0].mxu0 %v570
        %v1220 = vpop.f32.mrb[0].mxu0
        %v1221 = vadd.f32 %v916, %v1220
        %v1222 = vpop.f32.mrb[0].mxu0
        %1223 = vmatprep.mubr.f32.mxu0 0.0
        %1224 = vmatmul.mubr.f32.gmra.mrb[0].mxu0 %v573
        %v1225 = vpop.f32.mrb[0].mxu0
        %v1226 = vadd.f32 %v921, %v1225
        %v1227 = vpop.f32.mrb[0].mxu0
        %1228 = vmatprep.mubr.f32.mxu0 0.0
        %1229 = vmatmul.mubr.f32.gmra.mrb[0].mxu0 %v576
        %v1230 = vpop.f32.mrb[0].mxu0
        %v1231 = vadd.f32 %v926, %v1230
        %v1232 = vpop.f32.mrb[0].mxu0
        %1233 = vmatprep.mubr.f32.mxu0 0.0
        %1234 = vmatmul.mubr.f32.gmra.mrb[0].mxu0 %v579
        %v1235 = vpop.f32.mrb[0].mxu0
        %v1236 = vadd.f32 %v931, %v1235
        %v1237 = vpop.f32.mrb[0].mxu0
        %1238 = vmatprep.mubr.f32.mxu0 0.0
        %1239 = vmatmul.mubr.f32.gmra.mrb[0].mxu0 %v582
        %v1240 = vpop.f32.mrb[0].mxu0
        %v1241 = vadd.f32 %v936, %v1240
        %v1242 = vpop.f32.mrb[0].mxu0
        %1243 = vmatprep.mubr.f32.mxu0 0.0
        %1244 = vmatmul.mubr.f32.gmra.mrb[0].mxu0 %v585
        %v1245 = vpop.f32.mrb[0].mxu0
        %v1246 = vadd.f32 %v941, %v1245
        %v1247 = vpop.f32.mrb[0].mxu0
        %1248 = vmatprep.mubr.f32.mxu0 0.0
        %1249 = vmatmul.mubr.f32.gmra.mrb[0].mxu0 %v588
        %v1250 = vpop.f32.mrb[0].mxu0
        %v1251 = vadd.f32 %v946, %v1250
        %v1252 = vpop.f32.mrb[0].mxu0
        %1253 = vmatprep.mubr.f32.mxu0 0.0
        %1254 = vmatmul.mubr.f32.gmra.mrb[0].mxu0 %v591
        %v1255 = vpop.f32.mrb[0].mxu0
        %v1256 = vadd.f32 %v951, %v1255
        %v1257 = vpop.f32.mrb[0].mxu0
        %1258 = vmatprep.mubr.f32.mxu0 0.0
        %1259 = vmatmul.mubr.f32.gmra.mrb[0].mxu0 %v594
        %v1260 = vpop.f32.mrb[0].mxu0
        %v1261 = vadd.f32 %v956, %v1260
        %v1262 = vpop.f32.mrb[0].mxu0
        %1263 = vmatprep.mubr.f32.mxu0 0.0
        %1264 = vmatmul.mubr.f32.gmra.mrb[0].mxu0 %v597
        %v1265 = vpop.f32.mrb[0].mxu0
        %v1266 = vadd.f32 %v961, %v1265
        %v1267 = vpop.f32.mrb[0].mxu0
        %1268 = vmatprep.mubr.f32.mxu0 0.0
        %1269 = vmatmul.mubr.f32.gmra.mrb[0].mxu0 %v600
        %v1270 = vpop.f32.mrb[0].mxu0
        %v1271 = vadd.f32 %v966, %v1270
        %v1272 = vpop.f32.mrb[0].mxu0
        %1273 = vmatprep.mubr.f32.mxu0 0.0
        %1274 = vmatmul.mubr.f32.gmra.mrb[0].mxu0 %v603
        %v1275 = vpop.f32.mrb[0].mxu0
        %v1276 = vadd.f32 %v971, %v1275
        %v1277 = vpop.f32.mrb[0].mxu0
        %1278 = vmatprep.mubr.f32.mxu0 0.0
        %1279 = vmatmul.mubr.f32.gmra.mrb[0].mxu0 %v606
        %v1280 = vpop.f32.mrb[0].mxu0
        %v1281 = vadd.f32 %v976, %v1280
        %v1282 = vpop.f32.mrb[0].mxu0
        %1283 = vmatprep.mubr.f32.mxu0 0.0
        %1284 = vmatmul.mubr.f32.gmra.mrb[0].mxu0 %v609
        %v1285 = vpop.f32.mrb[0].mxu0
        %v1286 = vadd.f32 %v981, %v1285
        %v1287 = vpop.f32.mrb[0].mxu0
        %1288 = vmatprep.mubr.f32.mxu0 0.0
        %1289 = vmatmul.mubr.f32.gmra.mrb[0].mxu0 %v612
        %v1290 = vpop.f32.mrb[0].mxu0
        %v1291 = vadd.f32 %v986, %v1290
        %v1292 = vpop.f32.mrb[0].mxu0
        %1293 = vmatprep.mubr.f32.mxu0 0.0
        %1294 = vmatmul.mubr.f32.gmra.mrb[0].mxu0 %v615
        %v1295 = vpop.f32.mrb[0].mxu0
        %v1296 = vadd.f32 %v991, %v1295
        %v1297 = vpop.f32.mrb[0].mxu0
        %1298 = vmatprep.mubr.f32.mxu0 0.0
        %1299 = vmatmul.mubr.f32.gmra.mrb[0].mxu0 %v618
        %v1300 = vpop.f32.mrb[0].mxu0
        %v1301 = vadd.f32 %v996, %v1300
        %v1302 = vpop.f32.mrb[0].mxu0
        %1303 = vmatprep.mubr.f32.mxu0 0.0
        %1304 = vmatmul.mubr.f32.gmra.mrb[0].mxu0 %v621
        %v1305 = vpop.f32.mrb[0].mxu0
        %v1306 = vadd.f32 %v1001, %v1305
        %v1307 = vpop.f32.mrb[0].mxu0
        %1308 = vmatprep.mubr.f32.mxu0 0.0
        %1309 = vmatmul.mubr.f32.gmra.mrb[0].mxu0 %v624
        %v1310 = vpop.f32.mrb[0].mxu0
        %v1311 = vadd.f32 %v1006, %v1310
        %v1312 = vpop.f32.mrb[0].mxu0
        %1313 = vmatprep.mubr.f32.mxu0 0.0
        %1314 = vmatmul.mubr.f32.gmra.mrb[0].mxu0 %v627
        %v1315 = vpop.f32.mrb[0].mxu0
        %v1316 = vadd.f32 %v1011, %v1315
        %v1317 = vpop.f32.mrb[0].mxu0
        %1318 = vmatprep.mubr.f32.mxu0 0.0
        %1319 = vmatmul.mubr.f32.gmra.mrb[0].mxu0 %v630
        %v1320 = vpop.f32.mrb[0].mxu0
        %v1321 = vadd.f32 %v1016, %v1320
        %v1322 = vpop.f32.mrb[0].mxu0
        %1323 = vmatprep.mubr.f32.mxu0 0.0
        %1324 = vmatmul.mubr.f32.gmra.mrb[0].mxu0 %v633
        %v1325 = vpop.f32.mrb[0].mxu0
        %v1326 = vadd.f32 %v1021, %v1325
        %v1327 = vpop.f32.mrb[0].mxu0
        %1328 = vmatprep.mubr.f32.mxu0 0.0
        %1329 = vmatmul.mubr.f32.gmra.mrb[0].mxu0 %v636
        %v1330 = vpop.f32.mrb[0].mxu0
        %v1331 = vadd.f32 %v1026, %v1330
        %v1332 = vpop.f32.mrb[0].mxu0
        %1333 = vmatprep.mubr.f32.mxu0 0.0
        %1334 = vmatmul.mubr.f32.gmra.mrb[0].mxu0 %v639
        %v1335 = vpop.f32.mrb[0].mxu0
        %v1336 = vadd.f32 %v1031, %v1335
        %v1337 = vpop.f32.mrb[0].mxu0
        %1338 = vmatprep.mubr.f32.mxu0 0.0
        %1339 = vmatmul.mubr.f32.gmra.mrb[0].mxu0 %v642
        %v1340 = vpop.f32.mrb[0].mxu0
        %v1341 = vadd.f32 %v1036, %v1340
        %v1342 = vpop.f32.mrb[0].mxu0
        %1343 = vmatprep.mubr.f32.mxu0 0.0
        %1344 = vmatmul.mubr.f32.gmra.mrb[0].mxu0 %v645
        %v1345 = vpop.f32.mrb[0].mxu0
        %v1346 = vadd.f32 %v1041, %v1345
        %v1347 = vpop.f32.mrb[0].mxu0
        %1348 = vmatprep.mubr.f32.mxu0 0.0
        %1349 = vmatmul.mubr.f32.gmra.mrb[0].mxu0 %v648
        %v1350 = vpop.f32.mrb[0].mxu0
        %v1351 = vadd.f32 %v1046, %v1350
        %v1352 = vpop.f32.mrb[0].mxu0
        %1353 = vmatprep.mubr.f32.mxu0 0.0
        %1354 = vmatmul.mubr.f32.gmra.mrb[0].mxu0 %v651
        %v1355 = vpop.f32.mrb[0].mxu0
        %v1356 = vadd.f32 %v1051, %v1355
        %v1357 = vpop.f32.mrb[0].mxu0
        %1358 = vdwg.mxu0
        %v1359 = vadd.f32 %v701, %v1121
        %v1360 = vadd.f32 %v702, %v1126
        %v1361 = vadd.f32 %v703, %v1131
        %v1362 = vadd.f32 %v704, %v1136
        %v1363 = vadd.f32 %v705, %v1141
        %v1364 = vadd.f32 %v706, %v1146
        %v1365 = vadd.f32 %v707, %v1151
        %v1366 = vadd.f32 %v708, %v1156
        %v1367 = vadd.f32 %v709, %v1161
        %v1368 = vadd.f32 %v710, %v1166
        %v1369 = vadd.f32 %v711, %v1171
        %v1370 = vadd.f32 %v712, %v1176
        %v1371 = vadd.f32 %v713, %v1181
        %v1372 = vadd.f32 %v714, %v1186
        %v1373 = vadd.f32 %v715, %v1191
        %v1374 = vadd.f32 %v716, %v1196
        %v1375 = vadd.f32 %v717, %v1201
        %v1376 = vadd.f32 %v718, %v1206
        %v1377 = vadd.f32 %v719, %v1211
        %v1378 = vadd.f32 %v720, %v1216
        %v1379 = vadd.f32 %v721, %v1221
        %v1380 = vadd.f32 %v722, %v1226
        %v1381 = vadd.f32 %v723, %v1231
        %v1382 = vadd.f32 %v724, %v1236
        %v1383 = vadd.f32 %v725, %v1241
        %v1384 = vadd.f32 %v726, %v1246
        %v1385 = vadd.f32 %v727, %v1251
        %v1386 = vadd.f32 %v728, %v1256
        %v1387 = vadd.f32 %v729, %v1261
        %v1388 = vadd.f32 %v730, %v1266
        %v1389 = vadd.f32 %v731, %v1271
        %v1390 = vadd.f32 %v732, %v1276
        %v1391 = vadd.f32 %v733, %v1281
        %v1392 = vadd.f32 %v734, %v1286
        %v1393 = vadd.f32 %v735, %v1291
        %v1394 = vadd.f32 %v736, %v1296
        %v1395 = vadd.f32 %v737, %v1301
        %v1396 = vadd.f32 %v738, %v1306
        %v1397 = vadd.f32 %v739, %v1311
        %v1398 = vadd.f32 %v740, %v1316
        %v1399 = vadd.f32 %v741, %v1321
        %v1400 = vadd.f32 %v742, %v1326
        %v1401 = vadd.f32 %v743, %v1331
        %v1402 = vadd.f32 %v744, %v1336
        %v1403 = vadd.f32 %v745, %v1341
        %v1404 = vadd.f32 %v746, %v1346
        %v1405 = vadd.f32 %v747, %v1351
        %v1406 = vadd.f32 %v748, %v1356
        %1407 = vst [vmem:[#allocation4] sm:$0xff] %v1359
        %1408 = vst [vmem:[#allocation4 + $0x8] sm:$0xff] %v1360
        %1409 = vst [vmem:[#allocation4 + $0x10] sm:$0xff] %v1361
        %1410 = vst [vmem:[#allocation4 + $0x18] sm:$0xff] %v1362
        %1411 = vst [vmem:[#allocation4 + $0x20] sm:$0xff] %v1363
        %1412 = vst [vmem:[#allocation4 + $0x28] sm:$0xff] %v1364
        %1413 = vst [vmem:[#allocation4 + $0x30] sm:$0xff] %v1365
        %1414 = vst [vmem:[#allocation4 + $0x38] sm:$0xff] %v1366
        %1415 = vst [vmem:[#allocation4 + $0x40] sm:$0xff] %v1367
        %1416 = vst [vmem:[#allocation4 + $0x48] sm:$0xff] %v1368
        %1417 = vst [vmem:[#allocation4 + $0x50] sm:$0xff] %v1369
        %1418 = vst [vmem:[#allocation4 + $0x58] sm:$0xff] %v1370
        %1419 = vst [vmem:[#allocation4 + $0x60] sm:$0xff] %v1371
        %1420 = vst [vmem:[#allocation4 + $0x68] sm:$0xff] %v1372
        %1421 = vst [vmem:[#allocation4 + $0x70] sm:$0xff] %v1373
        %1422 = vst [vmem:[#allocation4 + $0x78] sm:$0xff] %v1374
        %1423 = vst [vmem:[#allocation4 + $0x80] sm:$0xff] %v1375
        %1424 = vst [vmem:[#allocation4 + $0x88] sm:$0xff] %v1376
        %1425 = vst [vmem:[#allocation4 + $0x90] sm:$0xff] %v1377
        %1426 = vst [vmem:[#allocation4 + $0x98] sm:$0xff] %v1378
        %1427 = vst [vmem:[#allocation4 + $0xa0] sm:$0xff] %v1379
        %1428 = vst [vmem:[#allocation4 + $0xa8] sm:$0xff] %v1380
        %1429 = vst [vmem:[#allocation4 + $0xb0] sm:$0xff] %v1381
        %1430 = vst [vmem:[#allocation4 + $0xb8] sm:$0xff] %v1382
        %1431 = vst [vmem:[#allocation4 + $0xc0] sm:$0xff] %v1383
        %1432 = vst [vmem:[#allocation4 + $0xc8] sm:$0xff] %v1384
        %1433 = vst [vmem:[#allocation4 + $0xd0] sm:$0xff] %v1385
        %1434 = vst [vmem:[#allocation4 + $0xd8] sm:$0xff] %v1386
        %1435 = vst [vmem:[#allocation4 + $0xe0] sm:$0xff] %v1387
        %1436 = vst [vmem:[#allocation4 + $0xe8] sm:$0xff] %v1388
        %1437 = vst [vmem:[#allocation4 + $0xf0] sm:$0xff] %v1389
        %1438 = vst [vmem:[#allocation4 + $0xf8] sm:$0xff] %v1390
        %1439 = vst [vmem:[#allocation4 + $0x100] sm:$0xff] %v1391
        %1440 = vst [vmem:[#allocation4 + $0x108] sm:$0xff] %v1392
        %1441 = vst [vmem:[#allocation4 + $0x110] sm:$0xff] %v1393
        %1442 = vst [vmem:[#allocation4 + $0x118] sm:$0xff] %v1394
        %1443 = vst [vmem:[#allocation4 + $0x120] sm:$0xff] %v1395
        %1444 = vst [vmem:[#allocation4 + $0x128] sm:$0xff] %v1396
        %1445 = vst [vmem:[#allocation4 + $0x130] sm:$0xff] %v1397
        %1446 = vst [vmem:[#allocation4 + $0x138] sm:$0xff] %v1398
        %1447 = vst [vmem:[#allocation4 + $0x140] sm:$0xff] %v1399
        %1448 = vst [vmem:[#allocation4 + $0x148] sm:$0xff] %v1400
        %1449 = vst [vmem:[#allocation4 + $0x150] sm:$0xff] %v1401
        %1450 = vst [vmem:[#allocation4 + $0x158] sm:$0xff] %v1402
        %1451 = vst [vmem:[#allocation4 + $0x160] sm:$0xff] %v1403
        %1452 = vst [vmem:[#allocation4 + $0x168] sm:$0xff] %v1404
        %1453 = vst [vmem:[#allocation4 + $0x170] sm:$0xff] %v1405
        %1454 = vst [vmem:[#allocation4 + $0x178] sm:$0xff] %v1406
        // Predicated region
        $region61: #{tpu_custom_call.1} parent=35 // pred_check
          %p1455 = pneg %p456
        $region62: #{tpu_custom_call.1} parent=35 // pred_check_branch
          %1457 = sbr.rel (%p1455) target = $region64
        $region63: #{tpu_custom_call.1} parent=35 // pred_region
          %s1458 = smul.u32 %s26, 128
          %s1459 = sld [smem:[#allocation5 + %s1458]]
          %s1460 = sadd.s32 %s1458, 1
          %s1461 = sld [smem:[#allocation5 + %s1460]]
          %s1462 = sadd.s32 %s1458, 2
          %s1463 = sld [smem:[#allocation5 + %s1462]]
          %s1464 = scalar_lea.vmem [#allocation2], %s351
          %v1465 = vld [vmem:[%s1464] sm:$0xff]
          %v1466 = vld [vmem:[%s1464 + $0x8] sm:$0xff]
          %v1467 = vld [vmem:[%s1464 + $0x10] sm:$0xff]
          %v1468 = vld [vmem:[%s1464 + $0x18] sm:$0xff]
          %v1469 = vld [vmem:[%s1464 + $0x20] sm:$0xff]
          %v1470 = vld [vmem:[%s1464 + $0x28] sm:$0xff]
          %v1471 = vld [vmem:[%s1464 + $0x30] sm:$0xff]
          %v1472 = vld [vmem:[%s1464 + $0x38] sm:$0xff]
          %v1473 = vld [vmem:[%s1464 + $0x40] sm:$0xff]
          %v1474 = vld [vmem:[%s1464 + $0x48] sm:$0xff]
          %v1475 = vld [vmem:[%s1464 + $0x50] sm:$0xff]
          %v1476 = vld [vmem:[%s1464 + $0x58] sm:$0xff]
          %v1477 = vld [vmem:[%s1464 + $0x60] sm:$0xff]
          %v1478 = vld [vmem:[%s1464 + $0x68] sm:$0xff]
          %v1479 = vld [vmem:[%s1464 + $0x70] sm:$0xff]
          %v1480 = vld [vmem:[%s1464 + $0x78] sm:$0xff]
          %v1481 = vld [vmem:[%s1464 + $0x80] sm:$0xff]
          %v1482 = vld [vmem:[%s1464 + $0x88] sm:$0xff]
          %v1483 = vld [vmem:[%s1464 + $0x90] sm:$0xff]
          %v1484 = vld [vmem:[%s1464 + $0x98] sm:$0xff]
          %v1485 = vld [vmem:[%s1464 + $0xa0] sm:$0xff]
          %v1486 = vld [vmem:[%s1464 + $0xa8] sm:$0xff]
          %v1487 = vld [vmem:[%s1464 + $0xb0] sm:$0xff]
          %v1488 = vld [vmem:[%s1464 + $0xb8] sm:$0xff]
          %v1489 = vld [vmem:[%s1464 + $0xc0] sm:$0xff]
          %v1490 = vld [vmem:[%s1464 + $0xc8] sm:$0xff]
          %v1491 = vld [vmem:[%s1464 + $0xd0] sm:$0xff]
          %v1492 = vld [vmem:[%s1464 + $0xd8] sm:$0xff]
          %v1493 = vld [vmem:[%s1464 + $0xe0] sm:$0xff]
          %v1494 = vld [vmem:[%s1464 + $0xe8] sm:$0xff]
          %v1495 = vld [vmem:[%s1464 + $0xf0] sm:$0xff]
          %v1496 = vld [vmem:[%s1464 + $0xf8] sm:$0xff]
          %v1497 = vld [vmem:[%s1464 + $0x100] sm:$0xff]
          %v1498 = vld [vmem:[%s1464 + $0x108] sm:$0xff]
          %v1499 = vld [vmem:[%s1464 + $0x110] sm:$0xff]
          %v1500 = vld [vmem:[%s1464 + $0x118] sm:$0xff]
          %v1501 = vld [vmem:[%s1464 + $0x120] sm:$0xff]
          %v1502 = vld [vmem:[%s1464 + $0x128] sm:$0xff]
          %v1503 = vld [vmem:[%s1464 + $0x130] sm:$0xff]
          %v1504 = vld [vmem:[%s1464 + $0x138] sm:$0xff]
          %v1505 = vld [vmem:[%s1464 + $0x140] sm:$0xff]
          %v1506 = vld [vmem:[%s1464 + $0x148] sm:$0xff]
          %v1507 = vld [vmem:[%s1464 + $0x150] sm:$0xff]
          %v1508 = vld [vmem:[%s1464 + $0x158] sm:$0xff]
          %v1509 = vld [vmem:[%s1464 + $0x160] sm:$0xff]
          %v1510 = vld [vmem:[%s1464 + $0x168] sm:$0xff]
          %v1511 = vld [vmem:[%s1464 + $0x170] sm:$0xff]
          %v1512 = vld [vmem:[%s1464 + $0x178] sm:$0xff]
          %v1513 = vld [vmem:[#allocation4] sm:$0xff]
          %v1514 = vld [vmem:[#allocation4 + $0x8] sm:$0xff]
          %v1515 = vld [vmem:[#allocation4 + $0x10] sm:$0xff]
          %v1516 = vld [vmem:[#allocation4 + $0x18] sm:$0xff]
          %v1517 = vld [vmem:[#allocation4 + $0x20] sm:$0xff]
          %v1518 = vld [vmem:[#allocation4 + $0x28] sm:$0xff]
          %v1519 = vld [vmem:[#allocation4 + $0x30] sm:$0xff]
          %v1520 = vld [vmem:[#allocation4 + $0x38] sm:$0xff]
          %v1521 = vld [vmem:[#allocation4 + $0x40] sm:$0xff]
          %v1522 = vld [vmem:[#allocation4 + $0x48] sm:$0xff]
          %v1523 = vld [vmem:[#allocation4 + $0x50] sm:$0xff]
          %v1524 = vld [vmem:[#allocation4 + $0x58] sm:$0xff]
          %v1525 = vld [vmem:[#allocation4 + $0x60] sm:$0xff]
          %v1526 = vld [vmem:[#allocation4 + $0x68] sm:$0xff]
          %v1527 = vld [vmem:[#allocation4 + $0x70] sm:$0xff]
          %v1528 = vld [vmem:[#allocation4 + $0x78] sm:$0xff]
          %v1529 = vld [vmem:[#allocation4 + $0x80] sm:$0xff]
          %v1530 = vld [vmem:[#allocation4 + $0x88] sm:$0xff]
          %v1531 = vld [vmem:[#allocation4 + $0x90] sm:$0xff]
          %v1532 = vld [vmem:[#allocation4 + $0x98] sm:$0xff]
          %v1533 = vld [vmem:[#allocation4 + $0xa0] sm:$0xff]
          %v1534 = vld [vmem:[#allocation4 + $0xa8] sm:$0xff]
          %v1535 = vld [vmem:[#allocation4 + $0xb0] sm:$0xff]
          %v1536 = vld [vmem:[#allocation4 + $0xb8] sm:$0xff]
          %v1537 = vld [vmem:[#allocation4 + $0xc0] sm:$0xff]
          %v1538 = vld [vmem:[#allocation4 + $0xc8] sm:$0xff]
          %v1539 = vld [vmem:[#allocation4 + $0xd0] sm:$0xff]
          %v1540 = vld [vmem:[#allocation4 + $0xd8] sm:$0xff]
          %v1541 = vld [vmem:[#allocation4 + $0xe0] sm:$0xff]
          %v1542 = vld [vmem:[#allocation4 + $0xe8] sm:$0xff]
          %v1543 = vld [vmem:[#allocation4 + $0xf0] sm:$0xff]
          %v1544 = vld [vmem:[#allocation4 + $0xf8] sm:$0xff]
          %v1545 = vld [vmem:[#allocation4 + $0x100] sm:$0xff]
          %v1546 = vld [vmem:[#allocation4 + $0x108] sm:$0xff]
          %v1547 = vld [vmem:[#allocation4 + $0x110] sm:$0xff]
          %v1548 = vld [vmem:[#allocation4 + $0x118] sm:$0xff]
          %v1549 = vld [vmem:[#allocation4 + $0x120] sm:$0xff]
          %v1550 = vld [vmem:[#allocation4 + $0x128] sm:$0xff]
          %v1551 = vld [vmem:[#allocation4 + $0x130] sm:$0xff]
          %v1552 = vld [vmem:[#allocation4 + $0x138] sm:$0xff]
          %v1553 = vld [vmem:[#allocation4 + $0x140] sm:$0xff]
          %v1554 = vld [vmem:[#allocation4 + $0x148] sm:$0xff]
          %v1555 = vld [vmem:[#allocation4 + $0x150] sm:$0xff]
          %v1556 = vld [vmem:[#allocation4 + $0x158] sm:$0xff]
          %v1557 = vld [vmem:[#allocation4 + $0x160] sm:$0xff]
          %v1558 = vld [vmem:[#allocation4 + $0x168] sm:$0xff]
          %v1559 = vld [vmem:[#allocation4 + $0x170] sm:$0xff]
          %v1560 = vld [vmem:[#allocation4 + $0x178] sm:$0xff]
          %v1561 = vld [vmem:[#allocation9] sm:$0xf]
          %v1562 = vlaneseq
          %v1563 = vshrl.u32 %v1562, 7
          %v1564 = vstv %s334
          %vm1565 = vcmp.eq.s32.totalorder %v1563, %v1564
          %v1566 = vsel %vm1565, 1, 0
          %v1567 = vcvt.s32.f32 %v1566
          %v1568 = vmul.f32 %v1561, %v1567
          %vm1569 = vcmask 1043456
          %v1570 = vsel %vm1569, %v1568, 0.0
          %v1571 = vrot.slane %v1570, 4
          %v1572 = vadd.f32 %v1570, %v1571
          %v1573 = vrot.slane %v1572, 2
          %v1574 = vadd.f32 %v1572, %v1573
          %v1575 = vrot.slane %v1574, 1
          %v1576 = vadd.f32 %v1574, %v1575
          // Predicated region
          $region65: #{tpu_custom_call.1} parent=63 // pred_check
            %p1577 = pneg %p353
          $region66: #{tpu_custom_call.1} parent=63 // pred_check_branch
            %1579 = sbr.rel (%p1577) target = $region68
          $region67: #{tpu_custom_call.1} parent=63 // pred_region
            %v1580 = vstv %s1459
            %v1581 = vmul.f32 %v1580, %v1465
            %v1582 = vmul.f32 %v1580, %v1466
            %v1583 = vmul.f32 %v1580, %v1467
            %v1584 = vmul.f32 %v1580, %v1468
            %v1585 = vmul.f32 %v1580, %v1469
            %v1586 = vmul.f32 %v1580, %v1470
            %v1587 = vmul.f32 %v1580, %v1471
            %v1588 = vmul.f32 %v1580, %v1472
            %v1589 = vmul.f32 %v1580, %v1473
            %v1590 = vmul.f32 %v1580, %v1474
            %v1591 = vmul.f32 %v1580, %v1475
            %v1592 = vmul.f32 %v1580, %v1476
            %v1593 = vmul.f32 %v1580, %v1477
            %v1594 = vmul.f32 %v1580, %v1478
            %v1595 = vmul.f32 %v1580, %v1479
            %v1596 = vmul.f32 %v1580, %v1480
            %v1597 = vmul.f32 %v1580, %v1481
            %v1598 = vmul.f32 %v1580, %v1482
            %v1599 = vmul.f32 %v1580, %v1483
            %v1600 = vmul.f32 %v1580, %v1484
            %v1601 = vmul.f32 %v1580, %v1485
            %v1602 = vmul.f32 %v1580, %v1486
            %v1603 = vmul.f32 %v1580, %v1487
            %v1604 = vmul.f32 %v1580, %v1488
            %v1605 = vmul.f32 %v1580, %v1489
            %v1606 = vmul.f32 %v1580, %v1490
            %v1607 = vmul.f32 %v1580, %v1491
            %v1608 = vmul.f32 %v1580, %v1492
            %v1609 = vmul.f32 %v1580, %v1493
            %v1610 = vmul.f32 %v1580, %v1494
            %v1611 = vmul.f32 %v1580, %v1495
            %v1612 = vmul.f32 %v1580, %v1496
            %v1613 = vmul.f32 %v1580, %v1497
            %v1614 = vmul.f32 %v1580, %v1498
            %v1615 = vmul.f32 %v1580, %v1499
            %v1616 = vmul.f32 %v1580, %v1500
            %v1617 = vmul.f32 %v1580, %v1501
            %v1618 = vmul.f32 %v1580, %v1502
            %v1619 = vmul.f32 %v1580, %v1503
            %v1620 = vmul.f32 %v1580, %v1504
            %v1621 = vmul.f32 %v1580, %v1505
            %v1622 = vmul.f32 %v1580, %v1506
            %v1623 = vmul.f32 %v1580, %v1507
            %v1624 = vmul.f32 %v1580, %v1508
            %v1625 = vmul.f32 %v1580, %v1509
            %v1626 = vmul.f32 %v1580, %v1510
            %v1627 = vmul.f32 %v1580, %v1511
            %v1628 = vmul.f32 %v1580, %v1512
            %v1629 = vstv %s1461
            %v1630 = vmul.f32 %v1629, %v1513
            %v1631 = vmul.f32 %v1629, %v1514
            %v1632 = vmul.f32 %v1629, %v1515
            %v1633 = vmul.f32 %v1629, %v1516
            %v1634 = vmul.f32 %v1629, %v1517
            %v1635 = vmul.f32 %v1629, %v1518
            %v1636 = vmul.f32 %v1629, %v1519
            %v1637 = vmul.f32 %v1629, %v1520
            %v1638 = vmul.f32 %v1629, %v1521
            %v1639 = vmul.f32 %v1629, %v1522
            %v1640 = vmul.f32 %v1629, %v1523
            %v1641 = vmul.f32 %v1629, %v1524
            %v1642 = vmul.f32 %v1629, %v1525
            %v1643 = vmul.f32 %v1629, %v1526
            %v1644 = vmul.f32 %v1629, %v1527
            %v1645 = vmul.f32 %v1629, %v1528
            %v1646 = vmul.f32 %v1629, %v1529
            %v1647 = vmul.f32 %v1629, %v1530
            %v1648 = vmul.f32 %v1629, %v1531
            %v1649 = vmul.f32 %v1629, %v1532
            %v1650 = vmul.f32 %v1629, %v1533
            %v1651 = vmul.f32 %v1629, %v1534
            %v1652 = vmul.f32 %v1629, %v1535
            %v1653 = vmul.f32 %v1629, %v1536
            %v1654 = vmul.f32 %v1629, %v1537
            %v1655 = vmul.f32 %v1629, %v1538
            %v1656 = vmul.f32 %v1629, %v1539
            %v1657 = vmul.f32 %v1629, %v1540
            %v1658 = vmul.f32 %v1629, %v1541
            %v1659 = vmul.f32 %v1629, %v1542
            %v1660 = vmul.f32 %v1629, %v1543
            %v1661 = vmul.f32 %v1629, %v1544
            %v1662 = vmul.f32 %v1629, %v1545
            %v1663 = vmul.f32 %v1629, %v1546
            %v1664 = vmul.f32 %v1629, %v1547
            %v1665 = vmul.f32 %v1629, %v1548
            %v1666 = vmul.f32 %v1629, %v1549
            %v1667 = vmul.f32 %v1629, %v1550
            %v1668 = vmul.f32 %v1629, %v1551
            %v1669 = vmul.f32 %v1629, %v1552
            %v1670 = vmul.f32 %v1629, %v1553
            %v1671 = vmul.f32 %v1629, %v1554
            %v1672 = vmul.f32 %v1629, %v1555
            %v1673 = vmul.f32 %v1629, %v1556
            %v1674 = vmul.f32 %v1629, %v1557
            %v1675 = vmul.f32 %v1629, %v1558
            %v1676 = vmul.f32 %v1629, %v1559
            %v1677 = vmul.f32 %v1629, %v1560
            %v1678 = vadd.f32 %v1581, %v1630
            %v1679 = vadd.f32 %v1582, %v1631
            %v1680 = vadd.f32 %v1583, %v1632
            %v1681 = vadd.f32 %v1584, %v1633
            %v1682 = vadd.f32 %v1585, %v1634
            %v1683 = vadd.f32 %v1586, %v1635
            %v1684 = vadd.f32 %v1587, %v1636
            %v1685 = vadd.f32 %v1588, %v1637
            %v1686 = vadd.f32 %v1589, %v1638
            %v1687 = vadd.f32 %v1590, %v1639
            %v1688 = vadd.f32 %v1591, %v1640
            %v1689 = vadd.f32 %v1592, %v1641
            %v1690 = vadd.f32 %v1593, %v1642
            %v1691 = vadd.f32 %v1594, %v1643
            %v1692 = vadd.f32 %v1595, %v1644
            %v1693 = vadd.f32 %v1596, %v1645
            %v1694 = vadd.f32 %v1597, %v1646
            %v1695 = vadd.f32 %v1598, %v1647
            %v1696 = vadd.f32 %v1599, %v1648
            %v1697 = vadd.f32 %v1600, %v1649
            %v1698 = vadd.f32 %v1601, %v1650
            %v1699 = vadd.f32 %v1602, %v1651
            %v1700 = vadd.f32 %v1603, %v1652
            %v1701 = vadd.f32 %v1604, %v1653
            %v1702 = vadd.f32 %v1605, %v1654
            %v1703 = vadd.f32 %v1606, %v1655
            %v1704 = vadd.f32 %v1607, %v1656
            %v1705 = vadd.f32 %v1608, %v1657
            %v1706 = vadd.f32 %v1609, %v1658
            %v1707 = vadd.f32 %v1610, %v1659
            %v1708 = vadd.f32 %v1611, %v1660
            %v1709 = vadd.f32 %v1612, %v1661
            %v1710 = vadd.f32 %v1613, %v1662
            %v1711 = vadd.f32 %v1614, %v1663
            %v1712 = vadd.f32 %v1615, %v1664
            %v1713 = vadd.f32 %v1616, %v1665
            %v1714 = vadd.f32 %v1617, %v1666
            %v1715 = vadd.f32 %v1618, %v1667
            %v1716 = vadd.f32 %v1619, %v1668
            %v1717 = vadd.f32 %v1620, %v1669
            %v1718 = vadd.f32 %v1621, %v1670
            %v1719 = vadd.f32 %v1622, %v1671
            %v1720 = vadd.f32 %v1623, %v1672
            %v1721 = vadd.f32 %v1624, %v1673
            %v1722 = vadd.f32 %v1625, %v1674
            %v1723 = vadd.f32 %v1626, %v1675
            %v1724 = vadd.f32 %v1627, %v1676
            %v1725 = vadd.f32 %v1628, %v1677
            %s1726 = scalar_lea.vmem [#allocation2], %s352
            %1727 = vst [vmem:[%s1726] sm:$0xff] %v1678
            %1728 = vst [vmem:[%s1726 + $0x8] sm:$0xff] %v1679
            %1729 = vst [vmem:[%s1726 + $0x10] sm:$0xff] %v1680
            %1730 = vst [vmem:[%s1726 + $0x18] sm:$0xff] %v1681
            %1731 = vst [vmem:[%s1726 + $0x20] sm:$0xff] %v1682
            %1732 = vst [vmem:[%s1726 + $0x28] sm:$0xff] %v1683
            %1733 = vst [vmem:[%s1726 + $0x30] sm:$0xff] %v1684
            %1734 = vst [vmem:[%s1726 + $0x38] sm:$0xff] %v1685
            %1735 = vst [vmem:[%s1726 + $0x40] sm:$0xff] %v1686
            %1736 = vst [vmem:[%s1726 + $0x48] sm:$0xff] %v1687
            %1737 = vst [vmem:[%s1726 + $0x50] sm:$0xff] %v1688
            %1738 = vst [vmem:[%s1726 + $0x58] sm:$0xff] %v1689
            %1739 = vst [vmem:[%s1726 + $0x60] sm:$0xff] %v1690
            %1740 = vst [vmem:[%s1726 + $0x68] sm:$0xff] %v1691
            %1741 = vst [vmem:[%s1726 + $0x70] sm:$0xff] %v1692
            %1742 = vst [vmem:[%s1726 + $0x78] sm:$0xff] %v1693
            %1743 = vst [vmem:[%s1726 + $0x80] sm:$0xff] %v1694
            %1744 = vst [vmem:[%s1726 + $0x88] sm:$0xff] %v1695
            %1745 = vst [vmem:[%s1726 + $0x90] sm:$0xff] %v1696
            %1746 = vst [vmem:[%s1726 + $0x98] sm:$0xff] %v1697
            %1747 = vst [vmem:[%s1726 + $0xa0] sm:$0xff] %v1698
            %1748 = vst [vmem:[%s1726 + $0xa8] sm:$0xff] %v1699
            %1749 = vst [vmem:[%s1726 + $0xb0] sm:$0xff] %v1700
            %1750 = vst [vmem:[%s1726 + $0xb8] sm:$0xff] %v1701
            %1751 = vst [vmem:[%s1726 + $0xc0] sm:$0xff] %v1702
            %1752 = vst [vmem:[%s1726 + $0xc8] sm:$0xff] %v1703
            %1753 = vst [vmem:[%s1726 + $0xd0] sm:$0xff] %v1704
            %1754 = vst [vmem:[%s1726 + $0xd8] sm:$0xff] %v1705
            %1755 = vst [vmem:[%s1726 + $0xe0] sm:$0xff] %v1706
            %1756 = vst [vmem:[%s1726 + $0xe8] sm:$0xff] %v1707
            %1757 = vst [vmem:[%s1726 + $0xf0] sm:$0xff] %v1708
            %1758 = vst [vmem:[%s1726 + $0xf8] sm:$0xff] %v1709
            %1759 = vst [vmem:[%s1726 + $0x100] sm:$0xff] %v1710
            %1760 = vst [vmem:[%s1726 + $0x108] sm:$0xff] %v1711
            %1761 = vst [vmem:[%s1726 + $0x110] sm:$0xff] %v1712
            %1762 = vst [vmem:[%s1726 + $0x118] sm:$0xff] %v1713
            %1763 = vst [vmem:[%s1726 + $0x120] sm:$0xff] %v1714
            %1764 = vst [vmem:[%s1726 + $0x128] sm:$0xff] %v1715
            %1765 = vst [vmem:[%s1726 + $0x130] sm:$0xff] %v1716
            %1766 = vst [vmem:[%s1726 + $0x138] sm:$0xff] %v1717
            %1767 = vst [vmem:[%s1726 + $0x140] sm:$0xff] %v1718
            %1768 = vst [vmem:[%s1726 + $0x148] sm:$0xff] %v1719
            %1769 = vst [vmem:[%s1726 + $0x150] sm:$0xff] %v1720
            %1770 = vst [vmem:[%s1726 + $0x158] sm:$0xff] %v1721
            %1771 = vst [vmem:[%s1726 + $0x160] sm:$0xff] %v1722
            %1772 = vst [vmem:[%s1726 + $0x168] sm:$0xff] %v1723
            %1773 = vst [vmem:[%s1726 + $0x170] sm:$0xff] %v1724
            %1774 = vst [vmem:[%s1726 + $0x178] sm:$0xff] %v1725
            %v1775 = vlaneseq
            %v1776 = vshrl.u32 %v1775, 7
            %v1777 = vsub.s32 0, %v1776
            %v1778 = vrot.slane %v1561, %v1777
            %v1779 = vmul.f32 %v1465, %v1778
            %v1780 = vmul.f32 %v1466, %v1778
            %v1781 = vmul.f32 %v1467, %v1778
            %v1782 = vmul.f32 %v1468, %v1778
            %v1783 = vmul.f32 %v1469, %v1778
            %v1784 = vmul.f32 %v1470, %v1778
            %v1785 = vmul.f32 %v1471, %v1778
            %v1786 = vmul.f32 %v1472, %v1778
            %v1787 = vmul.f32 %v1473, %v1778
            %v1788 = vmul.f32 %v1474, %v1778
            %v1789 = vmul.f32 %v1475, %v1778
            %v1790 = vmul.f32 %v1476, %v1778
            %v1791 = vmul.f32 %v1477, %v1778
            %v1792 = vmul.f32 %v1478, %v1778
            %v1793 = vmul.f32 %v1479, %v1778
            %v1794 = vmul.f32 %v1480, %v1778
            %v1795 = vmul.f32 %v1481, %v1778
            %v1796 = vmul.f32 %v1482, %v1778
            %v1797 = vmul.f32 %v1483, %v1778
            %v1798 = vmul.f32 %v1484, %v1778
            %v1799 = vmul.f32 %v1485, %v1778
            %v1800 = vmul.f32 %v1486, %v1778
            %v1801 = vmul.f32 %v1487, %v1778
            %v1802 = vmul.f32 %v1488, %v1778
            %v1803 = vmul.f32 %v1489, %v1778
            %v1804 = vmul.f32 %v1490, %v1778
            %v1805 = vmul.f32 %v1491, %v1778
            %v1806 = vmul.f32 %v1492, %v1778
            %v1807 = vmul.f32 %v1493, %v1778
            %v1808 = vmul.f32 %v1494, %v1778
            %v1809 = vmul.f32 %v1495, %v1778
            %v1810 = vmul.f32 %v1496, %v1778
            %v1811 = vmul.f32 %v1497, %v1778
            %v1812 = vmul.f32 %v1498, %v1778
            %v1813 = vmul.f32 %v1499, %v1778
            %v1814 = vmul.f32 %v1500, %v1778
            %v1815 = vmul.f32 %v1501, %v1778
            %v1816 = vmul.f32 %v1502, %v1778
            %v1817 = vmul.f32 %v1503, %v1778
            %v1818 = vmul.f32 %v1504, %v1778
            %v1819 = vmul.f32 %v1505, %v1778
            %v1820 = vmul.f32 %v1506, %v1778
            %v1821 = vmul.f32 %v1507, %v1778
            %v1822 = vmul.f32 %v1508, %v1778
            %v1823 = vmul.f32 %v1509, %v1778
            %v1824 = vmul.f32 %v1510, %v1778
            %v1825 = vmul.f32 %v1511, %v1778
            %v1826 = vmul.f32 %v1512, %v1778
            %v1827 = vmul.f32 %v1678, %v1576
            %v1828 = vmul.f32 %v1679, %v1576
            %v1829 = vmul.f32 %v1680, %v1576
            %v1830 = vmul.f32 %v1681, %v1576
            %v1831 = vmul.f32 %v1682, %v1576
            %v1832 = vmul.f32 %v1683, %v1576
            %v1833 = vmul.f32 %v1684, %v1576
            %v1834 = vmul.f32 %v1685, %v1576
            %v1835 = vmul.f32 %v1686, %v1576
            %v1836 = vmul.f32 %v1687, %v1576
            %v1837 = vmul.f32 %v1688, %v1576
            %v1838 = vmul.f32 %v1689, %v1576
            %v1839 = vmul.f32 %v1690, %v1576
            %v1840 = vmul.f32 %v1691, %v1576
            %v1841 = vmul.f32 %v1692, %v1576
            %v1842 = vmul.f32 %v1693, %v1576
            %v1843 = vmul.f32 %v1694, %v1576
            %v1844 = vmul.f32 %v1695, %v1576
            %v1845 = vmul.f32 %v1696, %v1576
            %v1846 = vmul.f32 %v1697, %v1576
            %v1847 = vmul.f32 %v1698, %v1576
            %v1848 = vmul.f32 %v1699, %v1576
            %v1849 = vmul.f32 %v1700, %v1576
            %v1850 = vmul.f32 %v1701, %v1576
            %v1851 = vmul.f32 %v1702, %v1576
            %v1852 = vmul.f32 %v1703, %v1576
            %v1853 = vmul.f32 %v1704, %v1576
            %v1854 = vmul.f32 %v1705, %v1576
            %v1855 = vmul.f32 %v1706, %v1576
            %v1856 = vmul.f32 %v1707, %v1576
            %v1857 = vmul.f32 %v1708, %v1576
            %v1858 = vmul.f32 %v1709, %v1576
            %v1859 = vmul.f32 %v1710, %v1576
            %v1860 = vmul.f32 %v1711, %v1576
            %v1861 = vmul.f32 %v1712, %v1576
            %v1862 = vmul.f32 %v1713, %v1576
            %v1863 = vmul.f32 %v1714, %v1576
            %v1864 = vmul.f32 %v1715, %v1576
            %v1865 = vmul.f32 %v1716, %v1576
            %v1866 = vmul.f32 %v1717, %v1576
            %v1867 = vmul.f32 %v1718, %v1576
            %v1868 = vmul.f32 %v1719, %v1576
            %v1869 = vmul.f32 %v1720, %v1576
            %v1870 = vmul.f32 %v1721, %v1576
            %v1871 = vmul.f32 %v1722, %v1576
            %v1872 = vmul.f32 %v1723, %v1576
            %v1873 = vmul.f32 %v1724, %v1576
            %v1874 = vmul.f32 %v1725, %v1576
            %v1875 = vadd.f32 %v1779, %v1827
            %v1876 = vadd.f32 %v1780, %v1828
            %v1877 = vadd.f32 %v1781, %v1829
            %v1878 = vadd.f32 %v1782, %v1830
            %v1879 = vadd.f32 %v1783, %v1831
            %v1880 = vadd.f32 %v1784, %v1832
            %v1881 = vadd.f32 %v1785, %v1833
            %v1882 = vadd.f32 %v1786, %v1834
            %v1883 = vadd.f32 %v1787, %v1835
            %v1884 = vadd.f32 %v1788, %v1836
            %v1885 = vadd.f32 %v1789, %v1837
            %v1886 = vadd.f32 %v1790, %v1838
            %v1887 = vadd.f32 %v1791, %v1839
            %v1888 = vadd.f32 %v1792, %v1840
            %v1889 = vadd.f32 %v1793, %v1841
            %v1890 = vadd.f32 %v1794, %v1842
            %v1891 = vadd.f32 %v1795, %v1843
            %v1892 = vadd.f32 %v1796, %v1844
            %v1893 = vadd.f32 %v1797, %v1845
            %v1894 = vadd.f32 %v1798, %v1846
            %v1895 = vadd.f32 %v1799, %v1847
            %v1896 = vadd.f32 %v1800, %v1848
            %v1897 = vadd.f32 %v1801, %v1849
            %v1898 = vadd.f32 %v1802, %v1850
            %v1899 = vadd.f32 %v1803, %v1851
            %v1900 = vadd.f32 %v1804, %v1852
            %v1901 = vadd.f32 %v1805, %v1853
            %v1902 = vadd.f32 %v1806, %v1854
            %v1903 = vadd.f32 %v1807, %v1855
            %v1904 = vadd.f32 %v1808, %v1856
            %v1905 = vadd.f32 %v1809, %v1857
            %v1906 = vadd.f32 %v1810, %v1858
            %v1907 = vadd.f32 %v1811, %v1859
            %v1908 = vadd.f32 %v1812, %v1860
            %v1909 = vadd.f32 %v1813, %v1861
            %v1910 = vadd.f32 %v1814, %v1862
            %v1911 = vadd.f32 %v1815, %v1863
            %v1912 = vadd.f32 %v1816, %v1864
            %v1913 = vadd.f32 %v1817, %v1865
            %v1914 = vadd.f32 %v1818, %v1866
            %v1915 = vadd.f32 %v1819, %v1867
            %v1916 = vadd.f32 %v1820, %v1868
            %v1917 = vadd.f32 %v1821, %v1869
            %v1918 = vadd.f32 %v1822, %v1870
            %v1919 = vadd.f32 %v1823, %v1871
            %v1920 = vadd.f32 %v1824, %v1872
            %v1921 = vadd.f32 %v1825, %v1873
            %v1922 = vadd.f32 %v1826, %v1874
            %s1923 = scalar_lea.vmem [#allocation3], %s348
            %1924 = vst [vmem:[%s1923] sm:$0xff] %v1875
            %1925 = vst [vmem:[%s1923 + $0x8] sm:$0xff] %v1876
            %1926 = vst [vmem:[%s1923 + $0x10] sm:$0xff] %v1877
            %1927 = vst [vmem:[%s1923 + $0x18] sm:$0xff] %v1878
            %1928 = vst [vmem:[%s1923 + $0x20] sm:$0xff] %v1879
            %1929 = vst [vmem:[%s1923 + $0x28] sm:$0xff] %v1880
            %1930 = vst [vmem:[%s1923 + $0x30] sm:$0xff] %v1881
            %1931 = vst [vmem:[%s1923 + $0x38] sm:$0xff] %v1882
            %1932 = vst [vmem:[%s1923 + $0x40] sm:$0xff] %v1883
            %1933 = vst [vmem:[%s1923 + $0x48] sm:$0xff] %v1884
            %1934 = vst [vmem:[%s1923 + $0x50] sm:$0xff] %v1885
            %1935 = vst [vmem:[%s1923 + $0x58] sm:$0xff] %v1886
            %1936 = vst [vmem:[%s1923 + $0x60] sm:$0xff] %v1887
            %1937 = vst [vmem:[%s1923 + $0x68] sm:$0xff] %v1888
            %1938 = vst [vmem:[%s1923 + $0x70] sm:$0xff] %v1889
            %1939 = vst [vmem:[%s1923 + $0x78] sm:$0xff] %v1890
            %1940 = vst [vmem:[%s1923 + $0x80] sm:$0xff] %v1891
            %1941 = vst [vmem:[%s1923 + $0x88] sm:$0xff] %v1892
            %1942 = vst [vmem:[%s1923 + $0x90] sm:$0xff] %v1893
            %1943 = vst [vmem:[%s1923 + $0x98] sm:$0xff] %v1894
            %1944 = vst [vmem:[%s1923 + $0xa0] sm:$0xff] %v1895
            %1945 = vst [vmem:[%s1923 + $0xa8] sm:$0xff] %v1896
            %1946 = vst [vmem:[%s1923 + $0xb0] sm:$0xff] %v1897
            %1947 = vst [vmem:[%s1923 + $0xb8] sm:$0xff] %v1898
            %1948 = vst [vmem:[%s1923 + $0xc0] sm:$0xff] %v1899
            %1949 = vst [vmem:[%s1923 + $0xc8] sm:$0xff] %v1900
            %1950 = vst [vmem:[%s1923 + $0xd0] sm:$0xff] %v1901
            %1951 = vst [vmem:[%s1923 + $0xd8] sm:$0xff] %v1902
            %1952 = vst [vmem:[%s1923 + $0xe0] sm:$0xff] %v1903
            %1953 = vst [vmem:[%s1923 + $0xe8] sm:$0xff] %v1904
            %1954 = vst [vmem:[%s1923 + $0xf0] sm:$0xff] %v1905
            %1955 = vst [vmem:[%s1923 + $0xf8] sm:$0xff] %v1906
            %1956 = vst [vmem:[%s1923 + $0x100] sm:$0xff] %v1907
            %1957 = vst [vmem:[%s1923 + $0x108] sm:$0xff] %v1908
            %1958 = vst [vmem:[%s1923 + $0x110] sm:$0xff] %v1909
            %1959 = vst [vmem:[%s1923 + $0x118] sm:$0xff] %v1910
            %1960 = vst [vmem:[%s1923 + $0x120] sm:$0xff] %v1911
            %1961 = vst [vmem:[%s1923 + $0x128] sm:$0xff] %v1912
            %1962 = vst [vmem:[%s1923 + $0x130] sm:$0xff] %v1913
            %1963 = vst [vmem:[%s1923 + $0x138] sm:$0xff] %v1914
            %1964 = vst [vmem:[%s1923 + $0x140] sm:$0xff] %v1915
            %1965 = vst [vmem:[%s1923 + $0x148] sm:$0xff] %v1916
            %1966 = vst [vmem:[%s1923 + $0x150] sm:$0xff] %v1917
            %1967 = vst [vmem:[%s1923 + $0x158] sm:$0xff] %v1918
            %1968 = vst [vmem:[%s1923 + $0x160] sm:$0xff] %v1919
            %1969 = vst [vmem:[%s1923 + $0x168] sm:$0xff] %v1920
            %1970 = vst [vmem:[%s1923 + $0x170] sm:$0xff] %v1921
            %1971 = vst [vmem:[%s1923 + $0x178] sm:$0xff] %v1922
            %1972 = vst [vmem:[#allocation13] sm:$0xff] %v1875
            %1973 = vst [vmem:[#allocation13 + $0x8] sm:$0xff] %v1876
            %1974 = vst [vmem:[#allocation13 + $0x10] sm:$0xff] %v1877
            %1975 = vst [vmem:[#allocation13 + $0x18] sm:$0xff] %v1878
            %1976 = vst [vmem:[#allocation13 + $0x20] sm:$0xff] %v1879
            %1977 = vst [vmem:[#allocation13 + $0x28] sm:$0xff] %v1880
            %1978 = vst [vmem:[#allocation13 + $0x30] sm:$0xff] %v1881
            %1979 = vst [vmem:[#allocation13 + $0x38] sm:$0xff] %v1882
            %1980 = vst [vmem:[#allocation13 + $0x40] sm:$0xff] %v1883
            %1981 = vst [vmem:[#allocation13 + $0x48] sm:$0xff] %v1884
            %1982 = vst [vmem:[#allocation13 + $0x50] sm:$0xff] %v1885
            %1983 = vst [vmem:[#allocation13 + $0x58] sm:$0xff] %v1886
            %1984 = vst [vmem:[#allocation13 + $0x60] sm:$0xff] %v1887
            %1985 = vst [vmem:[#allocation13 + $0x68] sm:$0xff] %v1888
            %1986 = vst [vmem:[#allocation13 + $0x70] sm:$0xff] %v1889
            %1987 = vst [vmem:[#allocation13 + $0x78] sm:$0xff] %v1890
            %1988 = vst [vmem:[#allocation13 + $0x80] sm:$0xff] %v1891
            %1989 = vst [vmem:[#allocation13 + $0x88] sm:$0xff] %v1892
            %1990 = vst [vmem:[#allocation13 + $0x90] sm:$0xff] %v1893
            %1991 = vst [vmem:[#allocation13 + $0x98] sm:$0xff] %v1894
            %1992 = vst [vmem:[#allocation13 + $0xa0] sm:$0xff] %v1895
            %1993 = vst [vmem:[#allocation13 + $0xa8] sm:$0xff] %v1896
            %1994 = vst [vmem:[#allocation13 + $0xb0] sm:$0xff] %v1897
            %1995 = vst [vmem:[#allocation13 + $0xb8] sm:$0xff] %v1898
            %1996 = vst [vmem:[#allocation13 + $0xc0] sm:$0xff] %v1899
            %1997 = vst [vmem:[#allocation13 + $0xc8] sm:$0xff] %v1900
            %1998 = vst [vmem:[#allocation13 + $0xd0] sm:$0xff] %v1901
            %1999 = vst [vmem:[#allocation13 + $0xd8] sm:$0xff] %v1902
            %2000 = vst [vmem:[#allocation13 + $0xe0] sm:$0xff] %v1903
            %2001 = vst [vmem:[#allocation13 + $0xe8] sm:$0xff] %v1904
            %2002 = vst [vmem:[#allocation13 + $0xf0] sm:$0xff] %v1905
            %2003 = vst [vmem:[#allocation13 + $0xf8] sm:$0xff] %v1906
            %2004 = vst [vmem:[#allocation13 + $0x100] sm:$0xff] %v1907
            %2005 = vst [vmem:[#allocation13 + $0x108] sm:$0xff] %v1908
            %2006 = vst [vmem:[#allocation13 + $0x110] sm:$0xff] %v1909
            %2007 = vst [vmem:[#allocation13 + $0x118] sm:$0xff] %v1910
            %2008 = vst [vmem:[#allocation13 + $0x120] sm:$0xff] %v1911
            %2009 = vst [vmem:[#allocation13 + $0x128] sm:$0xff] %v1912
            %2010 = vst [vmem:[#allocation13 + $0x130] sm:$0xff] %v1913
            %2011 = vst [vmem:[#allocation13 + $0x138] sm:$0xff] %v1914
            %2012 = vst [vmem:[#allocation13 + $0x140] sm:$0xff] %v1915
            %2013 = vst [vmem:[#allocation13 + $0x148] sm:$0xff] %v1916
            %2014 = vst [vmem:[#allocation13 + $0x150] sm:$0xff] %v1917
            %2015 = vst [vmem:[#allocation13 + $0x158] sm:$0xff] %v1918
            %2016 = vst [vmem:[#allocation13 + $0x160] sm:$0xff] %v1919
            %2017 = vst [vmem:[#allocation13 + $0x168] sm:$0xff] %v1920
            %2018 = vst [vmem:[#allocation13 + $0x170] sm:$0xff] %v1921
            %2019 = vst [vmem:[#allocation13 + $0x178] sm:$0xff] %v1922
          $region68: #{tpu_custom_call.1} parent=63 // pred_fallthru
            _
          %p2020 = scmp.gt.s32.totalorder %s26, 0
          // Predicated region
          $region69: #{tpu_custom_call.1} parent=63 // pred_check
            %p2021 = pneg %p2020
          $region70: #{tpu_custom_call.1} parent=63 // pred_check_branch
            %2023 = sbr.rel (%p2021) target = $region72
          $region71: #{tpu_custom_call.1} parent=63 // pred_region
            %s2024 = scalar_lea.vmem [#allocation2], %s352
            %v2025 = vld [vmem:[%s2024] sm:$0xff]
            %v2026 = vld [vmem:[%s2024 + $0x8] sm:$0xff]
            %v2027 = vld [vmem:[%s2024 + $0x10] sm:$0xff]
            %v2028 = vld [vmem:[%s2024 + $0x18] sm:$0xff]
            %v2029 = vld [vmem:[%s2024 + $0x20] sm:$0xff]
            %v2030 = vld [vmem:[%s2024 + $0x28] sm:$0xff]
            %v2031 = vld [vmem:[%s2024 + $0x30] sm:$0xff]
            %v2032 = vld [vmem:[%s2024 + $0x38] sm:$0xff]
            %v2033 = vld [vmem:[%s2024 + $0x40] sm:$0xff]
            %v2034 = vld [vmem:[%s2024 + $0x48] sm:$0xff]
            %v2035 = vld [vmem:[%s2024 + $0x50] sm:$0xff]
            %v2036 = vld [vmem:[%s2024 + $0x58] sm:$0xff]
            %v2037 = vld [vmem:[%s2024 + $0x60] sm:$0xff]
            %v2038 = vld [vmem:[%s2024 + $0x68] sm:$0xff]
            %v2039 = vld [vmem:[%s2024 + $0x70] sm:$0xff]
            %v2040 = vld [vmem:[%s2024 + $0x78] sm:$0xff]
            %v2041 = vld [vmem:[%s2024 + $0x80] sm:$0xff]
            %v2042 = vld [vmem:[%s2024 + $0x88] sm:$0xff]
            %v2043 = vld [vmem:[%s2024 + $0x90] sm:$0xff]
            %v2044 = vld [vmem:[%s2024 + $0x98] sm:$0xff]
            %v2045 = vld [vmem:[%s2024 + $0xa0] sm:$0xff]
            %v2046 = vld [vmem:[%s2024 + $0xa8] sm:$0xff]
            %v2047 = vld [vmem:[%s2024 + $0xb0] sm:$0xff]
            %v2048 = vld [vmem:[%s2024 + $0xb8] sm:$0xff]
            %v2049 = vld [vmem:[%s2024 + $0xc0] sm:$0xff]
            %v2050 = vld [vmem:[%s2024 + $0xc8] sm:$0xff]
            %v2051 = vld [vmem:[%s2024 + $0xd0] sm:$0xff]
            %v2052 = vld [vmem:[%s2024 + $0xd8] sm:$0xff]
            %v2053 = vld [vmem:[%s2024 + $0xe0] sm:$0xff]
            %v2054 = vld [vmem:[%s2024 + $0xe8] sm:$0xff]
            %v2055 = vld [vmem:[%s2024 + $0xf0] sm:$0xff]
            %v2056 = vld [vmem:[%s2024 + $0xf8] sm:$0xff]
            %v2057 = vld [vmem:[%s2024 + $0x100] sm:$0xff]
            %v2058 = vld [vmem:[%s2024 + $0x108] sm:$0xff]
            %v2059 = vld [vmem:[%s2024 + $0x110] sm:$0xff]
            %v2060 = vld [vmem:[%s2024 + $0x118] sm:$0xff]
            %v2061 = vld [vmem:[%s2024 + $0x120] sm:$0xff]
            %v2062 = vld [vmem:[%s2024 + $0x128] sm:$0xff]
            %v2063 = vld [vmem:[%s2024 + $0x130] sm:$0xff]
            %v2064 = vld [vmem:[%s2024 + $0x138] sm:$0xff]
            %v2065 = vld [vmem:[%s2024 + $0x140] sm:$0xff]
            %v2066 = vld [vmem:[%s2024 + $0x148] sm:$0xff]
            %v2067 = vld [vmem:[%s2024 + $0x150] sm:$0xff]
            %v2068 = vld [vmem:[%s2024 + $0x158] sm:$0xff]
            %v2069 = vld [vmem:[%s2024 + $0x160] sm:$0xff]
            %v2070 = vld [vmem:[%s2024 + $0x168] sm:$0xff]
            %v2071 = vld [vmem:[%s2024 + $0x170] sm:$0xff]
            %v2072 = vld [vmem:[%s2024 + $0x178] sm:$0xff]
            %v2073 = vstv %s1459
            %v2074 = vmul.f32 %v2073, %v1465
            %v2075 = vmul.f32 %v2073, %v1466
            %v2076 = vmul.f32 %v2073, %v1467
            %v2077 = vmul.f32 %v2073, %v1468
            %v2078 = vmul.f32 %v2073, %v1469
            %v2079 = vmul.f32 %v2073, %v1470
            %v2080 = vmul.f32 %v2073, %v1471
            %v2081 = vmul.f32 %v2073, %v1472
            %v2082 = vmul.f32 %v2073, %v1473
            %v2083 = vmul.f32 %v2073, %v1474
            %v2084 = vmul.f32 %v2073, %v1475
            %v2085 = vmul.f32 %v2073, %v1476
            %v2086 = vmul.f32 %v2073, %v1477
            %v2087 = vmul.f32 %v2073, %v1478
            %v2088 = vmul.f32 %v2073, %v1479
            %v2089 = vmul.f32 %v2073, %v1480
            %v2090 = vmul.f32 %v2073, %v1481
            %v2091 = vmul.f32 %v2073, %v1482
            %v2092 = vmul.f32 %v2073, %v1483
            %v2093 = vmul.f32 %v2073, %v1484
            %v2094 = vmul.f32 %v2073, %v1485
            %v2095 = vmul.f32 %v2073, %v1486
            %v2096 = vmul.f32 %v2073, %v1487
            %v2097 = vmul.f32 %v2073, %v1488
            %v2098 = vmul.f32 %v2073, %v1489
            %v2099 = vmul.f32 %v2073, %v1490
            %v2100 = vmul.f32 %v2073, %v1491
            %v2101 = vmul.f32 %v2073, %v1492
            %v2102 = vmul.f32 %v2073, %v1493
            %v2103 = vmul.f32 %v2073, %v1494
            %v2104 = vmul.f32 %v2073, %v1495
            %v2105 = vmul.f32 %v2073, %v1496
            %v2106 = vmul.f32 %v2073, %v1497
            %v2107 = vmul.f32 %v2073, %v1498
            %v2108 = vmul.f32 %v2073, %v1499
            %v2109 = vmul.f32 %v2073, %v1500
            %v2110 = vmul.f32 %v2073, %v1501
            %v2111 = vmul.f32 %v2073, %v1502
            %v2112 = vmul.f32 %v2073, %v1503
            %v2113 = vmul.f32 %v2073, %v1504
            %v2114 = vmul.f32 %v2073, %v1505
            %v2115 = vmul.f32 %v2073, %v1506
            %v2116 = vmul.f32 %v2073, %v1507
            %v2117 = vmul.f32 %v2073, %v1508
            %v2118 = vmul.f32 %v2073, %v1509
            %v2119 = vmul.f32 %v2073, %v1510
            %v2120 = vmul.f32 %v2073, %v1511
            %v2121 = vmul.f32 %v2073, %v1512
            %v2122 = vstv %s1461
            %v2123 = vmul.f32 %v2122, %v1513
            %v2124 = vmul.f32 %v2122, %v1514
            %v2125 = vmul.f32 %v2122, %v1515
            %v2126 = vmul.f32 %v2122, %v1516
            %v2127 = vmul.f32 %v2122, %v1517
            %v2128 = vmul.f32 %v2122, %v1518
            %v2129 = vmul.f32 %v2122, %v1519
            %v2130 = vmul.f32 %v2122, %v1520
            %v2131 = vmul.f32 %v2122, %v1521
            %v2132 = vmul.f32 %v2122, %v1522
            %v2133 = vmul.f32 %v2122, %v1523
            %v2134 = vmul.f32 %v2122, %v1524
            %v2135 = vmul.f32 %v2122, %v1525
            %v2136 = vmul.f32 %v2122, %v1526
            %v2137 = vmul.f32 %v2122, %v1527
            %v2138 = vmul.f32 %v2122, %v1528
            %v2139 = vmul.f32 %v2122, %v1529
            %v2140 = vmul.f32 %v2122, %v1530
            %v2141 = vmul.f32 %v2122, %v1531
            %v2142 = vmul.f32 %v2122, %v1532
            %v2143 = vmul.f32 %v2122, %v1533
            %v2144 = vmul.f32 %v2122, %v1534
            %v2145 = vmul.f32 %v2122, %v1535
            %v2146 = vmul.f32 %v2122, %v1536
            %v2147 = vmul.f32 %v2122, %v1537
            %v2148 = vmul.f32 %v2122, %v1538
            %v2149 = vmul.f32 %v2122, %v1539
            %v2150 = vmul.f32 %v2122, %v1540
            %v2151 = vmul.f32 %v2122, %v1541
            %v2152 = vmul.f32 %v2122, %v1542
            %v2153 = vmul.f32 %v2122, %v1543
            %v2154 = vmul.f32 %v2122, %v1544
            %v2155 = vmul.f32 %v2122, %v1545
            %v2156 = vmul.f32 %v2122, %v1546
            %v2157 = vmul.f32 %v2122, %v1547
            %v2158 = vmul.f32 %v2122, %v1548
            %v2159 = vmul.f32 %v2122, %v1549
            %v2160 = vmul.f32 %v2122, %v1550
            %v2161 = vmul.f32 %v2122, %v1551
            %v2162 = vmul.f32 %v2122, %v1552
            %v2163 = vmul.f32 %v2122, %v1553
            %v2164 = vmul.f32 %v2122, %v1554
            %v2165 = vmul.f32 %v2122, %v1555
            %v2166 = vmul.f32 %v2122, %v1556
            %v2167 = vmul.f32 %v2122, %v1557
            %v2168 = vmul.f32 %v2122, %v1558
            %v2169 = vmul.f32 %v2122, %v1559
            %v2170 = vmul.f32 %v2122, %v1560
            %v2171 = vadd.f32 %v2074, %v2123
            %v2172 = vadd.f32 %v2075, %v2124
            %v2173 = vadd.f32 %v2076, %v2125
            %v2174 = vadd.f32 %v2077, %v2126
            %v2175 = vadd.f32 %v2078, %v2127
            %v2176 = vadd.f32 %v2079, %v2128
            %v2177 = vadd.f32 %v2080, %v2129
            %v2178 = vadd.f32 %v2081, %v2130
            %v2179 = vadd.f32 %v2082, %v2131
            %v2180 = vadd.f32 %v2083, %v2132
            %v2181 = vadd.f32 %v2084, %v2133
            %v2182 = vadd.f32 %v2085, %v2134
            %v2183 = vadd.f32 %v2086, %v2135
            %v2184 = vadd.f32 %v2087, %v2136
            %v2185 = vadd.f32 %v2088, %v2137
            %v2186 = vadd.f32 %v2089, %v2138
            %v2187 = vadd.f32 %v2090, %v2139
            %v2188 = vadd.f32 %v2091, %v2140
            %v2189 = vadd.f32 %v2092, %v2141
            %v2190 = vadd.f32 %v2093, %v2142
            %v2191 = vadd.f32 %v2094, %v2143
            %v2192 = vadd.f32 %v2095, %v2144
            %v2193 = vadd.f32 %v2096, %v2145
            %v2194 = vadd.f32 %v2097, %v2146
            %v2195 = vadd.f32 %v2098, %v2147
            %v2196 = vadd.f32 %v2099, %v2148
            %v2197 = vadd.f32 %v2100, %v2149
            %v2198 = vadd.f32 %v2101, %v2150
            %v2199 = vadd.f32 %v2102, %v2151
            %v2200 = vadd.f32 %v2103, %v2152
            %v2201 = vadd.f32 %v2104, %v2153
            %v2202 = vadd.f32 %v2105, %v2154
            %v2203 = vadd.f32 %v2106, %v2155
            %v2204 = vadd.f32 %v2107, %v2156
            %v2205 = vadd.f32 %v2108, %v2157
            %v2206 = vadd.f32 %v2109, %v2158
            %v2207 = vadd.f32 %v2110, %v2159
            %v2208 = vadd.f32 %v2111, %v2160
            %v2209 = vadd.f32 %v2112, %v2161
            %v2210 = vadd.f32 %v2113, %v2162
            %v2211 = vadd.f32 %v2114, %v2163
            %v2212 = vadd.f32 %v2115, %v2164
            %v2213 = vadd.f32 %v2116, %v2165
            %v2214 = vadd.f32 %v2117, %v2166
            %v2215 = vadd.f32 %v2118, %v2167
            %v2216 = vadd.f32 %v2119, %v2168
            %v2217 = vadd.f32 %v2120, %v2169
            %v2218 = vadd.f32 %v2121, %v2170
            %v2219 = vstv %s1463
            %v2220 = vmul.f32 %v2219, %v2025
            %v2221 = vmul.f32 %v2219, %v2026
            %v2222 = vmul.f32 %v2219, %v2027
            %v2223 = vmul.f32 %v2219, %v2028
            %v2224 = vmul.f32 %v2219, %v2029
            %v2225 = vmul.f32 %v2219, %v2030
            %v2226 = vmul.f32 %v2219, %v2031
            %v2227 = vmul.f32 %v2219, %v2032
            %v2228 = vmul.f32 %v2219, %v2033
            %v2229 = vmul.f32 %v2219, %v2034
            %v2230 = vmul.f32 %v2219, %v2035
            %v2231 = vmul.f32 %v2219, %v2036
            %v2232 = vmul.f32 %v2219, %v2037
            %v2233 = vmul.f32 %v2219, %v2038
            %v2234 = vmul.f32 %v2219, %v2039
            %v2235 = vmul.f32 %v2219, %v2040
            %v2236 = vmul.f32 %v2219, %v2041
            %v2237 = vmul.f32 %v2219, %v2042
            %v2238 = vmul.f32 %v2219, %v2043
            %v2239 = vmul.f32 %v2219, %v2044
            %v2240 = vmul.f32 %v2219, %v2045
            %v2241 = vmul.f32 %v2219, %v2046
            %v2242 = vmul.f32 %v2219, %v2047
            %v2243 = vmul.f32 %v2219, %v2048
            %v2244 = vmul.f32 %v2219, %v2049
            %v2245 = vmul.f32 %v2219, %v2050
            %v2246 = vmul.f32 %v2219, %v2051
            %v2247 = vmul.f32 %v2219, %v2052
            %v2248 = vmul.f32 %v2219, %v2053
            %v2249 = vmul.f32 %v2219, %v2054
            %v2250 = vmul.f32 %v2219, %v2055
            %v2251 = vmul.f32 %v2219, %v2056
            %v2252 = vmul.f32 %v2219, %v2057
            %v2253 = vmul.f32 %v2219, %v2058
            %v2254 = vmul.f32 %v2219, %v2059
            %v2255 = vmul.f32 %v2219, %v2060
            %v2256 = vmul.f32 %v2219, %v2061
            %v2257 = vmul.f32 %v2219, %v2062
            %v2258 = vmul.f32 %v2219, %v2063
            %v2259 = vmul.f32 %v2219, %v2064
            %v2260 = vmul.f32 %v2219, %v2065
            %v2261 = vmul.f32 %v2219, %v2066
            %v2262 = vmul.f32 %v2219, %v2067
            %v2263 = vmul.f32 %v2219, %v2068
            %v2264 = vmul.f32 %v2219, %v2069
            %v2265 = vmul.f32 %v2219, %v2070
            %v2266 = vmul.f32 %v2219, %v2071
            %v2267 = vmul.f32 %v2219, %v2072
            %v2268 = vsub.f32 %v2171, %v2220
            %v2269 = vsub.f32 %v2172, %v2221
            %v2270 = vsub.f32 %v2173, %v2222
            %v2271 = vsub.f32 %v2174, %v2223
            %v2272 = vsub.f32 %v2175, %v2224
            %v2273 = vsub.f32 %v2176, %v2225
            %v2274 = vsub.f32 %v2177, %v2226
            %v2275 = vsub.f32 %v2178, %v2227
            %v2276 = vsub.f32 %v2179, %v2228
            %v2277 = vsub.f32 %v2180, %v2229
            %v2278 = vsub.f32 %v2181, %v2230
            %v2279 = vsub.f32 %v2182, %v2231
            %v2280 = vsub.f32 %v2183, %v2232
            %v2281 = vsub.f32 %v2184, %v2233
            %v2282 = vsub.f32 %v2185, %v2234
            %v2283 = vsub.f32 %v2186, %v2235
            %v2284 = vsub.f32 %v2187, %v2236
            %v2285 = vsub.f32 %v2188, %v2237
            %v2286 = vsub.f32 %v2189, %v2238
            %v2287 = vsub.f32 %v2190, %v2239
            %v2288 = vsub.f32 %v2191, %v2240
            %v2289 = vsub.f32 %v2192, %v2241
            %v2290 = vsub.f32 %v2193, %v2242
            %v2291 = vsub.f32 %v2194, %v2243
            %v2292 = vsub.f32 %v2195, %v2244
            %v2293 = vsub.f32 %v2196, %v2245
            %v2294 = vsub.f32 %v2197, %v2246
            %v2295 = vsub.f32 %v2198, %v2247
            %v2296 = vsub.f32 %v2199, %v2248
            %v2297 = vsub.f32 %v2200, %v2249
            %v2298 = vsub.f32 %v2201, %v2250
            %v2299 = vsub.f32 %v2202, %v2251
            %v2300 = vsub.f32 %v2203, %v2252
            %v2301 = vsub.f32 %v2204, %v2253
            %v2302 = vsub.f32 %v2205, %v2254
            %v2303 = vsub.f32 %v2206, %v2255
            %v2304 = vsub.f32 %v2207, %v2256
            %v2305 = vsub.f32 %v2208, %v2257
            %v2306 = vsub.f32 %v2209, %v2258
            %v2307 = vsub.f32 %v2210, %v2259
            %v2308 = vsub.f32 %v2211, %v2260
            %v2309 = vsub.f32 %v2212, %v2261
            %v2310 = vsub.f32 %v2213, %v2262
            %v2311 = vsub.f32 %v2214, %v2263
            %v2312 = vsub.f32 %v2215, %v2264
            %v2313 = vsub.f32 %v2216, %v2265
            %v2314 = vsub.f32 %v2217, %v2266
            %v2315 = vsub.f32 %v2218, %v2267
            %2316 = vst [vmem:[%s2024] sm:$0xff] %v2268
            %2317 = vst [vmem:[%s2024 + $0x8] sm:$0xff] %v2269
            %2318 = vst [vmem:[%s2024 + $0x10] sm:$0xff] %v2270
            %2319 = vst [vmem:[%s2024 + $0x18] sm:$0xff] %v2271
            %2320 = vst [vmem:[%s2024 + $0x20] sm:$0xff] %v2272
            %2321 = vst [vmem:[%s2024 + $0x28] sm:$0xff] %v2273
            %2322 = vst [vmem:[%s2024 + $0x30] sm:$0xff] %v2274
            %2323 = vst [vmem:[%s2024 + $0x38] sm:$0xff] %v2275
            %2324 = vst [vmem:[%s2024 + $0x40] sm:$0xff] %v2276
            %2325 = vst [vmem:[%s2024 + $0x48] sm:$0xff] %v2277
            %2326 = vst [vmem:[%s2024 + $0x50] sm:$0xff] %v2278
            %2327 = vst [vmem:[%s2024 + $0x58] sm:$0xff] %v2279
            %2328 = vst [vmem:[%s2024 + $0x60] sm:$0xff] %v2280
            %2329 = vst [vmem:[%s2024 + $0x68] sm:$0xff] %v2281
            %2330 = vst [vmem:[%s2024 + $0x70] sm:$0xff] %v2282
            %2331 = vst [vmem:[%s2024 + $0x78] sm:$0xff] %v2283
            %2332 = vst [vmem:[%s2024 + $0x80] sm:$0xff] %v2284
            %2333 = vst [vmem:[%s2024 + $0x88] sm:$0xff] %v2285
            %2334 = vst [vmem:[%s2024 + $0x90] sm:$0xff] %v2286
            %2335 = vst [vmem:[%s2024 + $0x98] sm:$0xff] %v2287
            %2336 = vst [vmem:[%s2024 + $0xa0] sm:$0xff] %v2288
            %2337 = vst [vmem:[%s2024 + $0xa8] sm:$0xff] %v2289
            %2338 = vst [vmem:[%s2024 + $0xb0] sm:$0xff] %v2290
            %2339 = vst [vmem:[%s2024 + $0xb8] sm:$0xff] %v2291
            %2340 = vst [vmem:[%s2024 + $0xc0] sm:$0xff] %v2292
            %2341 = vst [vmem:[%s2024 + $0xc8] sm:$0xff] %v2293
            %2342 = vst [vmem:[%s2024 + $0xd0] sm:$0xff] %v2294
            %2343 = vst [vmem:[%s2024 + $0xd8] sm:$0xff] %v2295
            %2344 = vst [vmem:[%s2024 + $0xe0] sm:$0xff] %v2296
            %2345 = vst [vmem:[%s2024 + $0xe8] sm:$0xff] %v2297
            %2346 = vst [vmem:[%s2024 + $0xf0] sm:$0xff] %v2298
            %2347 = vst [vmem:[%s2024 + $0xf8] sm:$0xff] %v2299
            %2348 = vst [vmem:[%s2024 + $0x100] sm:$0xff] %v2300
            %2349 = vst [vmem:[%s2024 + $0x108] sm:$0xff] %v2301
            %2350 = vst [vmem:[%s2024 + $0x110] sm:$0xff] %v2302
            %2351 = vst [vmem:[%s2024 + $0x118] sm:$0xff] %v2303
            %2352 = vst [vmem:[%s2024 + $0x120] sm:$0xff] %v2304
            %2353 = vst [vmem:[%s2024 + $0x128] sm:$0xff] %v2305
            %2354 = vst [vmem:[%s2024 + $0x130] sm:$0xff] %v2306
            %2355 = vst [vmem:[%s2024 + $0x138] sm:$0xff] %v2307
            %2356 = vst [vmem:[%s2024 + $0x140] sm:$0xff] %v2308
            %2357 = vst [vmem:[%s2024 + $0x148] sm:$0xff] %v2309
            %2358 = vst [vmem:[%s2024 + $0x150] sm:$0xff] %v2310
            %2359 = vst [vmem:[%s2024 + $0x158] sm:$0xff] %v2311
            %2360 = vst [vmem:[%s2024 + $0x160] sm:$0xff] %v2312
            %2361 = vst [vmem:[%s2024 + $0x168] sm:$0xff] %v2313
            %2362 = vst [vmem:[%s2024 + $0x170] sm:$0xff] %v2314
            %2363 = vst [vmem:[%s2024 + $0x178] sm:$0xff] %v2315
            %s2364 = scalar_lea.vmem [#allocation3], %s348
            %v2365 = vld [vmem:[%s2364] sm:$0xff]
            %v2366 = vld [vmem:[%s2364 + $0x8] sm:$0xff]
            %v2367 = vld [vmem:[%s2364 + $0x10] sm:$0xff]
            %v2368 = vld [vmem:[%s2364 + $0x18] sm:$0xff]
            %v2369 = vld [vmem:[%s2364 + $0x20] sm:$0xff]
            %v2370 = vld [vmem:[%s2364 + $0x28] sm:$0xff]
            %v2371 = vld [vmem:[%s2364 + $0x30] sm:$0xff]
            %v2372 = vld [vmem:[%s2364 + $0x38] sm:$0xff]
            %v2373 = vld [vmem:[%s2364 + $0x40] sm:$0xff]
            %v2374 = vld [vmem:[%s2364 + $0x48] sm:$0xff]
            %v2375 = vld [vmem:[%s2364 + $0x50] sm:$0xff]
            %v2376 = vld [vmem:[%s2364 + $0x58] sm:$0xff]
            %v2377 = vld [vmem:[%s2364 + $0x60] sm:$0xff]
            %v2378 = vld [vmem:[%s2364 + $0x68] sm:$0xff]
            %v2379 = vld [vmem:[%s2364 + $0x70] sm:$0xff]
            %v2380 = vld [vmem:[%s2364 + $0x78] sm:$0xff]
            %v2381 = vld [vmem:[%s2364 + $0x80] sm:$0xff]
            %v2382 = vld [vmem:[%s2364 + $0x88] sm:$0xff]
            %v2383 = vld [vmem:[%s2364 + $0x90] sm:$0xff]
            %v2384 = vld [vmem:[%s2364 + $0x98] sm:$0xff]
            %v2385 = vld [vmem:[%s2364 + $0xa0] sm:$0xff]
            %v2386 = vld [vmem:[%s2364 + $0xa8] sm:$0xff]
            %v2387 = vld [vmem:[%s2364 + $0xb0] sm:$0xff]
            %v2388 = vld [vmem:[%s2364 + $0xb8] sm:$0xff]
            %v2389 = vld [vmem:[%s2364 + $0xc0] sm:$0xff]
            %v2390 = vld [vmem:[%s2364 + $0xc8] sm:$0xff]
            %v2391 = vld [vmem:[%s2364 + $0xd0] sm:$0xff]
            %v2392 = vld [vmem:[%s2364 + $0xd8] sm:$0xff]
            %v2393 = vld [vmem:[%s2364 + $0xe0] sm:$0xff]
            %v2394 = vld [vmem:[%s2364 + $0xe8] sm:$0xff]
            %v2395 = vld [vmem:[%s2364 + $0xf0] sm:$0xff]
            %v2396 = vld [vmem:[%s2364 + $0xf8] sm:$0xff]
            %v2397 = vld [vmem:[%s2364 + $0x100] sm:$0xff]
            %v2398 = vld [vmem:[%s2364 + $0x108] sm:$0xff]
            %v2399 = vld [vmem:[%s2364 + $0x110] sm:$0xff]
            %v2400 = vld [vmem:[%s2364 + $0x118] sm:$0xff]
            %v2401 = vld [vmem:[%s2364 + $0x120] sm:$0xff]
            %v2402 = vld [vmem:[%s2364 + $0x128] sm:$0xff]
            %v2403 = vld [vmem:[%s2364 + $0x130] sm:$0xff]
            %v2404 = vld [vmem:[%s2364 + $0x138] sm:$0xff]
            %v2405 = vld [vmem:[%s2364 + $0x140] sm:$0xff]
            %v2406 = vld [vmem:[%s2364 + $0x148] sm:$0xff]
            %v2407 = vld [vmem:[%s2364 + $0x150] sm:$0xff]
            %v2408 = vld [vmem:[%s2364 + $0x158] sm:$0xff]
            %v2409 = vld [vmem:[%s2364 + $0x160] sm:$0xff]
            %v2410 = vld [vmem:[%s2364 + $0x168] sm:$0xff]
            %v2411 = vld [vmem:[%s2364 + $0x170] sm:$0xff]
            %v2412 = vld [vmem:[%s2364 + $0x178] sm:$0xff]
            %v2413 = vmul.f32 %v2268, %v1576
            %v2414 = vmul.f32 %v2269, %v1576
            %v2415 = vmul.f32 %v2270, %v1576
            %v2416 = vmul.f32 %v2271, %v1576
            %v2417 = vmul.f32 %v2272, %v1576
            %v2418 = vmul.f32 %v2273, %v1576
            %v2419 = vmul.f32 %v2274, %v1576
            %v2420 = vmul.f32 %v2275, %v1576
            %v2421 = vmul.f32 %v2276, %v1576
            %v2422 = vmul.f32 %v2277, %v1576
            %v2423 = vmul.f32 %v2278, %v1576
            %v2424 = vmul.f32 %v2279, %v1576
            %v2425 = vmul.f32 %v2280, %v1576
            %v2426 = vmul.f32 %v2281, %v1576
            %v2427 = vmul.f32 %v2282, %v1576
            %v2428 = vmul.f32 %v2283, %v1576
            %v2429 = vmul.f32 %v2284, %v1576
            %v2430 = vmul.f32 %v2285, %v1576
            %v2431 = vmul.f32 %v2286, %v1576
            %v2432 = vmul.f32 %v2287, %v1576
            %v2433 = vmul.f32 %v2288, %v1576
            %v2434 = vmul.f32 %v2289, %v1576
            %v2435 = vmul.f32 %v2290, %v1576
            %v2436 = vmul.f32 %v2291, %v1576
            %v2437 = vmul.f32 %v2292, %v1576
            %v2438 = vmul.f32 %v2293, %v1576
            %v2439 = vmul.f32 %v2294, %v1576
            %v2440 = vmul.f32 %v2295, %v1576
            %v2441 = vmul.f32 %v2296, %v1576
            %v2442 = vmul.f32 %v2297, %v1576
            %v2443 = vmul.f32 %v2298, %v1576
            %v2444 = vmul.f32 %v2299, %v1576
            %v2445 = vmul.f32 %v2300, %v1576
            %v2446 = vmul.f32 %v2301, %v1576
            %v2447 = vmul.f32 %v2302, %v1576
            %v2448 = vmul.f32 %v2303, %v1576
            %v2449 = vmul.f32 %v2304, %v1576
            %v2450 = vmul.f32 %v2305, %v1576
            %v2451 = vmul.f32 %v2306, %v1576
            %v2452 = vmul.f32 %v2307, %v1576
            %v2453 = vmul.f32 %v2308, %v1576
            %v2454 = vmul.f32 %v2309, %v1576
            %v2455 = vmul.f32 %v2310, %v1576
            %v2456 = vmul.f32 %v2311, %v1576
            %v2457 = vmul.f32 %v2312, %v1576
            %v2458 = vmul.f32 %v2313, %v1576
            %v2459 = vmul.f32 %v2314, %v1576
            %v2460 = vmul.f32 %v2315, %v1576
            %v2461 = vadd.f32 %v2365, %v2413
            %v2462 = vadd.f32 %v2366, %v2414
            %v2463 = vadd.f32 %v2367, %v2415
            %v2464 = vadd.f32 %v2368, %v2416
            %v2465 = vadd.f32 %v2369, %v2417
            %v2466 = vadd.f32 %v2370, %v2418
            %v2467 = vadd.f32 %v2371, %v2419
            %v2468 = vadd.f32 %v2372, %v2420
            %v2469 = vadd.f32 %v2373, %v2421
            %v2470 = vadd.f32 %v2374, %v2422
            %v2471 = vadd.f32 %v2375, %v2423
            %v2472 = vadd.f32 %v2376, %v2424
            %v2473 = vadd.f32 %v2377, %v2425
            %v2474 = vadd.f32 %v2378, %v2426
            %v2475 = vadd.f32 %v2379, %v2427
            %v2476 = vadd.f32 %v2380, %v2428
            %v2477 = vadd.f32 %v2381, %v2429
            %v2478 = vadd.f32 %v2382, %v2430
            %v2479 = vadd.f32 %v2383, %v2431
            %v2480 = vadd.f32 %v2384, %v2432
            %v2481 = vadd.f32 %v2385, %v2433
            %v2482 = vadd.f32 %v2386, %v2434
            %v2483 = vadd.f32 %v2387, %v2435
            %v2484 = vadd.f32 %v2388, %v2436
            %v2485 = vadd.f32 %v2389, %v2437
            %v2486 = vadd.f32 %v2390, %v2438
            %v2487 = vadd.f32 %v2391, %v2439
            %v2488 = vadd.f32 %v2392, %v2440
            %v2489 = vadd.f32 %v2393, %v2441
            %v2490 = vadd.f32 %v2394, %v2442
            %v2491 = vadd.f32 %v2395, %v2443
            %v2492 = vadd.f32 %v2396, %v2444
            %v2493 = vadd.f32 %v2397, %v2445
            %v2494 = vadd.f32 %v2398, %v2446
            %v2495 = vadd.f32 %v2399, %v2447
            %v2496 = vadd.f32 %v2400, %v2448
            %v2497 = vadd.f32 %v2401, %v2449
            %v2498 = vadd.f32 %v2402, %v2450
            %v2499 = vadd.f32 %v2403, %v2451
            %v2500 = vadd.f32 %v2404, %v2452
            %v2501 = vadd.f32 %v2405, %v2453
            %v2502 = vadd.f32 %v2406, %v2454
            %v2503 = vadd.f32 %v2407, %v2455
            %v2504 = vadd.f32 %v2408, %v2456
            %v2505 = vadd.f32 %v2409, %v2457
            %v2506 = vadd.f32 %v2410, %v2458
            %v2507 = vadd.f32 %v2411, %v2459
            %v2508 = vadd.f32 %v2412, %v2460
            %2509 = vst [vmem:[%s2364] sm:$0xff] %v2461
            %2510 = vst [vmem:[%s2364 + $0x8] sm:$0xff] %v2462
            %2511 = vst [vmem:[%s2364 + $0x10] sm:$0xff] %v2463
            %2512 = vst [vmem:[%s2364 + $0x18] sm:$0xff] %v2464
            %2513 = vst [vmem:[%s2364 + $0x20] sm:$0xff] %v2465
            %2514 = vst [vmem:[%s2364 + $0x28] sm:$0xff] %v2466
            %2515 = vst [vmem:[%s2364 + $0x30] sm:$0xff] %v2467
            %2516 = vst [vmem:[%s2364 + $0x38] sm:$0xff] %v2468
            %2517 = vst [vmem:[%s2364 + $0x40] sm:$0xff] %v2469
            %2518 = vst [vmem:[%s2364 + $0x48] sm:$0xff] %v2470
            %2519 = vst [vmem:[%s2364 + $0x50] sm:$0xff] %v2471
            %2520 = vst [vmem:[%s2364 + $0x58] sm:$0xff] %v2472
            %2521 = vst [vmem:[%s2364 + $0x60] sm:$0xff] %v2473
            %2522 = vst [vmem:[%s2364 + $0x68] sm:$0xff] %v2474
            %2523 = vst [vmem:[%s2364 + $0x70] sm:$0xff] %v2475
            %2524 = vst [vmem:[%s2364 + $0x78] sm:$0xff] %v2476
            %2525 = vst [vmem:[%s2364 + $0x80] sm:$0xff] %v2477
            %2526 = vst [vmem:[%s2364 + $0x88] sm:$0xff] %v2478
            %2527 = vst [vmem:[%s2364 + $0x90] sm:$0xff] %v2479
            %2528 = vst [vmem:[%s2364 + $0x98] sm:$0xff] %v2480
            %2529 = vst [vmem:[%s2364 + $0xa0] sm:$0xff] %v2481
            %2530 = vst [vmem:[%s2364 + $0xa8] sm:$0xff] %v2482
            %2531 = vst [vmem:[%s2364 + $0xb0] sm:$0xff] %v2483
            %2532 = vst [vmem:[%s2364 + $0xb8] sm:$0xff] %v2484
            %2533 = vst [vmem:[%s2364 + $0xc0] sm:$0xff] %v2485
            %2534 = vst [vmem:[%s2364 + $0xc8] sm:$0xff] %v2486
            %2535 = vst [vmem:[%s2364 + $0xd0] sm:$0xff] %v2487
            %2536 = vst [vmem:[%s2364 + $0xd8] sm:$0xff] %v2488
            %2537 = vst [vmem:[%s2364 + $0xe0] sm:$0xff] %v2489
            %2538 = vst [vmem:[%s2364 + $0xe8] sm:$0xff] %v2490
            %2539 = vst [vmem:[%s2364 + $0xf0] sm:$0xff] %v2491
            %2540 = vst [vmem:[%s2364 + $0xf8] sm:$0xff] %v2492
            %2541 = vst [vmem:[%s2364 + $0x100] sm:$0xff] %v2493
            %2542 = vst [vmem:[%s2364 + $0x108] sm:$0xff] %v2494
            %2543 = vst [vmem:[%s2364 + $0x110] sm:$0xff] %v2495
            %2544 = vst [vmem:[%s2364 + $0x118] sm:$0xff] %v2496
            %2545 = vst [vmem:[%s2364 + $0x120] sm:$0xff] %v2497
            %2546 = vst [vmem:[%s2364 + $0x128] sm:$0xff] %v2498
            %2547 = vst [vmem:[%s2364 + $0x130] sm:$0xff] %v2499
            %2548 = vst [vmem:[%s2364 + $0x138] sm:$0xff] %v2500
            %2549 = vst [vmem:[%s2364 + $0x140] sm:$0xff] %v2501
            %2550 = vst [vmem:[%s2364 + $0x148] sm:$0xff] %v2502
            %2551 = vst [vmem:[%s2364 + $0x150] sm:$0xff] %v2503
            %2552 = vst [vmem:[%s2364 + $0x158] sm:$0xff] %v2504
            %2553 = vst [vmem:[%s2364 + $0x160] sm:$0xff] %v2505
            %2554 = vst [vmem:[%s2364 + $0x168] sm:$0xff] %v2506
            %2555 = vst [vmem:[%s2364 + $0x170] sm:$0xff] %v2507
            %2556 = vst [vmem:[%s2364 + $0x178] sm:$0xff] %v2508
            %2557 = vst [vmem:[#allocation13] sm:$0xff] %v2461
            %2558 = vst [vmem:[#allocation13 + $0x8] sm:$0xff] %v2462
            %2559 = vst [vmem:[#allocation13 + $0x10] sm:$0xff] %v2463
            %2560 = vst [vmem:[#allocation13 + $0x18] sm:$0xff] %v2464
            %2561 = vst [vmem:[#allocation13 + $0x20] sm:$0xff] %v2465
            %2562 = vst [vmem:[#allocation13 + $0x28] sm:$0xff] %v2466
            %2563 = vst [vmem:[#allocation13 + $0x30] sm:$0xff] %v2467
            %2564 = vst [vmem:[#allocation13 + $0x38] sm:$0xff] %v2468
            %2565 = vst [vmem:[#allocation13 + $0x40] sm:$0xff] %v2469
            %2566 = vst [vmem:[#allocation13 + $0x48] sm:$0xff] %v2470
            %2567 = vst [vmem:[#allocation13 + $0x50] sm:$0xff] %v2471
            %2568 = vst [vmem:[#allocation13 + $0x58] sm:$0xff] %v2472
            %2569 = vst [vmem:[#allocation13 + $0x60] sm:$0xff] %v2473
            %2570 = vst [vmem:[#allocation13 + $0x68] sm:$0xff] %v2474
            %2571 = vst [vmem:[#allocation13 + $0x70] sm:$0xff] %v2475
            %2572 = vst [vmem:[#allocation13 + $0x78] sm:$0xff] %v2476
            %2573 = vst [vmem:[#allocation13 + $0x80] sm:$0xff] %v2477
            %2574 = vst [vmem:[#allocation13 + $0x88] sm:$0xff] %v2478
            %2575 = vst [vmem:[#allocation13 + $0x90] sm:$0xff] %v2479
            %2576 = vst [vmem:[#allocation13 + $0x98] sm:$0xff] %v2480
            %2577 = vst [vmem:[#allocation13 + $0xa0] sm:$0xff] %v2481
            %2578 = vst [vmem:[#allocation13 + $0xa8] sm:$0xff] %v2482
            %2579 = vst [vmem:[#allocation13 + $0xb0] sm:$0xff] %v2483
            %2580 = vst [vmem:[#allocation13 + $0xb8] sm:$0xff] %v2484
            %2581 = vst [vmem:[#allocation13 + $0xc0] sm:$0xff] %v2485
            %2582 = vst [vmem:[#allocation13 + $0xc8] sm:$0xff] %v2486
            %2583 = vst [vmem:[#allocation13 + $0xd0] sm:$0xff] %v2487
            %2584 = vst [vmem:[#allocation13 + $0xd8] sm:$0xff] %v2488
            %2585 = vst [vmem:[#allocation13 + $0xe0] sm:$0xff] %v2489
            %2586 = vst [vmem:[#allocation13 + $0xe8] sm:$0xff] %v2490
            %2587 = vst [vmem:[#allocation13 + $0xf0] sm:$0xff] %v2491
            %2588 = vst [vmem:[#allocation13 + $0xf8] sm:$0xff] %v2492
            %2589 = vst [vmem:[#allocation13 + $0x100] sm:$0xff] %v2493
            %2590 = vst [vmem:[#allocation13 + $0x108] sm:$0xff] %v2494
            %2591 = vst [vmem:[#allocation13 + $0x110] sm:$0xff] %v2495
            %2592 = vst [vmem:[#allocation13 + $0x118] sm:$0xff] %v2496
            %2593 = vst [vmem:[#allocation13 + $0x120] sm:$0xff] %v2497
            %2594 = vst [vmem:[#allocation13 + $0x128] sm:$0xff] %v2498
            %2595 = vst [vmem:[#allocation13 + $0x130] sm:$0xff] %v2499
            %2596 = vst [vmem:[#allocation13 + $0x138] sm:$0xff] %v2500
            %2597 = vst [vmem:[#allocation13 + $0x140] sm:$0xff] %v2501
            %2598 = vst [vmem:[#allocation13 + $0x148] sm:$0xff] %v2502
            %2599 = vst [vmem:[#allocation13 + $0x150] sm:$0xff] %v2503
            %2600 = vst [vmem:[#allocation13 + $0x158] sm:$0xff] %v2504
            %2601 = vst [vmem:[#allocation13 + $0x160] sm:$0xff] %v2505
            %2602 = vst [vmem:[#allocation13 + $0x168] sm:$0xff] %v2506
            %2603 = vst [vmem:[#allocation13 + $0x170] sm:$0xff] %v2507
            %2604 = vst [vmem:[#allocation13 + $0x178] sm:$0xff] %v2508
          $region72: #{tpu_custom_call.1} parent=63 // pred_fallthru
            _
        $region64: #{tpu_custom_call.1} parent=35 // pred_fallthru
          _
        // Predicated region
        $region73: #{tpu_custom_call.1} parent=35 // pred_check
          %p2605 = pneg %p178
        $region74: #{tpu_custom_call.1} parent=35 // pred_check_branch
          %2607 = sbr.rel (%p2605) target = $region76
        $region75: #{tpu_custom_call.1} parent=35 // pred_region
          %s2608 = smul.u32 48, %s27
          %s2610 = ssub.s32 6144, 6144
          %2611 = vsyncadd [#allocation7], %s2610
          %s2612 = sadd.s32 %s25, %s2608
          %s2613 = smul.addr %s2612, 128
          %s2614 = scalar_lea.hbm %s4, %s2613
          %s2615 = sshll.u32 [#allocation13], 4
          %s2616 = int_to_ptr.vmem [resolvable:$true] %s2615
          %2621 = dma.vmem_to_hbm [thread:$0]  %s2616, 6144, %s2614, [#allocation7], 128, 128, 8
        $region76: #{tpu_custom_call.1} parent=35 // pred_fallthru
          _
        // Predicated region
        $region77: #{tpu_custom_call.1} parent=35 // pred_check
          %p2622 = pneg %p178
        $region78: #{tpu_custom_call.1} parent=35 // pred_check_branch
          %2624 = sbr.rel (%p2622) target = $region80
        $region79: #{tpu_custom_call.1} parent=35 // pred_region
          %2625 = dma.done [#allocation7], 6144
        $region80: #{tpu_custom_call.1} parent=35 // pred_fallthru
          _
      $region36: #{tpu_custom_call.1} parent=5 // pred_fallthru
        _
      %p2626 = scmp.le.s32.totalorder 2, %s14
      // Predicated region
      $region81: #{tpu_custom_call.1} parent=5 // pred_check
        %p2627 = pneg %p2626
      $region82: #{tpu_custom_call.1} parent=5 // pred_check_branch
        %2629 = sbr.rel (%p2627) target = $region84
      $region83: #{tpu_custom_call.1} parent=5 // pred_region
        %s2630 = ssub.s32 %s14, 2
      $region84: #{tpu_custom_call.1} parent=5 // pred_fallthru
        _
    $region6: #{tpu_custom_call.1} parent=1 // loop_footer
      %s18 = sadd.s32 1, %s14
    $region7: #{tpu_custom_call.1} parent=1 // loop_footer_branch
      %13 = sbr.rel target = $region3
    $region8: #{tpu_custom_call.1} parent=1 // loop_exit
      _
    %2631 = vsyncpa [#allocation6], 1
    %s2632 = scalar_lea.sflag [#allocation6], 1
    %2633 = vsyncpa %s2632, 1
    %2634 = vsyncpa [#allocation11], 1
    %2635 = vsyncpa [#allocation7], 1
    %s2636 = scalar_lea.sflag [#allocation7], 1
    %2637 = vsyncpa %s2636, 1
    %2638 = vsyncpa [#allocation8], 1
    %s2639 = scalar_lea.sflag [#allocation8], 1
    %2640 = vsyncpa %s2639, 1

</llo_original>
